<compile_context>
chip_gen: v6e
topology: v6e:2x2x1
jax: 0.10.0
libtpu: 0.0.40
codegen_flags: <defaults>
</compile_context>

<pallas_src>
import functools
import math

import jax
import jax.numpy as jnp
from jax import lax
from jax.experimental import pallas as pl
from jax.experimental.pallas import tpu as pltpu


_LRELU_SLOPE = 0.01
_IN_EPS = 1e-5
_BN_EVAL_SCALE = 1.0 / math.sqrt(1.0 + 1e-5)   # BatchNorm1d eval, default running stats


# ----------------------------------------------------------------------------
# helpers
# ----------------------------------------------------------------------------
def _round_up(x, m):
    return ((x + m - 1) // m) * m


def _pick_tile(n, cands):
    for c in cands:
        if n % c == 0:
            return c
    return n


@functools.lru_cache(maxsize=None)
def _vmem_limit_bytes():
    """Generation-dependent scoped VMEM limit (v5e/v6e: 128 MiB, v7x: 64 MiB)."""
    cap = 64 * 1024 * 1024
    try:
        info = pltpu.get_tpu_info()
        cap = int(getattr(info, "vmem_capacity_bytes", cap))
    except Exception:
        pass
    if cap >= 116 * 1024 * 1024:
        return 100 * 1024 * 1024
    return min(max(cap - 16 * 1024 * 1024, 32 * 1024 * 1024), 48 * 1024 * 1024)


def _depth_tile(D, slice_bytes, budget=4 << 20):
    td = max(1, min(D, budget // max(slice_bytes, 1)))
    while D % td:
        td -= 1
    return td


def _row_chunk(H, W, max_rows=2048):
    th = max(1, min(H, max_rows // max(W, 1)))
    while H % th:
        th -= 1
    return th


def _apply_act(x, act):
    if act is None:
        return x
    if act == "sigmoid":
        return 1.0 / (1.0 + jnp.exp(-x))
    if act == "relu":
        return jnp.maximum(x, 0.0)
    if act == "lrelu":
        return jnp.where(x >= 0, x, _LRELU_SLOPE * x)
    if act == "gelu":
        return jax.nn.gelu(x, approximate=True)
    raise ValueError(act)


# ----------------------------------------------------------------------------
# generic tiled matmul: bf16 operands, f32 VMEM accumulator over a K grid axis,
# fused bias + activation epilogue
# ----------------------------------------------------------------------------
def _matmul_kernel(a_ref, b_ref, bias_ref, o_ref, acc_ref, *, act):
    @pl.when(pl.program_id(2) == 0)
    def _():
        acc_ref[...] = jnp.zeros_like(acc_ref)

    acc_ref[...] += jnp.dot(a_ref[...], b_ref[...],
                            preferred_element_type=jnp.float32)

    @pl.when(pl.program_id(2) == pl.num_programs(2) - 1)
    def _():
        y = acc_ref[...] + bias_ref[...]
        o_ref[...] = _apply_act(y, act).astype(o_ref.dtype)


@functools.lru_cache(maxsize=None)
def _matmul_callable(M, K, N, TM, TN, TK, act, out_dtype):
    f = pl.pallas_call(
        functools.partial(_matmul_kernel, act=act),
        out_shape=jax.ShapeDtypeStruct((M, N), out_dtype),
        grid=(M // TM, N // TN, K // TK),
        in_specs=[
            pl.BlockSpec((TM, TK), lambda i, j, k: (i, k)),
            pl.BlockSpec((TK, TN), lambda i, j, k: (k, j)),
            pl.BlockSpec((1, TN), lambda i, j, k: (0, j)),
        ],
        out_specs=pl.BlockSpec((TM, TN), lambda i, j, k: (i, j)),
        scratch_shapes=[pltpu.VMEM((TM, TN), jnp.float32)],
        compiler_params=pltpu.CompilerParams(
            dimension_semantics=("parallel", "parallel", "arbitrary"),
            vmem_limit_bytes=_vmem_limit_bytes()),
    )
    return jax.jit(f)


def pallas_matmul(a, b, bias=None, act=None, out_dtype=jnp.bfloat16):
    """(M, K) @ (K, N) with bf16 operands / f32 accumulation and fused epilogue."""
    M, K = a.shape
    N = b.shape[1]
    a = a.astype(jnp.bfloat16)
    b = b.astype(jnp.bfloat16)
    if bias is None:
        bias = jnp.zeros((1, N), jnp.float32)
    else:
        bias = bias.reshape(1, N).astype(jnp.float32)
    M_pad = _round_up(M, 128)
    if M_pad != M:
        a = jnp.pad(a, ((0, M_pad - M), (0, 0)))
    TM = _pick_tile(M_pad, (512, 256, 128))
    TN = N if N <= 512 else _pick_tile(N, (512, 256, 128))
    TK = K if K <= 2048 else _pick_tile(K, (2048, 1024, 512, 256, 128))
    out = _matmul_callable(M_pad, K, N, TM, TN, TK, act, out_dtype)(a, b, bias)
    return out[:M] if M_pad != M else out


def linear(x, w, b=None, act=None):
    shp = x.shape
    y = pallas_matmul(x.reshape(-1, shp[-1]), w, b, act=act)
    return y.reshape(shp[:-1] + (w.shape[1],))


# ----------------------------------------------------------------------------
# fused attention: several heads per grid step, EUP reciprocal softmax denominator
# (the 1/sqrt(dh) scale is folded into the qkv weight upstream)
# ----------------------------------------------------------------------------
def _attention_kernel(q_ref, k_ref, v_ref, o_ref):
    q = q_ref[...]
    k = k_ref[...]
    v = v_ref[...]
    s = jnp.einsum('htd,hsd->hts', q, k, preferred_element_type=jnp.float32)
    s = s - jnp.max(s, axis=-1, keepdims=True)
    p = jnp.exp(s)
    p = p * pl.reciprocal(jnp.sum(p, axis=-1, keepdims=True), approx=True)
    o_ref[...] = jnp.einsum('hts,hsd->htd', p.astype(v.dtype), v,
                            preferred_element_type=jnp.float32).astype(o_ref.dtype)


@functools.lru_cache(maxsize=None)
def _attention_callable(G, T, Dh, Hb):
    f = pl.pallas_call(
        _attention_kernel,
        out_shape=jax.ShapeDtypeStruct((G, T, Dh), jnp.bfloat16),
        grid=(G // Hb,),
        in_specs=[pl.BlockSpec((Hb, T, Dh), lambda g: (g, 0, 0))] * 3,
        out_specs=pl.BlockSpec((Hb, T, Dh), lambda g: (g, 0, 0)),
        compiler_params=pltpu.CompilerParams(
            dimension_semantics=("parallel",),
            vmem_limit_bytes=_vmem_limit_bytes()),
    )
    return jax.jit(f)


def pallas_attention(q, k, v):
    G, T, Dh = q.shape
    Hb = _pick_tile(G, (16, 8, 4, 2, 1))
    return _attention_callable(G, T, Dh, Hb)(
        q.astype(jnp.bfloat16), k.astype(jnp.bfloat16), v.astype(jnp.bfloat16))


# ----------------------------------------------------------------------------
# layernorm (row-tiled, >=128-row tiles, f32 statistics)
# ----------------------------------------------------------------------------
def _layernorm_kernel(x_ref, g_ref, b_ref, o_ref):
    x = x_ref[...].astype(jnp.float32)
    mu = jnp.mean(x, axis=-1, keepdims=True)
    var = jnp.mean(jnp.square(x - mu), axis=-1, keepdims=True)
    y = (x - mu) * lax.rsqrt(var + 1e-5) * g_ref[...] + b_ref[...]
    o_ref[...] = y.astype(o_ref.dtype)


@functools.lru_cache(maxsize=None)
def _layernorm_callable(R, D, TR):
    f = pl.pallas_call(
        _layernorm_kernel,
        out_shape=jax.ShapeDtypeStruct((R, D), jnp.bfloat16),
        grid=(R // TR,),
        in_specs=[
            pl.BlockSpec((TR, D), lambda i: (i, 0)),
            pl.BlockSpec((1, D), lambda i: (0, 0)),
            pl.BlockSpec((1, D), lambda i: (0, 0)),
        ],
        out_specs=pl.BlockSpec((TR, D), lambda i: (i, 0)),
        compiler_params=pltpu.CompilerParams(
            dimension_semantics=("parallel",),
            vmem_limit_bytes=_vmem_limit_bytes()),
    )
    return jax.jit(f)


def pallas_layernorm(x, gamma, beta):
    shp = x.shape
    D = shp[-1]
    x2 = x.reshape(-1, D).astype(jnp.bfloat16)
    R = x2.shape[0]
    R_pad = _round_up(R, 128)
    if R_pad != R:
        x2 = jnp.pad(x2, ((0, R_pad - R), (0, 0)))
    TR = _pick_tile(R_pad, (512, 256, 128))
    out = _layernorm_callable(R_pad, D, TR)(
        x2, gamma.reshape(1, D).astype(jnp.float32),
        beta.reshape(1, D).astype(jnp.float32))
    if R_pad != R:
        out = out[:R]
    return out.reshape(shp)


# ----------------------------------------------------------------------------
# 3x3x3 / 1x1x1 conv kernels (channels-last).  The 9 in-plane taps are folded
# into one K = 9*Cin contraction per depth slab; the accumulator is chunked over
# row blocks; per-(b,d) partial instance-norm sums are emitted so both grid
# axes stay "parallel".  Partial sums are combined into (mean, var) in XLA.
# ----------------------------------------------------------------------------
def _conv3x3_kernel(w_ref, x0_ref, x1_ref, x2_ref, o_ref, sp_ref,
                    *, H, W, TH, Cin, Cout):
    slab_refs = (x0_ref, x1_ref, x2_ref)
    # dx-shifted lane-axis concatenation, built once per slab (kw folded into K)
    xrows = []
    for dz in range(3):
        xz = slab_refs[dz]
        xrows.append(jnp.concatenate(
            [xz[0, :, dx:dx + W, :] for dx in range(3)], axis=-1))   # (H+2, W, 3*Cin)
    s1 = jnp.zeros((1, Cout), jnp.float32)
    s2 = jnp.zeros((1, Cout), jnp.float32)
    for h0 in range(0, H, TH):
        acc = jnp.zeros((TH * W, Cout), jnp.float32)
        for dz in range(3):
            cat = jnp.concatenate(
                [xrows[dz][h0 + dy:h0 + dy + TH] for dy in range(3)],
                axis=-1)                                             # (TH, W, 9*Cin)
            acc += jnp.dot(cat.reshape(TH * W, 9 * Cin), w_ref[dz],
                           preferred_element_type=jnp.float32)
        o_ref[0, h0:h0 + TH, :, :] = acc.reshape(TH, W, Cout).astype(o_ref.dtype)
        s1 += jnp.sum(acc, axis=0, keepdims=True)
        s2 += jnp.sum(acc * acc, axis=0, keepdims=True)
    sp_ref[0, 0:1, :] = s1
    sp_ref[0, 1:2, :] = s2


@functools.lru_cache(maxsize=None)
def _conv3x3_callable(B, D, H, W, Cin, Cout):
    TH = _row_chunk(H, W)
    kern = functools.partial(_conv3x3_kernel, H=H, W=W, TH=TH, Cin=Cin, Cout=Cout)

    def x_spec(dz):
        return pl.BlockSpec(
            (1, H + 2, W + 2, Cin),
            lambda b, d, dz=dz: (b * (D + 2) + d + dz, 0, 0, 0))

    f = pl.pallas_call(
        kern,
        out_shape=(jax.ShapeDtypeStruct((B * D, H, W, Cout), jnp.bfloat16),
                   jax.ShapeDtypeStruct((B * D, 2, Cout), jnp.float32)),
        grid=(B, D),
        in_specs=[pl.BlockSpec((3, 9 * Cin, Cout), lambda b, d: (0, 0, 0)),
                  x_spec(0), x_spec(1), x_spec(2)],
        out_specs=(
            pl.BlockSpec((1, H, W, Cout), lambda b, d: (b * D + d, 0, 0, 0)),
            pl.BlockSpec((1, 2, Cout), lambda b, d: (b * D + d, 0, 0)),
        ),
        compiler_params=pltpu.CompilerParams(
            dimension_semantics=("parallel", "parallel"),
            vmem_limit_bytes=_vmem_limit_bytes()),
    )
    return jax.jit(f)


def _finalize_stats(partial, B, D, count):
    p = partial.reshape(B, D, 2, -1).sum(axis=1)              # (B, 2, C) f32
    inv = 1.0 / float(count)
    mean = p[:, 0] * inv
    var = jnp.maximum(p[:, 1] * inv - mean * mean, 0.0)
    return jnp.stack([mean, var], axis=1)                     # (B, 2, C)


def conv3d_3x3_stats(x, w):
    """3x3x3 conv, stride 1, pad 1, no bias, channels-last; returns (y, stats)."""
    B, D, H, W, Cin = x.shape
    Cout = w.shape[0]
    wt = jnp.transpose(w, (2, 3, 4, 1, 0)).reshape(3, 9 * Cin, Cout).astype(jnp.bfloat16)
    xp = jnp.pad(x.astype(jnp.bfloat16), ((0, 0), (1, 1), (1, 1), (1, 1), (0, 0)))
    xp = xp.reshape(B * (D + 2), H + 2, W + 2, Cin)
    y, part = _conv3x3_callable(B, D, H, W, Cin, Cout)(wt, xp, xp, xp)
    stats = _finalize_stats(part, B, D, D * H * W)
    return y.reshape(B, D, H, W, Cout), stats


def _conv1x1_kernel(w_ref, x_ref, o_ref, sp_ref, *, H, W):
    cin = w_ref.shape[0]
    cout = w_ref.shape[1]
    acc = jnp.dot(x_ref[0].reshape(H * W, cin), w_ref[...],
                  preferred_element_type=jnp.float32)
    o_ref[0] = acc.reshape(H, W, cout).astype(o_ref.dtype)
    sp_ref[0, 0:1, :] = jnp.sum(acc, axis=0, keepdims=True)
    sp_ref[0, 1:2, :] = jnp.sum(acc * acc, axis=0, keepdims=True)


@functools.lru_cache(maxsize=None)
def _conv1x1_callable(B, D, H, W, Cin, Cout):
    kern = functools.partial(_conv1x1_kernel, H=H, W=W)
    f = pl.pallas_call(
        kern,
        out_shape=(jax.ShapeDtypeStruct((B * D, H, W, Cout), jnp.bfloat16),
                   jax.ShapeDtypeStruct((B * D, 2, Cout), jnp.float32)),
        grid=(B, D),
        in_specs=[
            pl.BlockSpec((Cin, Cout), lambda b, d: (0, 0)),
            pl.BlockSpec((1, H, W, Cin), lambda b, d: (b * D + d, 0, 0, 0)),
        ],
        out_specs=(
            pl.BlockSpec((1, H, W, Cout), lambda b, d: (b * D + d, 0, 0, 0)),
            pl.BlockSpec((1, 2, Cout), lambda b, d: (b * D + d, 0, 0)),
        ),
        compiler_params=pltpu.CompilerParams(
            dimension_semantics=("parallel", "parallel"),
            vmem_limit_bytes=_vmem_limit_bytes()),
    )
    return jax.jit(f)


def conv3d_1x1_stats(x, w):
    B, D, H, W, Cin = x.shape
    Cout = w.shape[0]
    wt = jnp.transpose(w.reshape(Cout, Cin), (1, 0)).astype(jnp.bfloat16)
    x4 = x.astype(jnp.bfloat16).reshape(B * D, H, W, Cin)
    y, part = _conv1x1_callable(B, D, H, W, Cin, Cout)(wt, x4)
    stats = _finalize_stats(part, B, D, D * H * W)
    return y.reshape(B, D, H, W, Cout), stats


# ----------------------------------------------------------------------------
# fused instance-norm apply (+ residual add) + LeakyReLU.
# Lane-dense (TD, H, W*C) blocks; stats are pre-tiled to (B, 2, W*C) in XLA.
# ----------------------------------------------------------------------------
def _in_lrelu_kernel(y_ref, st_ref, o_ref):
    mean = st_ref[0, 0:1, :]
    var = st_ref[0, 1:2, :]
    h = (y_ref[...].astype(jnp.float32) - mean) * lax.rsqrt(var + _IN_EPS)
    o_ref[...] = jnp.where(h >= 0, h, _LRELU_SLOPE * h).astype(o_ref.dtype)


def _in_add_lrelu_kernel(y_ref, st_ref, r_ref, o_ref):
    mean = st_ref[0, 0:1, :]
    var = st_ref[0, 1:2, :]
    h = (y_ref[...].astype(jnp.float32) - mean) * lax.rsqrt(var + _IN_EPS)
    h = h + r_ref[...].astype(jnp.float32)
    o_ref[...] = jnp.where(h >= 0, h, _LRELU_SLOPE * h).astype(o_ref.dtype)


def _in_add_norm_lrelu_kernel(y_ref, st_ref, r_ref, rst_ref, o_ref):
    h = ((y_ref[...].astype(jnp.float32) - st_ref[0, 0:1, :])
         * lax.rsqrt(st_ref[0, 1:2, :] + _IN_EPS))
    h = h + ((r_ref[...].astype(jnp.float32) - rst_ref[0, 0:1, :])
             * lax.rsqrt(rst_ref[0, 1:2, :] + _IN_EPS))
    o_ref[...] = jnp.where(h >= 0, h, _LRELU_SLOPE * h).astype(o_ref.dtype)


@functools.lru_cache(maxsize=None)
def _instnorm_callable(B, D, H, WC, variant, TD):
    nd = D // TD
    img_spec = pl.BlockSpec((TD, H, WC), lambda b, d: (b * nd + d, 0, 0))
    st_spec = pl.BlockSpec((1, 2, WC), lambda b, d: (b, 0, 0))
    if variant == "plain":
        kern = _in_lrelu_kernel
        in_specs = [img_spec, st_spec]
    elif variant == "add":
        kern = _in_add_lrelu_kernel
        in_specs = [img_spec, st_spec, img_spec]
    else:
        kern = _in_add_norm_lrelu_kernel
        in_specs = [img_spec, st_spec, img_spec, st_spec]
    f = pl.pallas_call(
        kern,
        out_shape=jax.ShapeDtypeStruct((B * D, H, WC), jnp.bfloat16),
        grid=(B, nd),
        in_specs=in_specs,
        out_specs=img_spec,
        compiler_params=pltpu.CompilerParams(
            dimension_semantics=("parallel", "parallel"),
            vmem_limit_bytes=_vmem_limit_bytes()),
    )
    return jax.jit(f)


def _inorm_prep(y, st):
    B, D, H, W, C = y.shape
    y2 = y.astype(jnp.bfloat16).reshape(B * D, H, W * C)
    st2 = jnp.tile(st.astype(jnp.float32), (1, 1, W))   # (B, 2, W*C)
    return y2, st2


def instnorm_lrelu(y, st):
    B, D, H, W, C = y.shape
    y2, st2 = _inorm_prep(y, st)
    TD = _depth_tile(D, H * W * C * 2)
    out = _instnorm_callable(B, D, H, W * C, "plain", TD)(y2, st2)
    return out.reshape(B, D, H, W, C)


def instnorm_add_lrelu(y, st, res):
    B, D, H, W, C = y.shape
    y2, st2 = _inorm_prep(y, st)
    r2 = res.astype(jnp.bfloat16).reshape(B * D, H, W * C)
    TD = _depth_tile(D, H * W * C * 2)
    out = _instnorm_callable(B, D, H, W * C, "add", TD)(y2, st2, r2)
    return out.reshape(B, D, H, W, C)


def instnorm_add_norm_lrelu(y, st, res, rst):
    B, D, H, W, C = y.shape
    y2, st2 = _inorm_prep(y, st)
    r2, rst2 = _inorm_prep(res, rst)
    TD = _depth_tile(D, H * W * C * 2)
    out = _instnorm_callable(B, D, H, W * C, "add_norm", TD)(y2, st2, r2, rst2)
    return out.reshape(B, D, H, W, C)


# ----------------------------------------------------------------------------
# segmentation output head (out_channels == 1): VPU weighted channel reduction
# + bias + sigmoid with a lane-dense (TD, H, W) output
# ----------------------------------------------------------------------------
def _segout_kernel(x_ref, w_ref, b_ref, o_ref):
    x = x_ref[...].astype(jnp.float32)                            # (TD, H, W, C)
    w = w_ref[...].astype(jnp.float32).reshape(1, 1, 1, -1)
    y = jnp.sum(x * w, axis=-1) + b_ref[...]                      # (TD, H, W)
    o_ref[...] = 1.0 / (1.0 + jnp.exp(-y))


@functools.lru_cache(maxsize=None)
def _segout_callable(B, D, H, W, C, TD):
    nd = D // TD
    f = pl.pallas_call(
        _segout_kernel,
        out_shape=jax.ShapeDtypeStruct((B * D, H, W), jnp.float32),
        grid=(B, nd),
        in_specs=[
            pl.BlockSpec((TD, H, W, C), lambda b, d: (b * nd + d, 0, 0, 0)),
            pl.BlockSpec((1, C), lambda b, d: (0, 0)),
            pl.BlockSpec((1, 1), lambda b, d: (0, 0)),
        ],
        out_specs=pl.BlockSpec((TD, H, W), lambda b, d: (b * nd + d, 0, 0)),
        compiler_params=pltpu.CompilerParams(
            dimension_semantics=("parallel", "parallel"),
            vmem_limit_bytes=_vmem_limit_bytes()),
    )
    return jax.jit(f)


def seg_out_conv(x, w, b):
    """UnetOutBlock: 1x1x1 conv with bias + sigmoid."""
    B, D, H, W, Cin = x.shape
    Cout = w.shape[0]
    if Cout != 1:   # generic fallback (not hit for TMSS: out_channels == 1)
        y = pallas_matmul(x.reshape(-1, Cin), w.reshape(Cout, Cin).T, b,
                          act="sigmoid", out_dtype=jnp.float32)
        return y.reshape(B, D, H, W, Cout)
    TD = _depth_tile(D, H * W * Cin * 2)
    y = _segout_callable(B, D, H, W, Cin, TD)(
        x.astype(jnp.bfloat16).reshape(B * D, H, W, Cin),
        w.reshape(1, Cin).astype(jnp.float32),
        b.reshape(1, 1).astype(jnp.float32))
    return y.reshape(B, D, H, W, 1)


# ----------------------------------------------------------------------------
# fused survival head: token-mean + fc/BN(eval)/ReLU x2 + MTLR + G + sigmoid
# ----------------------------------------------------------------------------
def _head_kernel(x_ref, w1_ref, b1_ref, w2_ref, b2_ref, wm_ref, bm_ref, g_ref,
                 feats_ref, pred_ref, *, bn_scale):
    x = x_ref[...].astype(jnp.float32)                       # (B, T, H)
    feats = jnp.mean(x, axis=1)                              # (B, H)
    feats_ref[...] = feats
    h = jnp.dot(feats, w1_ref[...], preferred_element_type=jnp.float32) + b1_ref[...]
    h = jnp.maximum(h * bn_scale, 0.0)
    h = jnp.dot(h, w2_ref[...], preferred_element_type=jnp.float32) + b2_ref[...]
    h = jnp.maximum(h * bn_scale, 0.0)
    logits = jnp.dot(h, wm_ref[...], preferred_element_type=jnp.float32) + bm_ref[...]
    logits = jnp.dot(logits, g_ref[...], preferred_element_type=jnp.float32)
    pred_ref[...] = 1.0 / (1.0 + jnp.exp(-logits))


@functools.lru_cache(maxsize=None)
def _head_callable(B, T, Hd, F1, F2, NB):
    kern = functools.partial(_head_kernel, bn_scale=_BN_EVAL_SCALE)

    def spec(shape):
        nd = len(shape)
        return pl.BlockSpec(shape, lambda *_, nd=nd: (0,) * nd)

    f = pl.pallas_call(
        kern,
        out_shape=(jax.ShapeDtypeStruct((B, Hd), jnp.float32),
                   jax.ShapeDtypeStruct((B, NB), jnp.float32)),
        grid=(1,),
        in_specs=[spec((B, T, Hd)), spec((Hd, F1)), spec((1, F1)),
                  spec((F1, F2)), spec((1, F2)),
                  spec((F2, NB)), spec((1, NB)), spec((NB, NB))],
        out_specs=(spec((B, Hd)), spec((B, NB))),
        compiler_params=pltpu.CompilerParams(
            dimension_semantics=("arbitrary",),
            vmem_limit_bytes=_vmem_limit_bytes()),
    )
    return jax.jit(f)


def pallas_survival_head(x, params):
    B, T, Hd = x.shape
    F1 = params["fc1_w"].shape[1]
    F2 = params["fc2_w"].shape[1]
    NB = params["mtlr_w"].shape[1]
    feats, pred = _head_callable(B, T, Hd, F1, F2, NB)(
        x.astype(jnp.bfloat16),
        params["fc1_w"].astype(jnp.float32),
        params["fc1_b"].reshape(1, F1).astype(jnp.float32),
        params["fc2_w"].astype(jnp.float32),
        params["fc2_b"].reshape(1, F2).astype(jnp.float32),
        params["mtlr_w"].astype(jnp.float32),
        params["mtlr_b"].reshape(1, NB).astype(jnp.float32),
        params["G"].astype(jnp.float32))
    return feats, pred


# ----------------------------------------------------------------------------
# patchify / transpose-conv wrappers (channels-last, Pallas matmul hot path)
# ----------------------------------------------------------------------------
def conv_transpose3d_x2(x, w):
    """ConvTranspose3d kernel_size == stride == 2, no bias (no output overlap)."""
    B, D, H, W, Cin = x.shape
    Cout = w.shape[1]
    w2 = jnp.transpose(w, (0, 2, 3, 4, 1)).reshape(Cin, 8 * Cout)
    y = pallas_matmul(x.reshape(-1, Cin), w2)
    y = y.reshape(B, D, H, W, 2, 2, 2, Cout)
    y = y.transpose(0, 1, 4, 2, 5, 3, 6, 7).reshape(B, 2 * D, 2 * H, 2 * W, Cout)
    return y


def conv3d_patchify_tokens(x, w, b):
    """ViT patch embedding (Conv3d kernel==stride==patch) -> tokens (B, n_patch, hidden)."""
    B, D, H, W, Cin = x.shape
    hid = w.shape[0]
    p = w.shape[2]
    gd, gh, gw = D // p, H // p, W // p
    xr = x.reshape(B, gd, p, gh, p, gw, p, Cin)
    xr = xr.transpose(0, 1, 3, 5, 2, 4, 6, 7).reshape(B * gd * gh * gw, p * p * p * Cin)
    w2 = jnp.transpose(w, (2, 3, 4, 1, 0)).reshape(p * p * p * Cin, hid)
    y = pallas_matmul(xr, w2, b)
    return y.reshape(B, gd * gh * gw, hid)


# ----------------------------------------------------------------------------
# UNETR blocks (MONAI semantics, eval mode, channels-last)
# ----------------------------------------------------------------------------
def unet_res_block(x, p):
    y1, s1 = conv3d_3x3_stats(x, p["conv1_w"])
    h = instnorm_lrelu(y1, s1)
    y2, s2 = conv3d_3x3_stats(h, p["conv2_w"])
    if "conv3_w" in p:
        r, sr = conv3d_1x1_stats(x, p["conv3_w"])
        return instnorm_add_norm_lrelu(y2, s2, r, sr)
    return instnorm_add_lrelu(y2, s2, x)


def unetr_pr_up_block(x, p):
    x = conv_transpose3d_x2(x, p["tconv_init_w"])
    for blk in p["blocks"]:
        x = conv_transpose3d_x2(x, blk["tconv_w"])
        x = unet_res_block(x, blk["res"])
    return x


def unetr_up_block(x, skip, p):
    x = conv_transpose3d_x2(x, p["tconv_w"])
    x = jnp.concatenate([x, skip.astype(x.dtype)], axis=-1)
    return unet_res_block(x, p["res"])


def proj_feat_cl(tokens, feat_size, hidden):
    B = tokens.shape[0]
    return tokens.reshape(B, feat_size[0], feat_size[1], feat_size[2], hidden)


# ----------------------------------------------------------------------------
# ViT
# ----------------------------------------------------------------------------
def transformer_block(x, p, num_heads):
    B, T, D = x.shape
    dh = D // num_heads
    h = pallas_layernorm(x, p["ln1_g"], p["ln1_b"])
    # fold the 1/sqrt(dh) attention scale into the q columns of the qkv weight
    qkv_w = jnp.concatenate(
        [p["qkv_w"][:, :D] * (dh ** -0.5), p["qkv_w"][:, D:]], axis=1)
    qkv = linear(h, qkv_w)                                   # (B, T, 3D), no bias
    qkv = qkv.reshape(B, T, 3, num_heads, dh).transpose(2, 0, 3, 1, 4)
    q = qkv[0].reshape(B * num_heads, T, dh)
    k = qkv[1].reshape(B * num_heads, T, dh)
    v = qkv[2].reshape(B * num_heads, T, dh)
    a = pallas_attention(q, k, v)
    a = a.reshape(B, num_heads, T, dh).transpose(0, 2, 1, 3).reshape(B, T, D)
    x = x + linear(a, p["proj_w"], p["proj_b"])
    h = pallas_layernorm(x, p["ln2_g"], p["ln2_b"])
    h = linear(h, p["mlp_w1"], p["mlp_b1"], act="gelu")
    h = linear(h, p["mlp_w2"], p["mlp_b2"])
    return x + h


def vit_forward(img_cl, tab, vp, cfg):
    pe = vp["patch_embed"]
    tokens = conv3d_patchify_tokens(img_cl, pe["conv_w"], pe["conv_b"])
    clin = linear(tab, pe["ehr_w"], pe["ehr_b"])[:, None, :]          # (B, 1, hidden)
    x = jnp.concatenate([clin, tokens], axis=1)
    x = (x.astype(jnp.float32) + pe["pos_emb"]).astype(jnp.bfloat16)
    hidden_states_out = []
    for lp in vp["layers"]:
        x = transformer_block(x, lp, cfg["num_heads"])
        hidden_states_out.append(x)
    x = pallas_layernorm(x, vp["norm_g"], vp["norm_b"])
    return x, hidden_states_out


# ----------------------------------------------------------------------------
# TMSS forward
# ----------------------------------------------------------------------------
def tmss_forward(params, pt, ct, tab, cfg):
    img = jnp.concatenate([pt, ct], axis=1)                  # (B, 2, D, H, W)
    img_cl = jnp.transpose(img, (0, 2, 3, 4, 1))             # channels-last
    x, hs = vit_forward(img_cl, tab, params["vit"], cfg)

    fsz = cfg["feat_size"]
    Hd = cfg["hidden_size"]
    enc1 = unet_res_block(img_cl, params["encoder1"])
    enc2 = unetr_pr_up_block(proj_feat_cl(hs[3][:, 1:, :], fsz, Hd), params["encoder2"])
    enc3 = unetr_pr_up_block(proj_feat_cl(hs[6][:, 1:, :], fsz, Hd), params["encoder3"])
    enc4 = unetr_pr_up_block(proj_feat_cl(hs[9][:, 1:, :], fsz, Hd), params["encoder4"])

    dec4 = proj_feat_cl(x[:, 1:, :], fsz, Hd)
    dec3 = unetr_up_block(dec4, enc4, params["decoder5"])
    dec2 = unetr_up_block(dec3, enc3, params["decoder4"])
    dec1 = unetr_up_block(dec2, enc2, params["decoder3"])
    out = unetr_up_block(dec1, enc1, params["decoder2"])
    seg = seg_out_conv(out, params["out_w"], params["out_b"])
    seg_pred = jnp.moveaxis(seg, -1, 1)                      # back to NCDHW

    feats, pred = pallas_survival_head(x, params)
    return seg_pred, pred, feats


# ----------------------------------------------------------------------------
# deterministic synthetic parameter init (torch weight layouts)
# ----------------------------------------------------------------------------
class _KeyGen:
    def __init__(self, key):
        self._key = key

    def __call__(self):
        self._key, sub = jax.random.split(self._key)
        return sub


def _normal(key, shape, std=0.02):
    return jax.random.normal(key, shape, jnp.float32) * std


def init_params(key, cfg):
    kg = _KeyGen(key)
    H, mlp = cfg["hidden_size"], cfg["mlp_dim"]
    fs, cin, p, tdim = cfg["feature_size"], cfg["in_channels"], cfg["patch_size"], cfg["t_dim"]

    def lin(kin, kout):
        return _normal(kg(), (kin, kout)), jnp.zeros((kout,), jnp.float32)

    def conv_w(cout, cin_, k):
        return _normal(kg(), (cout, cin_, k, k, k))

    def tconv_w(cin_, cout):
        return _normal(kg(), (cin_, cout, 2, 2, 2))

    def res_params(cin_, cout):
        d = {"conv1_w": conv_w(cout, cin_, 3), "conv2_w": conv_w(cout, cout, 3)}
        if cin_ != cout:
            d["conv3_w"] = conv_w(cout, cin_, 1)
        return d

    def layer_params():
        qkv_w = _normal(kg(), (H, 3 * H))
        proj_w, proj_b = lin(H, H)
        w1, b1 = lin(H, mlp)
        w2, b2 = lin(mlp, H)
        return dict(ln1_g=jnp.ones((H,), jnp.float32), ln1_b=jnp.zeros((H,), jnp.float32),
                    qkv_w=qkv_w, proj_w=proj_w, proj_b=proj_b,
                    ln2_g=jnp.ones((H,), jnp.float32), ln2_b=jnp.zeros((H,), jnp.float32),
                    mlp_w1=w1, mlp_b1=b1, mlp_w2=w2, mlp_b2=b2)

    ehr_w, ehr_b = lin(tdim, H)
    vit = dict(
        patch_embed=dict(
            conv_w=_normal(kg(), (H, cin, p, p, p)),
            conv_b=jnp.zeros((H,), jnp.float32),
            ehr_w=ehr_w, ehr_b=ehr_b,
            pos_emb=_normal(kg(), (1, cfg["n_tokens"], H)),
        ),
        layers=[layer_params() for _ in range(cfg["num_layers"])],
        norm_g=jnp.ones((H,), jnp.float32),
        norm_b=jnp.zeros((H,), jnp.float32),
    )

    params = dict(vit=vit)
    params["encoder1"] = res_params(cin, fs)
    params["encoder2"] = dict(
        tconv_init_w=tconv_w(H, fs * 2),
        blocks=[dict(tconv_w=tconv_w(fs * 2, fs * 2), res=res_params(fs * 2, fs * 2))
                for _ in range(2)])
    params["encoder3"] = dict(
        tconv_init_w=tconv_w(H, fs * 4),
        blocks=[dict(tconv_w=tconv_w(fs * 4, fs * 4), res=res_params(fs * 4, fs * 4))
                for _ in range(1)])
    params["encoder4"] = dict(tconv_init_w=tconv_w(H, fs * 8), blocks=[])
    params["decoder5"] = dict(tconv_w=tconv_w(H, fs * 8), res=res_params(fs * 16, fs * 8))
    params["decoder4"] = dict(tconv_w=tconv_w(fs * 8, fs * 4), res=res_params(fs * 8, fs * 4))
    params["decoder3"] = dict(tconv_w=tconv_w(fs * 4, fs * 2), res=res_params(fs * 4, fs * 2))
    params["decoder2"] = dict(tconv_w=tconv_w(fs * 2, fs), res=res_params(fs * 2, fs))
    params["out_w"] = _normal(kg(), (cfg["out_channels"], fs, 1, 1, 1))
    params["out_b"] = jnp.zeros((cfg["out_channels"],), jnp.float32)

    fc1, fc2, bins = cfg["fc1"], cfg["fc2"], cfg["num_time_bins"]
    params["fc1_w"], params["fc1_b"] = lin(H, fc1)
    params["fc2_w"], params["fc2_b"] = lin(fc1, fc2)
    params["mtlr_w"] = _normal(kg(), (fc2, bins), std=math.sqrt(2.0 / (fc2 + bins)))
    params["mtlr_b"] = jnp.zeros((bins,), jnp.float32)
    params["G"] = jnp.tril(jnp.ones((bins, bins), jnp.float32))
    return params


# ----------------------------------------------------------------------------
# main
# ----------------------------------------------------------------------------
if __name__ == "__main__":
    # Shrunk-but-structurally-faithful config (original: img 112^3, hidden 768,
    # mlp 3072, feature_size 16, fc 768->512->128; patch_size stays 16 because the
    # 4x2 decoder upsampling chain requires feat = img / 16).
    CFG = dict(
        in_channels=2, out_channels=1,
        img_size=(32, 32, 32), patch_size=16,
        hidden_size=64, mlp_dim=128, num_layers=12, num_heads=4,
        feature_size=8, t_dim=8,
        fc1=32, fc2=16, num_time_bins=10,
    )
    fsz = tuple(s // CFG["patch_size"] for s in CFG["img_size"])
    CFG["feat_size"] = fsz
    CFG["n_tokens"] = fsz[0] * fsz[1] * fsz[2] + 1

    key = jax.random.PRNGKey(0)
    kp, k1, k2, k3 = jax.random.split(key, 4)
    params = init_params(kp, CFG)

    B = 2
    D, Hh, W = CFG["img_size"]
    pt = jax.random.normal(k1, (B, 1, D, Hh, W), jnp.float32)
    ct = jax.random.normal(k2, (B, 1, D, Hh, W), jnp.float32)
    tab = jax.random.normal(k3, (B, CFG["t_dim"]), jnp.float32)

    seg_pred, pred, feats = tmss_forward(params, pt, ct, tab, CFG)
    jax.block_until_ready((seg_pred, pred, feats))
    assert seg_pred.shape == (B, 1, D, Hh, W)
    assert pred.shape == (B, CFG["num_time_bins"])
    assert feats.shape == (B, CFG["hidden_size"])
    print("KERNEL_OK")
</pallas_src>

<mosaic_0001>
module attributes {stable_mosaic.version = 11 : i64} {
  func.func @_matmul_kernel(%arg0: i32, %arg1: i32, %arg2: i32, %arg3: memref<128x2048xbf16, #tpu.memory_space<vmem>>, %arg4: memref<2048x64xbf16, #tpu.memory_space<vmem>>, %arg5: memref<1x64xf32, #tpu.memory_space<vmem>>, %arg6: memref<128x64xbf16, #tpu.memory_space<vmem>>, %arg7: memref<128x64xf32, #tpu.memory_space<vmem>>) attributes {dimension_semantics = [#tpu.dimension_semantics<parallel>, #tpu.dimension_semantics<parallel>, #tpu.dimension_semantics<arbitrary>], iteration_bounds = array<i64: 1, 1, 4>, scalar_prefetch = 0 : i64, scratch_operands = 1 : i64, tpu.core_type = #tpu.core_type<tc>, window_params = [{transform_indices = @transform_0, window_bounds = array<i64: 128, 2048>}, {transform_indices = @transform_1, window_bounds = array<i64: 2048, 64>}, {transform_indices = @transform_2, window_bounds = array<i64: 1, 64>}, {transform_indices = @transform_3, window_bounds = array<i64: 128, 64>}]} {
    %c0_i32 = arith.constant 0 : i32
    %0 = arith.cmpi eq, %arg2, %c0_i32 : i32
    %1 = arith.extui %0 : i1 to i32
    %c0_i32_0 = arith.constant 0 : i32
    %2 = arith.cmpi ne, %1, %c0_i32_0 : i32
    scf.if %2 {
      %cst_9 = arith.constant 0.000000e+00 : f32
      %12 = vector.broadcast %cst_9 : f32 to vector<128x64xf32>
      %c0_10 = arith.constant 0 : index
      %c0_11 = arith.constant 0 : index
      %13 = vector.load %arg7[%c0_10, %c0_11] : memref<128x64xf32, #tpu.memory_space<vmem>>, vector<128x64xf32>
      tpu.vector_store %arg7[%c0_10, %c0_11], %12 {strides = array<i32>} : memref<128x64xf32, #tpu.memory_space<vmem>>, vector<128x64xf32>,
    } else {
    }
    %c0 = arith.constant 0 : index
    %c0_1 = arith.constant 0 : index
    %3 = vector.load %arg7[%c0, %c0_1] : memref<128x64xf32, #tpu.memory_space<vmem>>, vector<128x64xf32>
    %c0_2 = arith.constant 0 : index
    %c0_3 = arith.constant 0 : index
    %4 = vector.load %arg3[%c0_2, %c0_3] : memref<128x2048xbf16, #tpu.memory_space<vmem>>, vector<128x2048xbf16>
    %c0_4 = arith.constant 0 : index
    %c0_5 = arith.constant 0 : index
    %5 = vector.load %arg4[%c0_4, %c0_5] : memref<2048x64xbf16, #tpu.memory_space<vmem>>, vector<2048x64xbf16>
    %cst = arith.constant dense<0.000000e+00> : vector<128x64xf32>
    %6 = tpu.matmul %4, %5, %cst {dimension_numbers = #tpu.dot_dimension_numbers<[1], [0], [0], [1], [0, 0, 1, 1], [], []>} : vector<128x2048xbf16>, vector<2048x64xbf16>, vector<128x64xf32> -> vector<128x64xf32>
    %7 = arith.addf %3, %6 : vector<128x64xf32>
    %c0_6 = arith.constant 0 : index
    %c0_7 = arith.constant 0 : index
    %8 = vector.load %arg7[%c0_6, %c0_7] : memref<128x64xf32, #tpu.memory_space<vmem>>, vector<128x64xf32>
    tpu.vector_store %arg7[%c0_6, %c0_7], %7 {strides = array<i32>} : memref<128x64xf32, #tpu.memory_space<vmem>>, vector<128x64xf32>,
    %c3_i32 = arith.constant 3 : i32
    %9 = arith.cmpi eq, %arg2, %c3_i32 : i32
    %10 = arith.extui %9 : i1 to i32
    %c0_i32_8 = arith.constant 0 : i32
    %11 = arith.cmpi ne, %10, %c0_i32_8 : i32
    scf.if %11 {
      %c0_9 = arith.constant 0 : index
      %c0_10 = arith.constant 0 : index
      %12 = vector.load %arg7[%c0_9, %c0_10] : memref<128x64xf32, #tpu.memory_space<vmem>>, vector<128x64xf32>
      %c0_11 = arith.constant 0 : index
      %c0_12 = arith.constant 0 : index
      %13 = vector.load %arg5[%c0_11, %c0_12] : memref<1x64xf32, #tpu.memory_space<vmem>>, vector<1x64xf32>
      %14 = vector.broadcast %13 : vector<1x64xf32> to vector<128x64xf32>
      %15 = arith.addf %12, %14 : vector<128x64xf32>
      %16 = arith.truncf %15 : vector<128x64xf32> to vector<128x64xbf16>
      %c0_13 = arith.constant 0 : index
      %c0_14 = arith.constant 0 : index
      %17 = vector.load %arg6[%c0_13, %c0_14] : memref<128x64xbf16, #tpu.memory_space<vmem>>, vector<128x64xbf16>
      tpu.vector_store %arg6[%c0_13, %c0_14], %16 {strides = array<i32>} : memref<128x64xbf16, #tpu.memory_space<vmem>>, vector<128x64xbf16>,
    } else {
    }
    return
  }
  func.func @transform_0(%arg0: i32, %arg1: i32, %arg2: i32) -> (i32, i32) {
    %c0_i32 = arith.constant 0 : i32
    return %arg0, %arg2 : i32, i32
  }
  func.func @transform_1(%arg0: i32, %arg1: i32, %arg2: i32) -> (i32, i32) {
    %c0_i32 = arith.constant 0 : i32
    return %arg2, %arg1 : i32, i32
  }
  func.func @transform_2(%arg0: i32, %arg1: i32, %arg2: i32) -> (i32, i32) {
    %c0_i32 = arith.constant 0 : i32
    %c0_i32_0 = arith.constant 0 : i32
    return %c0_i32, %arg1 : i32, i32
  }
  func.func @transform_3(%arg0: i32, %arg1: i32, %arg2: i32) -> (i32, i32) {
    %c0_i32 = arith.constant 0 : i32
    return %arg0, %arg1 : i32, i32
  }
}

</mosaic_0001>

<llo_original>
// kernel: tpu_custom_call.1
$region0: #{tpu_custom_call.1}
  #allocation0 [shape = 'u32[]', space=smem, size = 0x4, offset = 0x4, fixed_abs, tag = 'smem constant byte address 0x4 - core index']
  #allocation1 [shape = 'u32[144,128]{1,0:T(1,128)}', space=vmem, size = 0x12000, scoped, tag = 'internal scratch']
  #allocation2 [shape = 'f32[128,64]{1,0:T(8,128)}', space=vmem, size = 0x10000, scoped, tag = 'scratch operand']
  %s0 = inlined_call_operand.vmem [shape: bf16[128,8192], index: 0, kind: input, shape index: {}]
  %s1 = inlined_call_operand.vmem [shape: bf16[8192,64], index: 1, kind: input, shape index: {}]
  %s2 = inlined_call_operand.vmem [shape: f32[1,64], index: 2, kind: input, shape index: {}]
  %s3 = inlined_call_operand.vmem [shape: bf16[128,64], index: 3, kind: output, shape index: {}]
  %s4 = sld [smem:[#allocation0]]
  $region76: #{tpu_custom_call.1} parent=0
    _
  %s6 = ssub.s32 1, %s4
  %s7 = scalar_select 0, %s6, %s4
  $region1: #{tpu_custom_call.1} parent=0
    #allocation3 [shape = 'u8[1048576]{0}', space=vmem, size = 0x100000, scoped, tag = 'input window, operand 0']
    loop: start=0, step=1, limit=6
    $region2: #{tpu_custom_call.1} parent=1 // loop_pre_header
      _
    $region3: #{tpu_custom_call.1} parent=1 // loop_header
      %s9 = sphi 0, %s13
      %p10 = scmp.ge.s32.totalorder %s9, 6
      %s16 = sphi 0, %s35
      %s17 = sphi 0, %s31
      %s18 = sphi 0, %s27
      %s19 = sphi 0, %s16
      %s20 = sphi 0, %s17
      %s21 = sphi 0, %s18
      %s22 = sphi 0, %s19
      %s23 = sphi 0, %s20
      %s24 = sphi 0, %s21
      %s40 = sphi 0, %s42
      %s43 = sphi 0, %s40
      %s44 = sphi 0, %s43
      %s60 = sphi 0, %s44
      %s68 = sphi 0, %s70
      %s71 = sphi 0, %s68
      %s72 = sphi 0, %s71
      %s88 = sphi 0, %s72
      %s94 = sphi 0, %s96
      %s97 = sphi 0, %s94
      %s98 = sphi 0, %s97
      %s114 = sphi 0, %s98
      %s122 = sphi 0, %s124
      %s125 = sphi 0, %s122
      %s126 = sphi 0, %s125
      %s142 = sphi 0, %s126
    $region4: #{tpu_custom_call.1} parent=1 // loop_header_branch
      %12 = sbr.rel (%p10) target = $region8
    $region5: #{tpu_custom_call.1} parent=1 // loop_body
      %s14 = ssub.s32 %s9, 1
      %s15 = ssub.s32 %s9, 2
      %s25 = sadd.s32 1, %s18
      %p26 = scmp.ge.s32.totalorder %s25, 4
      %s27 = scalar_select %p26, 0, %s25
      %s28 = sadd.s32 1, %s17
      %s29 = scalar_select %p26, %s28, %s17
      %p30 = scmp.ge.s32.totalorder %s29, 1
      %s31 = scalar_select %p30, 0, %s29
      %s32 = sadd.s32 1, %s16
      %s33 = scalar_select %p30, %s32, %s16
      %p34 = scmp.ge.s32.totalorder %s33, 1
      %s35 = scalar_select %p34, 0, %s33
      %s36 = ssub.s32 %s16, %s35
      %s37 = ssub.s32 %s18, %s27
      %s38 = sor.u32 %s36, %s37
      %p39 = scmp.eq.s32.totalorder %s38, 0
      %s41 = sadd.s32 %s40, 1
      %s42 = scalar_select %p39, %s40, %s41
      %p45 = pneg %p39
      %p46 = scmp.eq.s32.totalorder %s9, 3
      %p47 = por %p45, %p46
      %p48 = scmp.ne.s32.totalorder %s40, %s43
      %p49 = scmp.eq.s32.totalorder %s9, 0
      %p50 = por %p48, %p49
      %p51 = scmp.ne.s32.totalorder %s40, %s43
      %p52 = scmp.eq.s32.totalorder %s14, 3
      %p53 = por %p51, %p52
      %p54 = scmp.ne.s32.totalorder %s43, %s44
      %p55 = scmp.eq.s32.totalorder %s14, 0
      %p56 = por %p54, %p55
      %p57 = scmp.ne.s32.totalorder %s43, %s44
      %p58 = scmp.eq.s32.totalorder %s15, 3
      %p59 = por %p57, %p58
      %p61 = scmp.ne.s32.totalorder %s44, %s60
      %p62 = scmp.eq.s32.totalorder %s15, 0
      %p63 = por %p61, %p62
      %s64 = ssub.s32 %s18, %s27
      %s65 = ssub.s32 %s17, %s31
      %s66 = sor.u32 %s64, %s65
      %p67 = scmp.eq.s32.totalorder %s66, 0
      %s69 = sadd.s32 %s68, 1
      %s70 = scalar_select %p67, %s68, %s69
      %p73 = pneg %p67
      %p74 = scmp.eq.s32.totalorder %s9, 3
      %p75 = por %p73, %p74
      %p76 = scmp.ne.s32.totalorder %s68, %s71
      %p77 = scmp.eq.s32.totalorder %s9, 0
      %p78 = por %p76, %p77
      %p79 = scmp.ne.s32.totalorder %s68, %s71
      %p80 = scmp.eq.s32.totalorder %s14, 3
      %p81 = por %p79, %p80
      %p82 = scmp.ne.s32.totalorder %s71, %s72
      %p83 = scmp.eq.s32.totalorder %s14, 0
      %p84 = por %p82, %p83
      %p85 = scmp.ne.s32.totalorder %s71, %s72
      %p86 = scmp.eq.s32.totalorder %s15, 3
      %p87 = por %p85, %p86
      %p89 = scmp.ne.s32.totalorder %s72, %s88
      %p90 = scmp.eq.s32.totalorder %s15, 0
      %p91 = por %p89, %p90
      %s92 = ssub.s32 %s17, %s31
      %p93 = scmp.eq.s32.totalorder %s92, 0
      %s95 = sadd.s32 %s94, 1
      %s96 = scalar_select %p93, %s94, %s95
      %p99 = pneg %p93
      %p100 = scmp.eq.s32.totalorder %s9, 3
      %p101 = por %p99, %p100
      %p102 = scmp.ne.s32.totalorder %s94, %s97
      %p103 = scmp.eq.s32.totalorder %s9, 0
      %p104 = por %p102, %p103
      %p105 = scmp.ne.s32.totalorder %s94, %s97
      %p106 = scmp.eq.s32.totalorder %s14, 3
      %p107 = por %p105, %p106
      %p108 = scmp.ne.s32.totalorder %s97, %s98
      %p109 = scmp.eq.s32.totalorder %s14, 0
      %p110 = por %p108, %p109
      %p111 = scmp.ne.s32.totalorder %s97, %s98
      %p112 = scmp.eq.s32.totalorder %s15, 3
      %p113 = por %p111, %p112
      %p115 = scmp.ne.s32.totalorder %s98, %s114
      %p116 = scmp.eq.s32.totalorder %s15, 0
      %p117 = por %p115, %p116
      %s118 = ssub.s32 %s16, %s35
      %s119 = ssub.s32 %s17, %s31
      %s120 = sor.u32 %s118, %s119
      %p121 = scmp.eq.s32.totalorder %s120, 0
      %s123 = sadd.s32 %s122, 1
      %s124 = scalar_select %p121, %s122, %s123
      %p127 = pneg %p121
      %p128 = scmp.eq.s32.totalorder %s9, 3
      %p129 = por %p127, %p128
      %p130 = scmp.ne.s32.totalorder %s122, %s125
      %p131 = scmp.eq.s32.totalorder %s9, 0
      %p132 = por %p130, %p131
      %p133 = scmp.ne.s32.totalorder %s122, %s125
      %p134 = scmp.eq.s32.totalorder %s14, 3
      %p135 = por %p133, %p134
      %p136 = scmp.ne.s32.totalorder %s125, %s126
      %p137 = scmp.eq.s32.totalorder %s14, 0
      %p138 = por %p136, %p137
      %p139 = scmp.ne.s32.totalorder %s125, %s126
      %p140 = scmp.eq.s32.totalorder %s15, 3
      %p141 = por %p139, %p140
      %p143 = scmp.ne.s32.totalorder %s126, %s142
      %p144 = scmp.eq.s32.totalorder %s15, 0
      %p145 = por %p143, %p144
      %p146 = scmp.le.s32.totalorder 1, %s9
      %p147 = scmp.lt.s32.totalorder %s9, 5
      %p148 = pnand %p146, %p147
      %p149 = pneg %p148
      // Predicated region
      $region9: #{tpu_custom_call.1} parent=5 // pred_check
        _
      $region10: #{tpu_custom_call.1} parent=5 // pred_check_branch
        %151 = sbr.rel (%p148) target = $region12
      $region11: #{tpu_custom_call.1} parent=5 // pred_region
        %s152 = ssub.s32 %s9, 1
        // Predicated region
        $region13: #{tpu_custom_call.1} parent=11 // pred_check
          %p153 = pneg %p110
        $region14: #{tpu_custom_call.1} parent=11 // pred_check_branch
          %155 = sbr.rel (%p153) target = $region16
        $region15: #{tpu_custom_call.1} parent=11 // pred_region
          %p156 = scmp.lt.s32.totalorder %s20, 0
          %s157 = scalar_select %p156, %s20, 0
          %s158 = scalar_lea.vmem %s2, %s157
        $region16: #{tpu_custom_call.1} parent=11 // pred_fallthru
          _
      $region12: #{tpu_custom_call.1} parent=5 // pred_fallthru
        _
      %p159 = scmp.lt.s32.totalorder %s9, 4
      // Predicated region
      $region17: #{tpu_custom_call.1} parent=5 // pred_check
        %p160 = pneg %p159
      $region18: #{tpu_custom_call.1} parent=5 // pred_check_branch
        %162 = sbr.rel (%p160) target = $region20
      $region19: #{tpu_custom_call.1} parent=5 // pred_region
        // Predicated region
        $region21: #{tpu_custom_call.1} parent=19 // pred_check
          %p163 = pneg %p50
        $region22: #{tpu_custom_call.1} parent=19 // pred_check_branch
          %165 = sbr.rel (%p163) target = $region24
        $region23: #{tpu_custom_call.1} parent=19 // pred_region
          %s166 = sand.u32 %s40, 1
          %s167 = sand.u32 %s40, 1
          %s168 = smul.addr %s167, 1024
          %s169 = scalar_lea.vmem [#allocation3], %s168
          %s170 = smul.u32 16, %s16
          %s171 = smul.u32 16, %s18
          %s172 = smul.addr %s170, 64
          %s173 = sadd.s32 %s171, %s172
          %s174 = smul.addr %s173, 4
          %s175 = scalar_lea.vmem %s0, %s174
          // Predicated region
          $region25: #{tpu_custom_call.1} parent=23 // pred_check
            _
          $region26: #{tpu_custom_call.1} parent=23 // pred_check_branch
            %177 = sbr.rel (0) target = $region28
          $region27: #{tpu_custom_call.1} parent=23 // pred_region
            // Predicated region
            $region29: #{tpu_custom_call.1} parent=27 // pred_check
              _
            $region30: #{tpu_custom_call.1} parent=27 // pred_check_branch
              %179 = sbr.rel (0) target = $region32
            $region31: #{tpu_custom_call.1} parent=27 // pred_region
              loop: start=0, step=1, limit=1
              $region33: #{tpu_custom_call.1} parent=31 // loop_pre_header
                _
              $region34: #{tpu_custom_call.1} parent=31 // loop_header
                %s181 = sphi 0, %s185
                %p182 = scmp.ge.s32.totalorder %s181, 1
                %s186 = sphi %s175, %s175
                %s187 = sphi %s169, %s169
              $region35: #{tpu_custom_call.1} parent=31 // loop_header_branch
                %184 = sbr.rel (%p182) target = $region39
              $region36: #{tpu_custom_call.1} parent=31 // loop_body
                %v188 = vld [vmem:[%s186] sm:$0xff]
                %189 = vst [vmem:[%s187] sm:$0xff] %v188
                %v190 = vld [vmem:[%s186 + $0x8] sm:$0xff]
                %191 = vst [vmem:[%s187 + $0x8] sm:$0xff] %v190
                %v192 = vld [vmem:[%s186 + $0x10] sm:$0xff]
                %193 = vst [vmem:[%s187 + $0x10] sm:$0xff] %v192
                %v194 = vld [vmem:[%s186 + $0x18] sm:$0xff]
                %195 = vst [vmem:[%s187 + $0x18] sm:$0xff] %v194
                %v196 = vld [vmem:[%s186 + $0x20] sm:$0xff]
                %197 = vst [vmem:[%s187 + $0x20] sm:$0xff] %v196
                %v198 = vld [vmem:[%s186 + $0x28] sm:$0xff]
                %199 = vst [vmem:[%s187 + $0x28] sm:$0xff] %v198
                %v200 = vld [vmem:[%s186 + $0x30] sm:$0xff]
                %201 = vst [vmem:[%s187 + $0x30] sm:$0xff] %v200
                %v202 = vld [vmem:[%s186 + $0x38] sm:$0xff]
                %203 = vst [vmem:[%s187 + $0x38] sm:$0xff] %v202
                %v204 = vld [vmem:[%s186 + $0x100] sm:$0xff]
                %205 = vst [vmem:[%s187 + $0x40] sm:$0xff] %v204
                %v206 = vld [vmem:[%s186 + $0x108] sm:$0xff]
                %207 = vst [vmem:[%s187 + $0x48] sm:$0xff] %v206
                %v208 = vld [vmem:[%s186 + $0x110] sm:$0xff]
                %209 = vst [vmem:[%s187 + $0x50] sm:$0xff] %v208
                %v210 = vld [vmem:[%s186 + $0x118] sm:$0xff]
                %211 = vst [vmem:[%s187 + $0x58] sm:$0xff] %v210
                %v212 = vld [vmem:[%s186 + $0x120] sm:$0xff]
                %213 = vst [vmem:[%s187 + $0x60] sm:$0xff] %v212
                %v214 = vld [vmem:[%s186 + $0x128] sm:$0xff]
                %215 = vst [vmem:[%s187 + $0x68] sm:$0xff] %v214
                %v216 = vld [vmem:[%s186 + $0x130] sm:$0xff]
                %217 = vst [vmem:[%s187 + $0x70] sm:$0xff] %v216
                %v218 = vld [vmem:[%s186 + $0x138] sm:$0xff]
                %219 = vst [vmem:[%s187 + $0x78] sm:$0xff] %v218
                %v220 = vld [vmem:[%s186 + $0x200] sm:$0xff]
                %221 = vst [vmem:[%s187 + $0x80] sm:$0xff] %v220
                %v222 = vld [vmem:[%s186 + $0x208] sm:$0xff]
                %223 = vst [vmem:[%s187 + $0x88] sm:$0xff] %v222
                %v224 = vld [vmem:[%s186 + $0x210] sm:$0xff]
                %225 = vst [vmem:[%s187 + $0x90] sm:$0xff] %v224
                %v226 = vld [vmem:[%s186 + $0x218] sm:$0xff]
                %227 = vst [vmem:[%s187 + $0x98] sm:$0xff] %v226
                %v228 = vld [vmem:[%s186 + $0x220] sm:$0xff]
                %229 = vst [vmem:[%s187 + $0xa0] sm:$0xff] %v228
                %v230 = vld [vmem:[%s186 + $0x228] sm:$0xff]
                %231 = vst [vmem:[%s187 + $0xa8] sm:$0xff] %v230
                %v232 = vld [vmem:[%s186 + $0x230] sm:$0xff]
                %233 = vst [vmem:[%s187 + $0xb0] sm:$0xff] %v232
                %v234 = vld [vmem:[%s186 + $0x238] sm:$0xff]
                %235 = vst [vmem:[%s187 + $0xb8] sm:$0xff] %v234
                %v236 = vld [vmem:[%s186 + $0x300] sm:$0xff]
                %237 = vst [vmem:[%s187 + $0xc0] sm:$0xff] %v236
                %v238 = vld [vmem:[%s186 + $0x308] sm:$0xff]
                %239 = vst [vmem:[%s187 + $0xc8] sm:$0xff] %v238
                %v240 = vld [vmem:[%s186 + $0x310] sm:$0xff]
                %241 = vst [vmem:[%s187 + $0xd0] sm:$0xff] %v240
                %v242 = vld [vmem:[%s186 + $0x318] sm:$0xff]
                %243 = vst [vmem:[%s187 + $0xd8] sm:$0xff] %v242
                %v244 = vld [vmem:[%s186 + $0x320] sm:$0xff]
                %245 = vst [vmem:[%s187 + $0xe0] sm:$0xff] %v244
                %v246 = vld [vmem:[%s186 + $0x328] sm:$0xff]
                %247 = vst [vmem:[%s187 + $0xe8] sm:$0xff] %v246
                %v248 = vld [vmem:[%s186 + $0x330] sm:$0xff]
                %249 = vst [vmem:[%s187 + $0xf0] sm:$0xff] %v248
                %v250 = vld [vmem:[%s186 + $0x338] sm:$0xff]
                %251 = vst [vmem:[%s187 + $0xf8] sm:$0xff] %v250
                %v252 = vld [vmem:[%s186 + $0x400] sm:$0xff]
                %253 = vst [vmem:[%s187 + $0x100] sm:$0xff] %v252
                %v254 = vld [vmem:[%s186 + $0x408] sm:$0xff]
                %255 = vst [vmem:[%s187 + $0x108] sm:$0xff] %v254
                %v256 = vld [vmem:[%s186 + $0x410] sm:$0xff]
                %257 = vst [vmem:[%s187 + $0x110] sm:$0xff] %v256
                %v258 = vld [vmem:[%s186 + $0x418] sm:$0xff]
                %259 = vst [vmem:[%s187 + $0x118] sm:$0xff] %v258
                %v260 = vld [vmem:[%s186 + $0x420] sm:$0xff]
                %261 = vst [vmem:[%s187 + $0x120] sm:$0xff] %v260
                %v262 = vld [vmem:[%s186 + $0x428] sm:$0xff]
                %263 = vst [vmem:[%s187 + $0x128] sm:$0xff] %v262
                %v264 = vld [vmem:[%s186 + $0x430] sm:$0xff]
                %265 = vst [vmem:[%s187 + $0x130] sm:$0xff] %v264
                %v266 = vld [vmem:[%s186 + $0x438] sm:$0xff]
                %267 = vst [vmem:[%s187 + $0x138] sm:$0xff] %v266
                %v268 = vld [vmem:[%s186 + $0x500] sm:$0xff]
                %269 = vst [vmem:[%s187 + $0x140] sm:$0xff] %v268
                %v270 = vld [vmem:[%s186 + $0x508] sm:$0xff]
                %271 = vst [vmem:[%s187 + $0x148] sm:$0xff] %v270
                %v272 = vld [vmem:[%s186 + $0x510] sm:$0xff]
                %273 = vst [vmem:[%s187 + $0x150] sm:$0xff] %v272
                %v274 = vld [vmem:[%s186 + $0x518] sm:$0xff]
                %275 = vst [vmem:[%s187 + $0x158] sm:$0xff] %v274
                %v276 = vld [vmem:[%s186 + $0x520] sm:$0xff]
                %277 = vst [vmem:[%s187 + $0x160] sm:$0xff] %v276
                %v278 = vld [vmem:[%s186 + $0x528] sm:$0xff]
                %279 = vst [vmem:[%s187 + $0x168] sm:$0xff] %v278
                %v280 = vld [vmem:[%s186 + $0x530] sm:$0xff]
                %281 = vst [vmem:[%s187 + $0x170] sm:$0xff] %v280
                %v282 = vld [vmem:[%s186 + $0x538] sm:$0xff]
                %283 = vst [vmem:[%s187 + $0x178] sm:$0xff] %v282
                %v284 = vld [vmem:[%s186 + $0x600] sm:$0xff]
                %285 = vst [vmem:[%s187 + $0x180] sm:$0xff] %v284
                %v286 = vld [vmem:[%s186 + $0x608] sm:$0xff]
                %287 = vst [vmem:[%s187 + $0x188] sm:$0xff] %v286
                %v288 = vld [vmem:[%s186 + $0x610] sm:$0xff]
                %289 = vst [vmem:[%s187 + $0x190] sm:$0xff] %v288
                %v290 = vld [vmem:[%s186 + $0x618] sm:$0xff]
                %291 = vst [vmem:[%s187 + $0x198] sm:$0xff] %v290
                %v292 = vld [vmem:[%s186 + $0x620] sm:$0xff]
                %293 = vst [vmem:[%s187 + $0x1a0] sm:$0xff] %v292
                %v294 = vld [vmem:[%s186 + $0x628] sm:$0xff]
                %295 = vst [vmem:[%s187 + $0x1a8] sm:$0xff] %v294
                %v296 = vld [vmem:[%s186 + $0x630] sm:$0xff]
                %297 = vst [vmem:[%s187 + $0x1b0] sm:$0xff] %v296
                %v298 = vld [vmem:[%s186 + $0x638] sm:$0xff]
                %299 = vst [vmem:[%s187 + $0x1b8] sm:$0xff] %v298
                %v300 = vld [vmem:[%s186 + $0x700] sm:$0xff]
                %301 = vst [vmem:[%s187 + $0x1c0] sm:$0xff] %v300
                %v302 = vld [vmem:[%s186 + $0x708] sm:$0xff]
                %303 = vst [vmem:[%s187 + $0x1c8] sm:$0xff] %v302
                %v304 = vld [vmem:[%s186 + $0x710] sm:$0xff]
                %305 = vst [vmem:[%s187 + $0x1d0] sm:$0xff] %v304
                %v306 = vld [vmem:[%s186 + $0x718] sm:$0xff]
                %307 = vst [vmem:[%s187 + $0x1d8] sm:$0xff] %v306
                %v308 = vld [vmem:[%s186 + $0x720] sm:$0xff]
                %309 = vst [vmem:[%s187 + $0x1e0] sm:$0xff] %v308
                %v310 = vld [vmem:[%s186 + $0x728] sm:$0xff]
                %311 = vst [vmem:[%s187 + $0x1e8] sm:$0xff] %v310
                %v312 = vld [vmem:[%s186 + $0x730] sm:$0xff]
                %313 = vst [vmem:[%s187 + $0x1f0] sm:$0xff] %v312
                %v314 = vld [vmem:[%s186 + $0x738] sm:$0xff]
                %315 = vst [vmem:[%s187 + $0x1f8] sm:$0xff] %v314
                %v316 = vld [vmem:[%s186 + $0x800] sm:$0xff]
                %317 = vst [vmem:[%s187 + $0x200] sm:$0xff] %v316
                %v318 = vld [vmem:[%s186 + $0x808] sm:$0xff]
                %319 = vst [vmem:[%s187 + $0x208] sm:$0xff] %v318
                %v320 = vld [vmem:[%s186 + $0x810] sm:$0xff]
                %321 = vst [vmem:[%s187 + $0x210] sm:$0xff] %v320
                %v322 = vld [vmem:[%s186 + $0x818] sm:$0xff]
                %323 = vst [vmem:[%s187 + $0x218] sm:$0xff] %v322
                %v324 = vld [vmem:[%s186 + $0x820] sm:$0xff]
                %325 = vst [vmem:[%s187 + $0x220] sm:$0xff] %v324
                %v326 = vld [vmem:[%s186 + $0x828] sm:$0xff]
                %327 = vst [vmem:[%s187 + $0x228] sm:$0xff] %v326
                %v328 = vld [vmem:[%s186 + $0x830] sm:$0xff]
                %329 = vst [vmem:[%s187 + $0x230] sm:$0xff] %v328
                %v330 = vld [vmem:[%s186 + $0x838] sm:$0xff]
                %331 = vst [vmem:[%s187 + $0x238] sm:$0xff] %v330
                %v332 = vld [vmem:[%s186 + $0x900] sm:$0xff]
                %333 = vst [vmem:[%s187 + $0x240] sm:$0xff] %v332
                %v334 = vld [vmem:[%s186 + $0x908] sm:$0xff]
                %335 = vst [vmem:[%s187 + $0x248] sm:$0xff] %v334
                %v336 = vld [vmem:[%s186 + $0x910] sm:$0xff]
                %337 = vst [vmem:[%s187 + $0x250] sm:$0xff] %v336
                %v338 = vld [vmem:[%s186 + $0x918] sm:$0xff]
                %339 = vst [vmem:[%s187 + $0x258] sm:$0xff] %v338
                %v340 = vld [vmem:[%s186 + $0x920] sm:$0xff]
                %341 = vst [vmem:[%s187 + $0x260] sm:$0xff] %v340
                %v342 = vld [vmem:[%s186 + $0x928] sm:$0xff]
                %343 = vst [vmem:[%s187 + $0x268] sm:$0xff] %v342
                %v344 = vld [vmem:[%s186 + $0x930] sm:$0xff]
                %345 = vst [vmem:[%s187 + $0x270] sm:$0xff] %v344
                %v346 = vld [vmem:[%s186 + $0x938] sm:$0xff]
                %347 = vst [vmem:[%s187 + $0x278] sm:$0xff] %v346
                %v348 = vld [vmem:[%s186 + $0xa00] sm:$0xff]
                %349 = vst [vmem:[%s187 + $0x280] sm:$0xff] %v348
                %v350 = vld [vmem:[%s186 + $0xa08] sm:$0xff]
                %351 = vst [vmem:[%s187 + $0x288] sm:$0xff] %v350
                %v352 = vld [vmem:[%s186 + $0xa10] sm:$0xff]
                %353 = vst [vmem:[%s187 + $0x290] sm:$0xff] %v352
                %v354 = vld [vmem:[%s186 + $0xa18] sm:$0xff]
                %355 = vst [vmem:[%s187 + $0x298] sm:$0xff] %v354
                %v356 = vld [vmem:[%s186 + $0xa20] sm:$0xff]
                %357 = vst [vmem:[%s187 + $0x2a0] sm:$0xff] %v356
                %v358 = vld [vmem:[%s186 + $0xa28] sm:$0xff]
                %359 = vst [vmem:[%s187 + $0x2a8] sm:$0xff] %v358
                %v360 = vld [vmem:[%s186 + $0xa30] sm:$0xff]
                %361 = vst [vmem:[%s187 + $0x2b0] sm:$0xff] %v360
                %v362 = vld [vmem:[%s186 + $0xa38] sm:$0xff]
                %363 = vst [vmem:[%s187 + $0x2b8] sm:$0xff] %v362
                %v364 = vld [vmem:[%s186 + $0xb00] sm:$0xff]
                %365 = vst [vmem:[%s187 + $0x2c0] sm:$0xff] %v364
                %v366 = vld [vmem:[%s186 + $0xb08] sm:$0xff]
                %367 = vst [vmem:[%s187 + $0x2c8] sm:$0xff] %v366
                %v368 = vld [vmem:[%s186 + $0xb10] sm:$0xff]
                %369 = vst [vmem:[%s187 + $0x2d0] sm:$0xff] %v368
                %v370 = vld [vmem:[%s186 + $0xb18] sm:$0xff]
                %371 = vst [vmem:[%s187 + $0x2d8] sm:$0xff] %v370
                %v372 = vld [vmem:[%s186 + $0xb20] sm:$0xff]
                %373 = vst [vmem:[%s187 + $0x2e0] sm:$0xff] %v372
                %v374 = vld [vmem:[%s186 + $0xb28] sm:$0xff]
                %375 = vst [vmem:[%s187 + $0x2e8] sm:$0xff] %v374
                %v376 = vld [vmem:[%s186 + $0xb30] sm:$0xff]
                %377 = vst [vmem:[%s187 + $0x2f0] sm:$0xff] %v376
                %v378 = vld [vmem:[%s186 + $0xb38] sm:$0xff]
                %379 = vst [vmem:[%s187 + $0x2f8] sm:$0xff] %v378
                %v380 = vld [vmem:[%s186 + $0xc00] sm:$0xff]
                %381 = vst [vmem:[%s187 + $0x300] sm:$0xff] %v380
                %v382 = vld [vmem:[%s186 + $0xc08] sm:$0xff]
                %383 = vst [vmem:[%s187 + $0x308] sm:$0xff] %v382
                %v384 = vld [vmem:[%s186 + $0xc10] sm:$0xff]
                %385 = vst [vmem:[%s187 + $0x310] sm:$0xff] %v384
                %v386 = vld [vmem:[%s186 + $0xc18] sm:$0xff]
                %387 = vst [vmem:[%s187 + $0x318] sm:$0xff] %v386
                %v388 = vld [vmem:[%s186 + $0xc20] sm:$0xff]
                %389 = vst [vmem:[%s187 + $0x320] sm:$0xff] %v388
                %v390 = vld [vmem:[%s186 + $0xc28] sm:$0xff]
                %391 = vst [vmem:[%s187 + $0x328] sm:$0xff] %v390
                %v392 = vld [vmem:[%s186 + $0xc30] sm:$0xff]
                %393 = vst [vmem:[%s187 + $0x330] sm:$0xff] %v392
                %v394 = vld [vmem:[%s186 + $0xc38] sm:$0xff]
                %395 = vst [vmem:[%s187 + $0x338] sm:$0xff] %v394
                %v396 = vld [vmem:[%s186 + $0xd00] sm:$0xff]
                %397 = vst [vmem:[%s187 + $0x340] sm:$0xff] %v396
                %v398 = vld [vmem:[%s186 + $0xd08] sm:$0xff]
                %399 = vst [vmem:[%s187 + $0x348] sm:$0xff] %v398
                %v400 = vld [vmem:[%s186 + $0xd10] sm:$0xff]
                %401 = vst [vmem:[%s187 + $0x350] sm:$0xff] %v400
                %v402 = vld [vmem:[%s186 + $0xd18] sm:$0xff]
                %403 = vst [vmem:[%s187 + $0x358] sm:$0xff] %v402
                %v404 = vld [vmem:[%s186 + $0xd20] sm:$0xff]
                %405 = vst [vmem:[%s187 + $0x360] sm:$0xff] %v404
                %v406 = vld [vmem:[%s186 + $0xd28] sm:$0xff]
                %407 = vst [vmem:[%s187 + $0x368] sm:$0xff] %v406
                %v408 = vld [vmem:[%s186 + $0xd30] sm:$0xff]
                %409 = vst [vmem:[%s187 + $0x370] sm:$0xff] %v408
                %v410 = vld [vmem:[%s186 + $0xd38] sm:$0xff]
                %411 = vst [vmem:[%s187 + $0x378] sm:$0xff] %v410
                %v412 = vld [vmem:[%s186 + $0xe00] sm:$0xff]
                %413 = vst [vmem:[%s187 + $0x380] sm:$0xff] %v412
                %v414 = vld [vmem:[%s186 + $0xe08] sm:$0xff]
                %415 = vst [vmem:[%s187 + $0x388] sm:$0xff] %v414
                %v416 = vld [vmem:[%s186 + $0xe10] sm:$0xff]
                %417 = vst [vmem:[%s187 + $0x390] sm:$0xff] %v416
                %v418 = vld [vmem:[%s186 + $0xe18] sm:$0xff]
                %419 = vst [vmem:[%s187 + $0x398] sm:$0xff] %v418
                %v420 = vld [vmem:[%s186 + $0xe20] sm:$0xff]
                %421 = vst [vmem:[%s187 + $0x3a0] sm:$0xff] %v420
                %v422 = vld [vmem:[%s186 + $0xe28] sm:$0xff]
                %423 = vst [vmem:[%s187 + $0x3a8] sm:$0xff] %v422
                %v424 = vld [vmem:[%s186 + $0xe30] sm:$0xff]
                %425 = vst [vmem:[%s187 + $0x3b0] sm:$0xff] %v424
                %v426 = vld [vmem:[%s186 + $0xe38] sm:$0xff]
                %427 = vst [vmem:[%s187 + $0x3b8] sm:$0xff] %v426
                %v428 = vld [vmem:[%s186 + $0xf00] sm:$0xff]
                %429 = vst [vmem:[%s187 + $0x3c0] sm:$0xff] %v428
                %v430 = vld [vmem:[%s186 + $0xf08] sm:$0xff]
                %431 = vst [vmem:[%s187 + $0x3c8] sm:$0xff] %v430
                %v432 = vld [vmem:[%s186 + $0xf10] sm:$0xff]
                %433 = vst [vmem:[%s187 + $0x3d0] sm:$0xff] %v432
                %v434 = vld [vmem:[%s186 + $0xf18] sm:$0xff]
                %435 = vst [vmem:[%s187 + $0x3d8] sm:$0xff] %v434
                %v436 = vld [vmem:[%s186 + $0xf20] sm:$0xff]
                %437 = vst [vmem:[%s187 + $0x3e0] sm:$0xff] %v436
                %v438 = vld [vmem:[%s186 + $0xf28] sm:$0xff]
                %439 = vst [vmem:[%s187 + $0x3e8] sm:$0xff] %v438
                %v440 = vld [vmem:[%s186 + $0xf30] sm:$0xff]
                %441 = vst [vmem:[%s187 + $0x3f0] sm:$0xff] %v440
                %v442 = vld [vmem:[%s186 + $0xf38] sm:$0xff]
                %443 = vst [vmem:[%s187 + $0x3f8] sm:$0xff] %v442
              $region37: #{tpu_custom_call.1} parent=31 // loop_footer
                %s185 = sadd.s32 1, %s181
              $region38: #{tpu_custom_call.1} parent=31 // loop_footer_branch
                %180 = sbr.rel target = $region34
              $region39: #{tpu_custom_call.1} parent=31 // loop_exit
                _
            $region32: #{tpu_custom_call.1} parent=27 // pred_fallthru
              _
            // Predicated region
            $region40: #{tpu_custom_call.1} parent=27 // pred_check
              _
            $region41: #{tpu_custom_call.1} parent=27 // pred_check_branch
              %445 = sbr.rel target = $region43
            $region42: #{tpu_custom_call.1} parent=27 // pred_region
              _
            $region43: #{tpu_custom_call.1} parent=27 // pred_fallthru
              _
          $region28: #{tpu_custom_call.1} parent=23 // pred_fallthru
            _
          %446 = vnop
        $region24: #{tpu_custom_call.1} parent=19 // pred_fallthru
          _
        // Predicated region
        $region44: #{tpu_custom_call.1} parent=19 // pred_check
          %p447 = pneg %p78
        $region45: #{tpu_custom_call.1} parent=19 // pred_check_branch
          %449 = sbr.rel (%p447) target = $region47
        $region46: #{tpu_custom_call.1} parent=19 // pred_region
          %s450 = smul.u32 256, %s18
          %p451 = scmp.lt.s32.totalorder %s450, 1023
          %s452 = scalar_select %p451, %s450, 1023
          %p453 = scmp.lt.s32.totalorder %s17, 0
          %s454 = scalar_select %p453, %s17, 0
          %s455 = sadd.s32 %s454, %s452
          %s456 = smul.addr %s455, 4
          %s457 = scalar_lea.vmem %s1, %s456
          %s458 = smul.u32 256, %s18
        $region47: #{tpu_custom_call.1} parent=19 // pred_fallthru
          _
      $region20: #{tpu_custom_call.1} parent=5 // pred_fallthru
        _
      %p459 = scmp.le.s32.totalorder 1, %s9
      %p460 = scmp.lt.s32.totalorder %s9, 5
      %p461 = pnand %p459, %p460
      %p462 = pneg %p461
      // Predicated region
      $region48: #{tpu_custom_call.1} parent=5 // pred_check
        _
      $region49: #{tpu_custom_call.1} parent=5 // pred_check_branch
        %464 = sbr.rel (%p461) target = $region51
      $region50: #{tpu_custom_call.1} parent=5 // pred_region
        %s465 = ssub.s32 %s9, 1
        %s466 = sand.u32 %s43, 1
        %s467 = sand.u32 %s43, 1
        %s468 = smul.addr %s467, 1024
        %s469 = scalar_lea.vmem [#allocation3], %s468
        // Predicated region
        $region52: #{tpu_custom_call.1} parent=50 // pred_check
          %p470 = pneg %p56
        $region53: #{tpu_custom_call.1} parent=50 // pred_check_branch
          %472 = sbr.rel (%p470) target = $region55
        $region54: #{tpu_custom_call.1} parent=50 // pred_region
          _
        $region55: #{tpu_custom_call.1} parent=50 // pred_fallthru
          _
        %s473 = sand.u32 %s43, 1
        %s474 = sand.u32 %s43, 1
        %s475 = smul.addr %s474, 1024
        %s476 = scalar_lea.vmem [#allocation3], %s475
        %p477 = pneg %p56
        %p478 = pneg %p53
        %s479 = smul.u32 256, %s21
        %p480 = scmp.lt.s32.totalorder %s479, 1023
        %s481 = scalar_select %p480, %s479, 1023
        %p482 = scmp.lt.s32.totalorder %s20, 0
        %s483 = scalar_select %p482, %s20, 0
        %s484 = sadd.s32 %s483, %s481
        %s485 = smul.addr %s484, 4
        %s486 = scalar_lea.vmem %s1, %s485
        %p487 = pneg %p84
        %p488 = pneg %p81
        %p489 = scmp.lt.s32.totalorder %s20, 0
        %s490 = scalar_select %p489, %s20, 0
        %s491 = scalar_lea.vmem %s2, %s490
        %p492 = pneg %p110
        %p493 = pneg %p107
        %p494 = pneg %p138
        %p495 = pneg %p135
        %s496 = smul.u32 16, %s19
        %p497 = scmp.lt.s32.totalorder %s496, 15
        %s498 = scalar_select %p497, %s496, 15
        %p499 = scmp.lt.s32.totalorder %s20, 0
        %s500 = scalar_select %p499, %s20, 0
        %s501 = sadd.s32 %s500, %s498
        %s502 = smul.addr %s501, 4
        %s503 = scalar_lea.vmem %s3, %s502
        %s504 = smul.u32 16, %s19
        %s505 = smul.u32 16, %s21
        %s506 = smul.u32 256, %s21
        %p507 = scmp.lt.s32.totalorder %s506, 1023
        %s508 = scalar_select %p507, %s506, 1023
        %p509 = scmp.lt.s32.totalorder %s20, 0
        %s510 = scalar_select %p509, %s20, 0
        %s511 = sadd.s32 %s510, %s508
        %s512 = smul.addr %s511, 4
        %s513 = scalar_lea.vmem %s1, %s512
        %s514 = smul.u32 256, %s21
        %p515 = scmp.lt.s32.totalorder %s20, 0
        %s516 = scalar_select %p515, %s20, 0
        %s517 = scalar_lea.vmem %s2, %s516
        %s518 = smul.u32 16, %s19
        %p519 = scmp.lt.s32.totalorder %s518, 15
        %s520 = scalar_select %p519, %s518, 15
        %p521 = scmp.lt.s32.totalorder %s20, 0
        %s522 = scalar_select %p521, %s20, 0
        %s523 = sadd.s32 %s522, %s520
        %s524 = smul.addr %s523, 4
        %s525 = scalar_lea.vmem %s3, %s524
        %s526 = smul.u32 16, %s19
        %p528 = scmp.eq.s32.totalorder %s21, 0
        // Predicated region
        $region56: #{tpu_custom_call.1} parent=50 // pred_check
          %p529 = pneg %p528
        $region57: #{tpu_custom_call.1} parent=50 // pred_check_branch
          %531 = sbr.rel (%p529) target = $region59
        $region58: #{tpu_custom_call.1} parent=50 // pred_region
          %vm532 = vcmask 523264
          %533 = vst.msk [vmem:[#allocation2] sm:$0xff] %vm532, 0.0
          %534 = vst.msk [vmem:[#allocation2 + $0x8] sm:$0xff] %vm532, 0.0
          %535 = vst.msk [vmem:[#allocation2 + $0x10] sm:$0xff] %vm532, 0.0
          %536 = vst.msk [vmem:[#allocation2 + $0x18] sm:$0xff] %vm532, 0.0
          %537 = vst.msk [vmem:[#allocation2 + $0x20] sm:$0xff] %vm532, 0.0
          %538 = vst.msk [vmem:[#allocation2 + $0x28] sm:$0xff] %vm532, 0.0
          %539 = vst.msk [vmem:[#allocation2 + $0x30] sm:$0xff] %vm532, 0.0
          %540 = vst.msk [vmem:[#allocation2 + $0x38] sm:$0xff] %vm532, 0.0
          %541 = vst.msk [vmem:[#allocation2 + $0x40] sm:$0xff] %vm532, 0.0
          %542 = vst.msk [vmem:[#allocation2 + $0x48] sm:$0xff] %vm532, 0.0
          %543 = vst.msk [vmem:[#allocation2 + $0x50] sm:$0xff] %vm532, 0.0
          %544 = vst.msk [vmem:[#allocation2 + $0x58] sm:$0xff] %vm532, 0.0
          %545 = vst.msk [vmem:[#allocation2 + $0x60] sm:$0xff] %vm532, 0.0
          %546 = vst.msk [vmem:[#allocation2 + $0x68] sm:$0xff] %vm532, 0.0
          %547 = vst.msk [vmem:[#allocation2 + $0x70] sm:$0xff] %vm532, 0.0
          %548 = vst.msk [vmem:[#allocation2 + $0x78] sm:$0xff] %vm532, 0.0
        $region59: #{tpu_custom_call.1} parent=50 // pred_fallthru
          _
        %v549 = vld [vmem:[#allocation2] sm:$0xff]
        %v550 = vld [vmem:[#allocation2 + $0x8] sm:$0xff]
        %v551 = vld [vmem:[#allocation2 + $0x10] sm:$0xff]
        %v552 = vld [vmem:[#allocation2 + $0x18] sm:$0xff]
        %v553 = vld [vmem:[#allocation2 + $0x20] sm:$0xff]
        %v554 = vld [vmem:[#allocation2 + $0x28] sm:$0xff]
        %v555 = vld [vmem:[#allocation2 + $0x30] sm:$0xff]
        %v556 = vld [vmem:[#allocation2 + $0x38] sm:$0xff]
        %v557 = vld [vmem:[#allocation2 + $0x40] sm:$0xff]
        %v558 = vld [vmem:[#allocation2 + $0x48] sm:$0xff]
        %v559 = vld [vmem:[#allocation2 + $0x50] sm:$0xff]
        %v560 = vld [vmem:[#allocation2 + $0x58] sm:$0xff]
        %v561 = vld [vmem:[#allocation2 + $0x60] sm:$0xff]
        %v562 = vld [vmem:[#allocation2 + $0x68] sm:$0xff]
        %v563 = vld [vmem:[#allocation2 + $0x70] sm:$0xff]
        %v564 = vld [vmem:[#allocation2 + $0x78] sm:$0xff]
        %v565 = vld [vmem:[%s469] sm:$0xff]
        %v566 = vld [vmem:[%s469 + $0x8] sm:$0xff]
        %v567 = vld [vmem:[%s469 + $0x10] sm:$0xff]
        %v568 = vld [vmem:[%s469 + $0x18] sm:$0xff]
        %v569 = vld [vmem:[%s469 + $0x20] sm:$0xff]
        %v570 = vld [vmem:[%s469 + $0x28] sm:$0xff]
        %v571 = vld [vmem:[%s469 + $0x30] sm:$0xff]
        %v572 = vld [vmem:[%s469 + $0x38] sm:$0xff]
        %v573 = vld [vmem:[%s469 + $0x40] sm:$0xff]
        %v574 = vld [vmem:[%s469 + $0x48] sm:$0xff]
        %v575 = vld [vmem:[%s469 + $0x50] sm:$0xff]
        %v576 = vld [vmem:[%s469 + $0x58] sm:$0xff]
        %v577 = vld [vmem:[%s469 + $0x60] sm:$0xff]
        %v578 = vld [vmem:[%s469 + $0x68] sm:$0xff]
        %v579 = vld [vmem:[%s469 + $0x70] sm:$0xff]
        %v580 = vld [vmem:[%s469 + $0x78] sm:$0xff]
        %v581 = vld [vmem:[%s469 + $0x80] sm:$0xff]
        %v582 = vld [vmem:[%s469 + $0x88] sm:$0xff]
        %v583 = vld [vmem:[%s469 + $0x90] sm:$0xff]
        %v584 = vld [vmem:[%s469 + $0x98] sm:$0xff]
        %v585 = vld [vmem:[%s469 + $0xa0] sm:$0xff]
        %v586 = vld [vmem:[%s469 + $0xa8] sm:$0xff]
        %v587 = vld [vmem:[%s469 + $0xb0] sm:$0xff]
        %v588 = vld [vmem:[%s469 + $0xb8] sm:$0xff]
        %v589 = vld [vmem:[%s469 + $0xc0] sm:$0xff]
        %v590 = vld [vmem:[%s469 + $0xc8] sm:$0xff]
        %v591 = vld [vmem:[%s469 + $0xd0] sm:$0xff]
        %v592 = vld [vmem:[%s469 + $0xd8] sm:$0xff]
        %v593 = vld [vmem:[%s469 + $0xe0] sm:$0xff]
        %v594 = vld [vmem:[%s469 + $0xe8] sm:$0xff]
        %v595 = vld [vmem:[%s469 + $0xf0] sm:$0xff]
        %v596 = vld [vmem:[%s469 + $0xf8] sm:$0xff]
        %v597 = vld [vmem:[%s469 + $0x100] sm:$0xff]
        %v598 = vld [vmem:[%s469 + $0x108] sm:$0xff]
        %v599 = vld [vmem:[%s469 + $0x110] sm:$0xff]
        %v600 = vld [vmem:[%s469 + $0x118] sm:$0xff]
        %v601 = vld [vmem:[%s469 + $0x120] sm:$0xff]
        %v602 = vld [vmem:[%s469 + $0x128] sm:$0xff]
        %v603 = vld [vmem:[%s469 + $0x130] sm:$0xff]
        %v604 = vld [vmem:[%s469 + $0x138] sm:$0xff]
        %v605 = vld [vmem:[%s469 + $0x140] sm:$0xff]
        %v606 = vld [vmem:[%s469 + $0x148] sm:$0xff]
        %v607 = vld [vmem:[%s469 + $0x150] sm:$0xff]
        %v608 = vld [vmem:[%s469 + $0x158] sm:$0xff]
        %v609 = vld [vmem:[%s469 + $0x160] sm:$0xff]
        %v610 = vld [vmem:[%s469 + $0x168] sm:$0xff]
        %v611 = vld [vmem:[%s469 + $0x170] sm:$0xff]
        %v612 = vld [vmem:[%s469 + $0x178] sm:$0xff]
        %v613 = vld [vmem:[%s469 + $0x180] sm:$0xff]
        %v614 = vld [vmem:[%s469 + $0x188] sm:$0xff]
        %v615 = vld [vmem:[%s469 + $0x190] sm:$0xff]
        %v616 = vld [vmem:[%s469 + $0x198] sm:$0xff]
        %v617 = vld [vmem:[%s469 + $0x1a0] sm:$0xff]
        %v618 = vld [vmem:[%s469 + $0x1a8] sm:$0xff]
        %v619 = vld [vmem:[%s469 + $0x1b0] sm:$0xff]
        %v620 = vld [vmem:[%s469 + $0x1b8] sm:$0xff]
        %v621 = vld [vmem:[%s469 + $0x1c0] sm:$0xff]
        %v622 = vld [vmem:[%s469 + $0x1c8] sm:$0xff]
        %v623 = vld [vmem:[%s469 + $0x1d0] sm:$0xff]
        %v624 = vld [vmem:[%s469 + $0x1d8] sm:$0xff]
        %v625 = vld [vmem:[%s469 + $0x1e0] sm:$0xff]
        %v626 = vld [vmem:[%s469 + $0x1e8] sm:$0xff]
        %v627 = vld [vmem:[%s469 + $0x1f0] sm:$0xff]
        %v628 = vld [vmem:[%s469 + $0x1f8] sm:$0xff]
        %v629 = vld [vmem:[%s469 + $0x200] sm:$0xff]
        %v630 = vld [vmem:[%s469 + $0x208] sm:$0xff]
        %v631 = vld [vmem:[%s469 + $0x210] sm:$0xff]
        %v632 = vld [vmem:[%s469 + $0x218] sm:$0xff]
        %v633 = vld [vmem:[%s469 + $0x220] sm:$0xff]
        %v634 = vld [vmem:[%s469 + $0x228] sm:$0xff]
        %v635 = vld [vmem:[%s469 + $0x230] sm:$0xff]
        %v636 = vld [vmem:[%s469 + $0x238] sm:$0xff]
        %v637 = vld [vmem:[%s469 + $0x240] sm:$0xff]
        %v638 = vld [vmem:[%s469 + $0x248] sm:$0xff]
        %v639 = vld [vmem:[%s469 + $0x250] sm:$0xff]
        %v640 = vld [vmem:[%s469 + $0x258] sm:$0xff]
        %v641 = vld [vmem:[%s469 + $0x260] sm:$0xff]
        %v642 = vld [vmem:[%s469 + $0x268] sm:$0xff]
        %v643 = vld [vmem:[%s469 + $0x270] sm:$0xff]
        %v644 = vld [vmem:[%s469 + $0x278] sm:$0xff]
        %v645 = vld [vmem:[%s469 + $0x280] sm:$0xff]
        %v646 = vld [vmem:[%s469 + $0x288] sm:$0xff]
        %v647 = vld [vmem:[%s469 + $0x290] sm:$0xff]
        %v648 = vld [vmem:[%s469 + $0x298] sm:$0xff]
        %v649 = vld [vmem:[%s469 + $0x2a0] sm:$0xff]
        %v650 = vld [vmem:[%s469 + $0x2a8] sm:$0xff]
        %v651 = vld [vmem:[%s469 + $0x2b0] sm:$0xff]
        %v652 = vld [vmem:[%s469 + $0x2b8] sm:$0xff]
        %v653 = vld [vmem:[%s469 + $0x2c0] sm:$0xff]
        %v654 = vld [vmem:[%s469 + $0x2c8] sm:$0xff]
        %v655 = vld [vmem:[%s469 + $0x2d0] sm:$0xff]
        %v656 = vld [vmem:[%s469 + $0x2d8] sm:$0xff]
        %v657 = vld [vmem:[%s469 + $0x2e0] sm:$0xff]
        %v658 = vld [vmem:[%s469 + $0x2e8] sm:$0xff]
        %v659 = vld [vmem:[%s469 + $0x2f0] sm:$0xff]
        %v660 = vld [vmem:[%s469 + $0x2f8] sm:$0xff]
        %v661 = vld [vmem:[%s469 + $0x300] sm:$0xff]
        %v662 = vld [vmem:[%s469 + $0x308] sm:$0xff]
        %v663 = vld [vmem:[%s469 + $0x310] sm:$0xff]
        %v664 = vld [vmem:[%s469 + $0x318] sm:$0xff]
        %v665 = vld [vmem:[%s469 + $0x320] sm:$0xff]
        %v666 = vld [vmem:[%s469 + $0x328] sm:$0xff]
        %v667 = vld [vmem:[%s469 + $0x330] sm:$0xff]
        %v668 = vld [vmem:[%s469 + $0x338] sm:$0xff]
        %v669 = vld [vmem:[%s469 + $0x340] sm:$0xff]
        %v670 = vld [vmem:[%s469 + $0x348] sm:$0xff]
        %v671 = vld [vmem:[%s469 + $0x350] sm:$0xff]
        %v672 = vld [vmem:[%s469 + $0x358] sm:$0xff]
        %v673 = vld [vmem:[%s469 + $0x360] sm:$0xff]
        %v674 = vld [vmem:[%s469 + $0x368] sm:$0xff]
        %v675 = vld [vmem:[%s469 + $0x370] sm:$0xff]
        %v676 = vld [vmem:[%s469 + $0x378] sm:$0xff]
        %v677 = vld [vmem:[%s469 + $0x380] sm:$0xff]
        %v678 = vld [vmem:[%s469 + $0x388] sm:$0xff]
        %v679 = vld [vmem:[%s469 + $0x390] sm:$0xff]
        %v680 = vld [vmem:[%s469 + $0x398] sm:$0xff]
        %v681 = vld [vmem:[%s469 + $0x3a0] sm:$0xff]
        %v682 = vld [vmem:[%s469 + $0x3a8] sm:$0xff]
        %v683 = vld [vmem:[%s469 + $0x3b0] sm:$0xff]
        %v684 = vld [vmem:[%s469 + $0x3b8] sm:$0xff]
        %v685 = vld [vmem:[%s469 + $0x3c0] sm:$0xff]
        %v686 = vld [vmem:[%s469 + $0x3c8] sm:$0xff]
        %v687 = vld [vmem:[%s469 + $0x3d0] sm:$0xff]
        %v688 = vld [vmem:[%s469 + $0x3d8] sm:$0xff]
        %v689 = vld [vmem:[%s469 + $0x3e0] sm:$0xff]
        %v690 = vld [vmem:[%s469 + $0x3e8] sm:$0xff]
        %v691 = vld [vmem:[%s469 + $0x3f0] sm:$0xff]
        %v692 = vld [vmem:[%s469 + $0x3f8] sm:$0xff]
        %v693 = vld [vmem:[%s513] sm:$0xf]
        %v694 = vld [vmem:[%s513 + $0x4] sm:$0xf]
        %v695 = vld [vmem:[%s513 + $0x8] sm:$0xf]
        %v696 = vld [vmem:[%s513 + $0xc] sm:$0xf]
        %v697 = vld [vmem:[%s513 + $0x10] sm:$0xf]
        %v698 = vld [vmem:[%s513 + $0x14] sm:$0xf]
        %v699 = vld [vmem:[%s513 + $0x18] sm:$0xf]
        %v700 = vld [vmem:[%s513 + $0x1c] sm:$0xf]
        %v701 = vld [vmem:[%s513 + $0x20] sm:$0xf]
        %v702 = vld [vmem:[%s513 + $0x24] sm:$0xf]
        %v703 = vld [vmem:[%s513 + $0x28] sm:$0xf]
        %v704 = vld [vmem:[%s513 + $0x2c] sm:$0xf]
        %v705 = vld [vmem:[%s513 + $0x30] sm:$0xf]
        %v706 = vld [vmem:[%s513 + $0x34] sm:$0xf]
        %v707 = vld [vmem:[%s513 + $0x38] sm:$0xf]
        %v708 = vld [vmem:[%s513 + $0x3c] sm:$0xf]
        %v709 = vld [vmem:[%s513 + $0x40] sm:$0xf]
        %v710 = vld [vmem:[%s513 + $0x44] sm:$0xf]
        %v711 = vld [vmem:[%s513 + $0x48] sm:$0xf]
        %v712 = vld [vmem:[%s513 + $0x4c] sm:$0xf]
        %v713 = vld [vmem:[%s513 + $0x50] sm:$0xf]
        %v714 = vld [vmem:[%s513 + $0x54] sm:$0xf]
        %v715 = vld [vmem:[%s513 + $0x58] sm:$0xf]
        %v716 = vld [vmem:[%s513 + $0x5c] sm:$0xf]
        %v717 = vld [vmem:[%s513 + $0x60] sm:$0xf]
        %v718 = vld [vmem:[%s513 + $0x64] sm:$0xf]
        %v719 = vld [vmem:[%s513 + $0x68] sm:$0xf]
        %v720 = vld [vmem:[%s513 + $0x6c] sm:$0xf]
        %v721 = vld [vmem:[%s513 + $0x70] sm:$0xf]
        %v722 = vld [vmem:[%s513 + $0x74] sm:$0xf]
        %v723 = vld [vmem:[%s513 + $0x78] sm:$0xf]
        %v724 = vld [vmem:[%s513 + $0x7c] sm:$0xf]
        %v725 = vld [vmem:[%s513 + $0x80] sm:$0xf]
        %v726 = vld [vmem:[%s513 + $0x84] sm:$0xf]
        %v727 = vld [vmem:[%s513 + $0x88] sm:$0xf]
        %v728 = vld [vmem:[%s513 + $0x8c] sm:$0xf]
        %v729 = vld [vmem:[%s513 + $0x90] sm:$0xf]
        %v730 = vld [vmem:[%s513 + $0x94] sm:$0xf]
        %v731 = vld [vmem:[%s513 + $0x98] sm:$0xf]
        %v732 = vld [vmem:[%s513 + $0x9c] sm:$0xf]
        %v733 = vld [vmem:[%s513 + $0xa0] sm:$0xf]
        %v734 = vld [vmem:[%s513 + $0xa4] sm:$0xf]
        %v735 = vld [vmem:[%s513 + $0xa8] sm:$0xf]
        %v736 = vld [vmem:[%s513 + $0xac] sm:$0xf]
        %v737 = vld [vmem:[%s513 + $0xb0] sm:$0xf]
        %v738 = vld [vmem:[%s513 + $0xb4] sm:$0xf]
        %v739 = vld [vmem:[%s513 + $0xb8] sm:$0xf]
        %v740 = vld [vmem:[%s513 + $0xbc] sm:$0xf]
        %v741 = vld [vmem:[%s513 + $0xc0] sm:$0xf]
        %v742 = vld [vmem:[%s513 + $0xc4] sm:$0xf]
        %v743 = vld [vmem:[%s513 + $0xc8] sm:$0xf]
        %v744 = vld [vmem:[%s513 + $0xcc] sm:$0xf]
        %v745 = vld [vmem:[%s513 + $0xd0] sm:$0xf]
        %v746 = vld [vmem:[%s513 + $0xd4] sm:$0xf]
        %v747 = vld [vmem:[%s513 + $0xd8] sm:$0xf]
        %v748 = vld [vmem:[%s513 + $0xdc] sm:$0xf]
        %v749 = vld [vmem:[%s513 + $0xe0] sm:$0xf]
        %v750 = vld [vmem:[%s513 + $0xe4] sm:$0xf]
        %v751 = vld [vmem:[%s513 + $0xe8] sm:$0xf]
        %v752 = vld [vmem:[%s513 + $0xec] sm:$0xf]
        %v753 = vld [vmem:[%s513 + $0xf0] sm:$0xf]
        %v754 = vld [vmem:[%s513 + $0xf4] sm:$0xf]
        %v755 = vld [vmem:[%s513 + $0xf8] sm:$0xf]
        %v756 = vld [vmem:[%s513 + $0xfc] sm:$0xf]
        %v757 = vld [vmem:[%s513 + $0x100] sm:$0xf]
        %v758 = vld [vmem:[%s513 + $0x104] sm:$0xf]
        %v759 = vld [vmem:[%s513 + $0x108] sm:$0xf]
        %v760 = vld [vmem:[%s513 + $0x10c] sm:$0xf]
        %v761 = vld [vmem:[%s513 + $0x110] sm:$0xf]
        %v762 = vld [vmem:[%s513 + $0x114] sm:$0xf]
        %v763 = vld [vmem:[%s513 + $0x118] sm:$0xf]
        %v764 = vld [vmem:[%s513 + $0x11c] sm:$0xf]
        %v765 = vld [vmem:[%s513 + $0x120] sm:$0xf]
        %v766 = vld [vmem:[%s513 + $0x124] sm:$0xf]
        %v767 = vld [vmem:[%s513 + $0x128] sm:$0xf]
        %v768 = vld [vmem:[%s513 + $0x12c] sm:$0xf]
        %v769 = vld [vmem:[%s513 + $0x130] sm:$0xf]
        %v770 = vld [vmem:[%s513 + $0x134] sm:$0xf]
        %v771 = vld [vmem:[%s513 + $0x138] sm:$0xf]
        %v772 = vld [vmem:[%s513 + $0x13c] sm:$0xf]
        %v773 = vld [vmem:[%s513 + $0x140] sm:$0xf]
        %v774 = vld [vmem:[%s513 + $0x144] sm:$0xf]
        %v775 = vld [vmem:[%s513 + $0x148] sm:$0xf]
        %v776 = vld [vmem:[%s513 + $0x14c] sm:$0xf]
        %v777 = vld [vmem:[%s513 + $0x150] sm:$0xf]
        %v778 = vld [vmem:[%s513 + $0x154] sm:$0xf]
        %v779 = vld [vmem:[%s513 + $0x158] sm:$0xf]
        %v780 = vld [vmem:[%s513 + $0x15c] sm:$0xf]
        %v781 = vld [vmem:[%s513 + $0x160] sm:$0xf]
        %v782 = vld [vmem:[%s513 + $0x164] sm:$0xf]
        %v783 = vld [vmem:[%s513 + $0x168] sm:$0xf]
        %v784 = vld [vmem:[%s513 + $0x16c] sm:$0xf]
        %v785 = vld [vmem:[%s513 + $0x170] sm:$0xf]
        %v786 = vld [vmem:[%s513 + $0x174] sm:$0xf]
        %v787 = vld [vmem:[%s513 + $0x178] sm:$0xf]
        %v788 = vld [vmem:[%s513 + $0x17c] sm:$0xf]
        %v789 = vld [vmem:[%s513 + $0x180] sm:$0xf]
        %v790 = vld [vmem:[%s513 + $0x184] sm:$0xf]
        %v791 = vld [vmem:[%s513 + $0x188] sm:$0xf]
        %v792 = vld [vmem:[%s513 + $0x18c] sm:$0xf]
        %v793 = vld [vmem:[%s513 + $0x190] sm:$0xf]
        %v794 = vld [vmem:[%s513 + $0x194] sm:$0xf]
        %v795 = vld [vmem:[%s513 + $0x198] sm:$0xf]
        %v796 = vld [vmem:[%s513 + $0x19c] sm:$0xf]
        %v797 = vld [vmem:[%s513 + $0x1a0] sm:$0xf]
        %v798 = vld [vmem:[%s513 + $0x1a4] sm:$0xf]
        %v799 = vld [vmem:[%s513 + $0x1a8] sm:$0xf]
        %v800 = vld [vmem:[%s513 + $0x1ac] sm:$0xf]
        %v801 = vld [vmem:[%s513 + $0x1b0] sm:$0xf]
        %v802 = vld [vmem:[%s513 + $0x1b4] sm:$0xf]
        %v803 = vld [vmem:[%s513 + $0x1b8] sm:$0xf]
        %v804 = vld [vmem:[%s513 + $0x1bc] sm:$0xf]
        %v805 = vld [vmem:[%s513 + $0x1c0] sm:$0xf]
        %v806 = vld [vmem:[%s513 + $0x1c4] sm:$0xf]
        %v807 = vld [vmem:[%s513 + $0x1c8] sm:$0xf]
        %v808 = vld [vmem:[%s513 + $0x1cc] sm:$0xf]
        %v809 = vld [vmem:[%s513 + $0x1d0] sm:$0xf]
        %v810 = vld [vmem:[%s513 + $0x1d4] sm:$0xf]
        %v811 = vld [vmem:[%s513 + $0x1d8] sm:$0xf]
        %v812 = vld [vmem:[%s513 + $0x1dc] sm:$0xf]
        %v813 = vld [vmem:[%s513 + $0x1e0] sm:$0xf]
        %v814 = vld [vmem:[%s513 + $0x1e4] sm:$0xf]
        %v815 = vld [vmem:[%s513 + $0x1e8] sm:$0xf]
        %v816 = vld [vmem:[%s513 + $0x1ec] sm:$0xf]
        %v817 = vld [vmem:[%s513 + $0x1f0] sm:$0xf]
        %v818 = vld [vmem:[%s513 + $0x1f4] sm:$0xf]
        %v819 = vld [vmem:[%s513 + $0x1f8] sm:$0xf]
        %v820 = vld [vmem:[%s513 + $0x1fc] sm:$0xf]
        %v821 = vld [vmem:[%s513 + $0x200] sm:$0xf]
        %v822 = vld [vmem:[%s513 + $0x204] sm:$0xf]
        %v823 = vld [vmem:[%s513 + $0x208] sm:$0xf]
        %v824 = vld [vmem:[%s513 + $0x20c] sm:$0xf]
        %v825 = vld [vmem:[%s513 + $0x210] sm:$0xf]
        %v826 = vld [vmem:[%s513 + $0x214] sm:$0xf]
        %v827 = vld [vmem:[%s513 + $0x218] sm:$0xf]
        %v828 = vld [vmem:[%s513 + $0x21c] sm:$0xf]
        %v829 = vld [vmem:[%s513 + $0x220] sm:$0xf]
        %v830 = vld [vmem:[%s513 + $0x224] sm:$0xf]
        %v831 = vld [vmem:[%s513 + $0x228] sm:$0xf]
        %v832 = vld [vmem:[%s513 + $0x22c] sm:$0xf]
        %v833 = vld [vmem:[%s513 + $0x230] sm:$0xf]
        %v834 = vld [vmem:[%s513 + $0x234] sm:$0xf]
        %v835 = vld [vmem:[%s513 + $0x238] sm:$0xf]
        %v836 = vld [vmem:[%s513 + $0x23c] sm:$0xf]
        %v837 = vld [vmem:[%s513 + $0x240] sm:$0xf]
        %v838 = vld [vmem:[%s513 + $0x244] sm:$0xf]
        %v839 = vld [vmem:[%s513 + $0x248] sm:$0xf]
        %v840 = vld [vmem:[%s513 + $0x24c] sm:$0xf]
        %v841 = vld [vmem:[%s513 + $0x250] sm:$0xf]
        %v842 = vld [vmem:[%s513 + $0x254] sm:$0xf]
        %v843 = vld [vmem:[%s513 + $0x258] sm:$0xf]
        %v844 = vld [vmem:[%s513 + $0x25c] sm:$0xf]
        %v845 = vld [vmem:[%s513 + $0x260] sm:$0xf]
        %v846 = vld [vmem:[%s513 + $0x264] sm:$0xf]
        %v847 = vld [vmem:[%s513 + $0x268] sm:$0xf]
        %v848 = vld [vmem:[%s513 + $0x26c] sm:$0xf]
        %v849 = vld [vmem:[%s513 + $0x270] sm:$0xf]
        %v850 = vld [vmem:[%s513 + $0x274] sm:$0xf]
        %v851 = vld [vmem:[%s513 + $0x278] sm:$0xf]
        %v852 = vld [vmem:[%s513 + $0x27c] sm:$0xf]
        %v853 = vld [vmem:[%s513 + $0x280] sm:$0xf]
        %v854 = vld [vmem:[%s513 + $0x284] sm:$0xf]
        %v855 = vld [vmem:[%s513 + $0x288] sm:$0xf]
        %v856 = vld [vmem:[%s513 + $0x28c] sm:$0xf]
        %v857 = vld [vmem:[%s513 + $0x290] sm:$0xf]
        %v858 = vld [vmem:[%s513 + $0x294] sm:$0xf]
        %v859 = vld [vmem:[%s513 + $0x298] sm:$0xf]
        %v860 = vld [vmem:[%s513 + $0x29c] sm:$0xf]
        %v861 = vld [vmem:[%s513 + $0x2a0] sm:$0xf]
        %v862 = vld [vmem:[%s513 + $0x2a4] sm:$0xf]
        %v863 = vld [vmem:[%s513 + $0x2a8] sm:$0xf]
        %v864 = vld [vmem:[%s513 + $0x2ac] sm:$0xf]
        %v865 = vld [vmem:[%s513 + $0x2b0] sm:$0xf]
        %v866 = vld [vmem:[%s513 + $0x2b4] sm:$0xf]
        %v867 = vld [vmem:[%s513 + $0x2b8] sm:$0xf]
        %v868 = vld [vmem:[%s513 + $0x2bc] sm:$0xf]
        %v869 = vld [vmem:[%s513 + $0x2c0] sm:$0xf]
        %v870 = vld [vmem:[%s513 + $0x2c4] sm:$0xf]
        %v871 = vld [vmem:[%s513 + $0x2c8] sm:$0xf]
        %v872 = vld [vmem:[%s513 + $0x2cc] sm:$0xf]
        %v873 = vld [vmem:[%s513 + $0x2d0] sm:$0xf]
        %v874 = vld [vmem:[%s513 + $0x2d4] sm:$0xf]
        %v875 = vld [vmem:[%s513 + $0x2d8] sm:$0xf]
        %v876 = vld [vmem:[%s513 + $0x2dc] sm:$0xf]
        %v877 = vld [vmem:[%s513 + $0x2e0] sm:$0xf]
        %v878 = vld [vmem:[%s513 + $0x2e4] sm:$0xf]
        %v879 = vld [vmem:[%s513 + $0x2e8] sm:$0xf]
        %v880 = vld [vmem:[%s513 + $0x2ec] sm:$0xf]
        %v881 = vld [vmem:[%s513 + $0x2f0] sm:$0xf]
        %v882 = vld [vmem:[%s513 + $0x2f4] sm:$0xf]
        %v883 = vld [vmem:[%s513 + $0x2f8] sm:$0xf]
        %v884 = vld [vmem:[%s513 + $0x2fc] sm:$0xf]
        %v885 = vld [vmem:[%s513 + $0x300] sm:$0xf]
        %v886 = vld [vmem:[%s513 + $0x304] sm:$0xf]
        %v887 = vld [vmem:[%s513 + $0x308] sm:$0xf]
        %v888 = vld [vmem:[%s513 + $0x30c] sm:$0xf]
        %v889 = vld [vmem:[%s513 + $0x310] sm:$0xf]
        %v890 = vld [vmem:[%s513 + $0x314] sm:$0xf]
        %v891 = vld [vmem:[%s513 + $0x318] sm:$0xf]
        %v892 = vld [vmem:[%s513 + $0x31c] sm:$0xf]
        %v893 = vld [vmem:[%s513 + $0x320] sm:$0xf]
        %v894 = vld [vmem:[%s513 + $0x324] sm:$0xf]
        %v895 = vld [vmem:[%s513 + $0x328] sm:$0xf]
        %v896 = vld [vmem:[%s513 + $0x32c] sm:$0xf]
        %v897 = vld [vmem:[%s513 + $0x330] sm:$0xf]
        %v898 = vld [vmem:[%s513 + $0x334] sm:$0xf]
        %v899 = vld [vmem:[%s513 + $0x338] sm:$0xf]
        %v900 = vld [vmem:[%s513 + $0x33c] sm:$0xf]
        %v901 = vld [vmem:[%s513 + $0x340] sm:$0xf]
        %v902 = vld [vmem:[%s513 + $0x344] sm:$0xf]
        %v903 = vld [vmem:[%s513 + $0x348] sm:$0xf]
        %v904 = vld [vmem:[%s513 + $0x34c] sm:$0xf]
        %v905 = vld [vmem:[%s513 + $0x350] sm:$0xf]
        %v906 = vld [vmem:[%s513 + $0x354] sm:$0xf]
        %v907 = vld [vmem:[%s513 + $0x358] sm:$0xf]
        %v908 = vld [vmem:[%s513 + $0x35c] sm:$0xf]
        %v909 = vld [vmem:[%s513 + $0x360] sm:$0xf]
        %v910 = vld [vmem:[%s513 + $0x364] sm:$0xf]
        %v911 = vld [vmem:[%s513 + $0x368] sm:$0xf]
        %v912 = vld [vmem:[%s513 + $0x36c] sm:$0xf]
        %v913 = vld [vmem:[%s513 + $0x370] sm:$0xf]
        %v914 = vld [vmem:[%s513 + $0x374] sm:$0xf]
        %v915 = vld [vmem:[%s513 + $0x378] sm:$0xf]
        %v916 = vld [vmem:[%s513 + $0x37c] sm:$0xf]
        %v917 = vld [vmem:[%s513 + $0x380] sm:$0xf]
        %v918 = vld [vmem:[%s513 + $0x384] sm:$0xf]
        %v919 = vld [vmem:[%s513 + $0x388] sm:$0xf]
        %v920 = vld [vmem:[%s513 + $0x38c] sm:$0xf]
        %v921 = vld [vmem:[%s513 + $0x390] sm:$0xf]
        %v922 = vld [vmem:[%s513 + $0x394] sm:$0xf]
        %v923 = vld [vmem:[%s513 + $0x398] sm:$0xf]
        %v924 = vld [vmem:[%s513 + $0x39c] sm:$0xf]
        %v925 = vld [vmem:[%s513 + $0x3a0] sm:$0xf]
        %v926 = vld [vmem:[%s513 + $0x3a4] sm:$0xf]
        %v927 = vld [vmem:[%s513 + $0x3a8] sm:$0xf]
        %v928 = vld [vmem:[%s513 + $0x3ac] sm:$0xf]
        %v929 = vld [vmem:[%s513 + $0x3b0] sm:$0xf]
        %v930 = vld [vmem:[%s513 + $0x3b4] sm:$0xf]
        %v931 = vld [vmem:[%s513 + $0x3b8] sm:$0xf]
        %v932 = vld [vmem:[%s513 + $0x3bc] sm:$0xf]
        %v933 = vld [vmem:[%s513 + $0x3c0] sm:$0xf]
        %v934 = vld [vmem:[%s513 + $0x3c4] sm:$0xf]
        %v935 = vld [vmem:[%s513 + $0x3c8] sm:$0xf]
        %v936 = vld [vmem:[%s513 + $0x3cc] sm:$0xf]
        %v937 = vld [vmem:[%s513 + $0x3d0] sm:$0xf]
        %v938 = vld [vmem:[%s513 + $0x3d4] sm:$0xf]
        %v939 = vld [vmem:[%s513 + $0x3d8] sm:$0xf]
        %v940 = vld [vmem:[%s513 + $0x3dc] sm:$0xf]
        %v941 = vld [vmem:[%s513 + $0x3e0] sm:$0xf]
        %v942 = vld [vmem:[%s513 + $0x3e4] sm:$0xf]
        %v943 = vld [vmem:[%s513 + $0x3e8] sm:$0xf]
        %v944 = vld [vmem:[%s513 + $0x3ec] sm:$0xf]
        %v945 = vld [vmem:[%s513 + $0x3f0] sm:$0xf]
        %v946 = vld [vmem:[%s513 + $0x3f4] sm:$0xf]
        %v947 = vld [vmem:[%s513 + $0x3f8] sm:$0xf]
        %v948 = vld [vmem:[%s513 + $0x3fc] sm:$0xf]
        %v1077 = vunpack.c.l.b16 %v565
        %v1078 = vunpack.c.h.b16 %v565
        %v1079 = vunpack.c.l.b16 %v566
        %v1080 = vunpack.c.h.b16 %v566
        %v1081 = vunpack.c.l.b16 %v567
        %v1082 = vunpack.c.h.b16 %v567
        %v1083 = vunpack.c.l.b16 %v568
        %v1084 = vunpack.c.h.b16 %v568
        %v1085 = vunpack.c.l.b16 %v569
        %v1086 = vunpack.c.h.b16 %v569
        %v1087 = vunpack.c.l.b16 %v570
        %v1088 = vunpack.c.h.b16 %v570
        %v1089 = vunpack.c.l.b16 %v571
        %v1090 = vunpack.c.h.b16 %v571
        %v1091 = vunpack.c.l.b16 %v572
        %v1092 = vunpack.c.h.b16 %v572
        %v1093 = vunpack.c.l.b16 %v573
        %v1094 = vunpack.c.h.b16 %v573
        %v1095 = vunpack.c.l.b16 %v574
        %v1096 = vunpack.c.h.b16 %v574
        %v1097 = vunpack.c.l.b16 %v575
        %v1098 = vunpack.c.h.b16 %v575
        %v1099 = vunpack.c.l.b16 %v576
        %v1100 = vunpack.c.h.b16 %v576
        %v1101 = vunpack.c.l.b16 %v577
        %v1102 = vunpack.c.h.b16 %v577
        %v1103 = vunpack.c.l.b16 %v578
        %v1104 = vunpack.c.h.b16 %v578
        %v1105 = vunpack.c.l.b16 %v579
        %v1106 = vunpack.c.h.b16 %v579
        %v1107 = vunpack.c.l.b16 %v580
        %v1108 = vunpack.c.h.b16 %v580
        %v1109 = vunpack.c.l.b16 %v581
        %v1110 = vunpack.c.h.b16 %v581
        %v1111 = vunpack.c.l.b16 %v582
        %v1112 = vunpack.c.h.b16 %v582
        %v1113 = vunpack.c.l.b16 %v583
        %v1114 = vunpack.c.h.b16 %v583
        %v1115 = vunpack.c.l.b16 %v584
        %v1116 = vunpack.c.h.b16 %v584
        %v1117 = vunpack.c.l.b16 %v585
        %v1118 = vunpack.c.h.b16 %v585
        %v1119 = vunpack.c.l.b16 %v586
        %v1120 = vunpack.c.h.b16 %v586
        %v1121 = vunpack.c.l.b16 %v587
        %v1122 = vunpack.c.h.b16 %v587
        %v1123 = vunpack.c.l.b16 %v588
        %v1124 = vunpack.c.h.b16 %v588
        %v1125 = vunpack.c.l.b16 %v589
        %v1126 = vunpack.c.h.b16 %v589
        %v1127 = vunpack.c.l.b16 %v590
        %v1128 = vunpack.c.h.b16 %v590
        %v1129 = vunpack.c.l.b16 %v591
        %v1130 = vunpack.c.h.b16 %v591
        %v1131 = vunpack.c.l.b16 %v592
        %v1132 = vunpack.c.h.b16 %v592
        %v1133 = vunpack.c.l.b16 %v593
        %v1134 = vunpack.c.h.b16 %v593
        %v1135 = vunpack.c.l.b16 %v594
        %v1136 = vunpack.c.h.b16 %v594
        %v1137 = vunpack.c.l.b16 %v595
        %v1138 = vunpack.c.h.b16 %v595
        %v1139 = vunpack.c.l.b16 %v596
        %v1140 = vunpack.c.h.b16 %v596
        %v1141 = vunpack.c.l.b16 %v597
        %v1142 = vunpack.c.h.b16 %v597
        %v1143 = vunpack.c.l.b16 %v598
        %v1144 = vunpack.c.h.b16 %v598
        %v1145 = vunpack.c.l.b16 %v599
        %v1146 = vunpack.c.h.b16 %v599
        %v1147 = vunpack.c.l.b16 %v600
        %v1148 = vunpack.c.h.b16 %v600
        %v1149 = vunpack.c.l.b16 %v601
        %v1150 = vunpack.c.h.b16 %v601
        %v1151 = vunpack.c.l.b16 %v602
        %v1152 = vunpack.c.h.b16 %v602
        %v1153 = vunpack.c.l.b16 %v603
        %v1154 = vunpack.c.h.b16 %v603
        %v1155 = vunpack.c.l.b16 %v604
        %v1156 = vunpack.c.h.b16 %v604
        %v1157 = vunpack.c.l.b16 %v605
        %v1158 = vunpack.c.h.b16 %v605
        %v1159 = vunpack.c.l.b16 %v606
        %v1160 = vunpack.c.h.b16 %v606
        %v1161 = vunpack.c.l.b16 %v607
        %v1162 = vunpack.c.h.b16 %v607
        %v1163 = vunpack.c.l.b16 %v608
        %v1164 = vunpack.c.h.b16 %v608
        %v1165 = vunpack.c.l.b16 %v609
        %v1166 = vunpack.c.h.b16 %v609
        %v1167 = vunpack.c.l.b16 %v610
        %v1168 = vunpack.c.h.b16 %v610
        %v1169 = vunpack.c.l.b16 %v611
        %v1170 = vunpack.c.h.b16 %v611
        %v1171 = vunpack.c.l.b16 %v612
        %v1172 = vunpack.c.h.b16 %v612
        %v1173 = vunpack.c.l.b16 %v613
        %v1174 = vunpack.c.h.b16 %v613
        %v1175 = vunpack.c.l.b16 %v614
        %v1176 = vunpack.c.h.b16 %v614
        %v1177 = vunpack.c.l.b16 %v615
        %v1178 = vunpack.c.h.b16 %v615
        %v1179 = vunpack.c.l.b16 %v616
        %v1180 = vunpack.c.h.b16 %v616
        %v1181 = vunpack.c.l.b16 %v617
        %v1182 = vunpack.c.h.b16 %v617
        %v1183 = vunpack.c.l.b16 %v618
        %v1184 = vunpack.c.h.b16 %v618
        %v1185 = vunpack.c.l.b16 %v619
        %v1186 = vunpack.c.h.b16 %v619
        %v1187 = vunpack.c.l.b16 %v620
        %v1188 = vunpack.c.h.b16 %v620
        %v1189 = vunpack.c.l.b16 %v621
        %v1190 = vunpack.c.h.b16 %v621
        %v1191 = vunpack.c.l.b16 %v622
        %v1192 = vunpack.c.h.b16 %v622
        %v1193 = vunpack.c.l.b16 %v623
        %v1194 = vunpack.c.h.b16 %v623
        %v1195 = vunpack.c.l.b16 %v624
        %v1196 = vunpack.c.h.b16 %v624
        %v1197 = vunpack.c.l.b16 %v625
        %v1198 = vunpack.c.h.b16 %v625
        %v1199 = vunpack.c.l.b16 %v626
        %v1200 = vunpack.c.h.b16 %v626
        %v1201 = vunpack.c.l.b16 %v627
        %v1202 = vunpack.c.h.b16 %v627
        %v1203 = vunpack.c.l.b16 %v628
        %v1204 = vunpack.c.h.b16 %v628
        %v1205 = vunpack.c.l.b16 %v629
        %v1206 = vunpack.c.h.b16 %v629
        %v1207 = vunpack.c.l.b16 %v630
        %v1208 = vunpack.c.h.b16 %v630
        %v1209 = vunpack.c.l.b16 %v631
        %v1210 = vunpack.c.h.b16 %v631
        %v1211 = vunpack.c.l.b16 %v632
        %v1212 = vunpack.c.h.b16 %v632
        %v1213 = vunpack.c.l.b16 %v633
        %v1214 = vunpack.c.h.b16 %v633
        %v1215 = vunpack.c.l.b16 %v634
        %v1216 = vunpack.c.h.b16 %v634
        %v1217 = vunpack.c.l.b16 %v635
        %v1218 = vunpack.c.h.b16 %v635
        %v1219 = vunpack.c.l.b16 %v636
        %v1220 = vunpack.c.h.b16 %v636
        %v1221 = vunpack.c.l.b16 %v637
        %v1222 = vunpack.c.h.b16 %v637
        %v1223 = vunpack.c.l.b16 %v638
        %v1224 = vunpack.c.h.b16 %v638
        %v1225 = vunpack.c.l.b16 %v639
        %v1226 = vunpack.c.h.b16 %v639
        %v1227 = vunpack.c.l.b16 %v640
        %v1228 = vunpack.c.h.b16 %v640
        %v1229 = vunpack.c.l.b16 %v641
        %v1230 = vunpack.c.h.b16 %v641
        %v1231 = vunpack.c.l.b16 %v642
        %v1232 = vunpack.c.h.b16 %v642
        %v1233 = vunpack.c.l.b16 %v643
        %v1234 = vunpack.c.h.b16 %v643
        %v1235 = vunpack.c.l.b16 %v644
        %v1236 = vunpack.c.h.b16 %v644
        %v1237 = vunpack.c.l.b16 %v645
        %v1238 = vunpack.c.h.b16 %v645
        %v1239 = vunpack.c.l.b16 %v646
        %v1240 = vunpack.c.h.b16 %v646
        %v1241 = vunpack.c.l.b16 %v647
        %v1242 = vunpack.c.h.b16 %v647
        %v1243 = vunpack.c.l.b16 %v648
        %v1244 = vunpack.c.h.b16 %v648
        %v1245 = vunpack.c.l.b16 %v649
        %v1246 = vunpack.c.h.b16 %v649
        %v1247 = vunpack.c.l.b16 %v650
        %v1248 = vunpack.c.h.b16 %v650
        %v1249 = vunpack.c.l.b16 %v651
        %v1250 = vunpack.c.h.b16 %v651
        %v1251 = vunpack.c.l.b16 %v652
        %v1252 = vunpack.c.h.b16 %v652
        %v1253 = vunpack.c.l.b16 %v653
        %v1254 = vunpack.c.h.b16 %v653
        %v1255 = vunpack.c.l.b16 %v654
        %v1256 = vunpack.c.h.b16 %v654
        %v1257 = vunpack.c.l.b16 %v655
        %v1258 = vunpack.c.h.b16 %v655
        %v1259 = vunpack.c.l.b16 %v656
        %v1260 = vunpack.c.h.b16 %v656
        %v1261 = vunpack.c.l.b16 %v657
        %v1262 = vunpack.c.h.b16 %v657
        %v1263 = vunpack.c.l.b16 %v658
        %v1264 = vunpack.c.h.b16 %v658
        %v1265 = vunpack.c.l.b16 %v659
        %v1266 = vunpack.c.h.b16 %v659
        %v1267 = vunpack.c.l.b16 %v660
        %v1268 = vunpack.c.h.b16 %v660
        %v1269 = vunpack.c.l.b16 %v661
        %v1270 = vunpack.c.h.b16 %v661
        %v1271 = vunpack.c.l.b16 %v662
        %v1272 = vunpack.c.h.b16 %v662
        %v1273 = vunpack.c.l.b16 %v663
        %v1274 = vunpack.c.h.b16 %v663
        %v1275 = vunpack.c.l.b16 %v664
        %v1276 = vunpack.c.h.b16 %v664
        %v1277 = vunpack.c.l.b16 %v665
        %v1278 = vunpack.c.h.b16 %v665
        %v1279 = vunpack.c.l.b16 %v666
        %v1280 = vunpack.c.h.b16 %v666
        %v1281 = vunpack.c.l.b16 %v667
        %v1282 = vunpack.c.h.b16 %v667
        %v1283 = vunpack.c.l.b16 %v668
        %v1284 = vunpack.c.h.b16 %v668
        %v1285 = vunpack.c.l.b16 %v669
        %v1286 = vunpack.c.h.b16 %v669
        %v1287 = vunpack.c.l.b16 %v670
        %v1288 = vunpack.c.h.b16 %v670
        %v1289 = vunpack.c.l.b16 %v671
        %v1290 = vunpack.c.h.b16 %v671
        %v1291 = vunpack.c.l.b16 %v672
        %v1292 = vunpack.c.h.b16 %v672
        %v1293 = vunpack.c.l.b16 %v673
        %v1294 = vunpack.c.h.b16 %v673
        %v1295 = vunpack.c.l.b16 %v674
        %v1296 = vunpack.c.h.b16 %v674
        %v1297 = vunpack.c.l.b16 %v675
        %v1298 = vunpack.c.h.b16 %v675
        %v1299 = vunpack.c.l.b16 %v676
        %v1300 = vunpack.c.h.b16 %v676
        %v1301 = vunpack.c.l.b16 %v677
        %v1302 = vunpack.c.h.b16 %v677
        %v1303 = vunpack.c.l.b16 %v678
        %v1304 = vunpack.c.h.b16 %v678
        %v1305 = vunpack.c.l.b16 %v679
        %v1306 = vunpack.c.h.b16 %v679
        %v1307 = vunpack.c.l.b16 %v680
        %v1308 = vunpack.c.h.b16 %v680
        %v1309 = vunpack.c.l.b16 %v681
        %v1310 = vunpack.c.h.b16 %v681
        %v1311 = vunpack.c.l.b16 %v682
        %v1312 = vunpack.c.h.b16 %v682
        %v1313 = vunpack.c.l.b16 %v683
        %v1314 = vunpack.c.h.b16 %v683
        %v1315 = vunpack.c.l.b16 %v684
        %v1316 = vunpack.c.h.b16 %v684
        %v1317 = vunpack.c.l.b16 %v685
        %v1318 = vunpack.c.h.b16 %v685
        %v1319 = vunpack.c.l.b16 %v686
        %v1320 = vunpack.c.h.b16 %v686
        %v1321 = vunpack.c.l.b16 %v687
        %v1322 = vunpack.c.h.b16 %v687
        %v1323 = vunpack.c.l.b16 %v688
        %v1324 = vunpack.c.h.b16 %v688
        %v1325 = vunpack.c.l.b16 %v689
        %v1326 = vunpack.c.h.b16 %v689
        %v1327 = vunpack.c.l.b16 %v690
        %v1328 = vunpack.c.h.b16 %v690
        %v1329 = vunpack.c.l.b16 %v691
        %v1330 = vunpack.c.h.b16 %v691
        %v1331 = vunpack.c.l.b16 %v692
        %v1332 = vunpack.c.h.b16 %v692
        %v1333 = vpack.c.b16 %v1093, %v1077
        %v1334 = vpack.c.b16 %v1094, %v1078
        %v1335 = vpack.c.b16 %v1095, %v1079
        %v1336 = vpack.c.b16 %v1096, %v1080
        %v1337 = vpack.c.b16 %v1097, %v1081
        %v1338 = vpack.c.b16 %v1098, %v1082
        %v1339 = vpack.c.b16 %v1099, %v1083
        %v1340 = vpack.c.b16 %v1100, %v1084
        %v1341 = vpack.c.b16 %v1101, %v1085
        %v1342 = vpack.c.b16 %v1102, %v1086
        %v1343 = vpack.c.b16 %v1103, %v1087
        %v1344 = vpack.c.b16 %v1104, %v1088
        %v1345 = vpack.c.b16 %v1105, %v1089
        %v1346 = vpack.c.b16 %v1106, %v1090
        %v1347 = vpack.c.b16 %v1107, %v1091
        %v1348 = vpack.c.b16 %v1108, %v1092
        %v1349 = vpack.c.b16 %v1125, %v1109
        %v1350 = vpack.c.b16 %v1126, %v1110
        %v1351 = vpack.c.b16 %v1127, %v1111
        %v1352 = vpack.c.b16 %v1128, %v1112
        %v1353 = vpack.c.b16 %v1129, %v1113
        %v1354 = vpack.c.b16 %v1130, %v1114
        %v1355 = vpack.c.b16 %v1131, %v1115
        %v1356 = vpack.c.b16 %v1132, %v1116
        %v1357 = vpack.c.b16 %v1133, %v1117
        %v1358 = vpack.c.b16 %v1134, %v1118
        %v1359 = vpack.c.b16 %v1135, %v1119
        %v1360 = vpack.c.b16 %v1136, %v1120
        %v1361 = vpack.c.b16 %v1137, %v1121
        %v1362 = vpack.c.b16 %v1138, %v1122
        %v1363 = vpack.c.b16 %v1139, %v1123
        %v1364 = vpack.c.b16 %v1140, %v1124
        %v1365 = vpack.c.b16 %v1157, %v1141
        %v1366 = vpack.c.b16 %v1158, %v1142
        %v1367 = vpack.c.b16 %v1159, %v1143
        %v1368 = vpack.c.b16 %v1160, %v1144
        %v1369 = vpack.c.b16 %v1161, %v1145
        %v1370 = vpack.c.b16 %v1162, %v1146
        %v1371 = vpack.c.b16 %v1163, %v1147
        %v1372 = vpack.c.b16 %v1164, %v1148
        %v1373 = vpack.c.b16 %v1165, %v1149
        %v1374 = vpack.c.b16 %v1166, %v1150
        %v1375 = vpack.c.b16 %v1167, %v1151
        %v1376 = vpack.c.b16 %v1168, %v1152
        %v1377 = vpack.c.b16 %v1169, %v1153
        %v1378 = vpack.c.b16 %v1170, %v1154
        %v1379 = vpack.c.b16 %v1171, %v1155
        %v1380 = vpack.c.b16 %v1172, %v1156
        %v1381 = vpack.c.b16 %v1189, %v1173
        %v1382 = vpack.c.b16 %v1190, %v1174
        %v1383 = vpack.c.b16 %v1191, %v1175
        %v1384 = vpack.c.b16 %v1192, %v1176
        %v1385 = vpack.c.b16 %v1193, %v1177
        %v1386 = vpack.c.b16 %v1194, %v1178
        %v1387 = vpack.c.b16 %v1195, %v1179
        %v1388 = vpack.c.b16 %v1196, %v1180
        %v1389 = vpack.c.b16 %v1197, %v1181
        %v1390 = vpack.c.b16 %v1198, %v1182
        %v1391 = vpack.c.b16 %v1199, %v1183
        %v1392 = vpack.c.b16 %v1200, %v1184
        %v1393 = vpack.c.b16 %v1201, %v1185
        %v1394 = vpack.c.b16 %v1202, %v1186
        %v1395 = vpack.c.b16 %v1203, %v1187
        %v1396 = vpack.c.b16 %v1204, %v1188
        %v1397 = vpack.c.b16 %v1221, %v1205
        %v1398 = vpack.c.b16 %v1222, %v1206
        %v1399 = vpack.c.b16 %v1223, %v1207
        %v1400 = vpack.c.b16 %v1224, %v1208
        %v1401 = vpack.c.b16 %v1225, %v1209
        %v1402 = vpack.c.b16 %v1226, %v1210
        %v1403 = vpack.c.b16 %v1227, %v1211
        %v1404 = vpack.c.b16 %v1228, %v1212
        %v1405 = vpack.c.b16 %v1229, %v1213
        %v1406 = vpack.c.b16 %v1230, %v1214
        %v1407 = vpack.c.b16 %v1231, %v1215
        %v1408 = vpack.c.b16 %v1232, %v1216
        %v1409 = vpack.c.b16 %v1233, %v1217
        %v1410 = vpack.c.b16 %v1234, %v1218
        %v1411 = vpack.c.b16 %v1235, %v1219
        %v1412 = vpack.c.b16 %v1236, %v1220
        %v1413 = vpack.c.b16 %v1253, %v1237
        %v1414 = vpack.c.b16 %v1254, %v1238
        %v1415 = vpack.c.b16 %v1255, %v1239
        %v1416 = vpack.c.b16 %v1256, %v1240
        %v1417 = vpack.c.b16 %v1257, %v1241
        %v1418 = vpack.c.b16 %v1258, %v1242
        %v1419 = vpack.c.b16 %v1259, %v1243
        %v1420 = vpack.c.b16 %v1260, %v1244
        %v1421 = vpack.c.b16 %v1261, %v1245
        %v1422 = vpack.c.b16 %v1262, %v1246
        %v1423 = vpack.c.b16 %v1263, %v1247
        %v1424 = vpack.c.b16 %v1264, %v1248
        %v1425 = vpack.c.b16 %v1265, %v1249
        %v1426 = vpack.c.b16 %v1266, %v1250
        %v1427 = vpack.c.b16 %v1267, %v1251
        %v1428 = vpack.c.b16 %v1268, %v1252
        %v1429 = vpack.c.b16 %v1285, %v1269
        %v1430 = vpack.c.b16 %v1286, %v1270
        %v1431 = vpack.c.b16 %v1287, %v1271
        %v1432 = vpack.c.b16 %v1288, %v1272
        %v1433 = vpack.c.b16 %v1289, %v1273
        %v1434 = vpack.c.b16 %v1290, %v1274
        %v1435 = vpack.c.b16 %v1291, %v1275
        %v1436 = vpack.c.b16 %v1292, %v1276
        %v1437 = vpack.c.b16 %v1293, %v1277
        %v1438 = vpack.c.b16 %v1294, %v1278
        %v1439 = vpack.c.b16 %v1295, %v1279
        %v1440 = vpack.c.b16 %v1296, %v1280
        %v1441 = vpack.c.b16 %v1297, %v1281
        %v1442 = vpack.c.b16 %v1298, %v1282
        %v1443 = vpack.c.b16 %v1299, %v1283
        %v1444 = vpack.c.b16 %v1300, %v1284
        %v1445 = vpack.c.b16 %v1317, %v1301
        %v1446 = vpack.c.b16 %v1318, %v1302
        %v1447 = vpack.c.b16 %v1319, %v1303
        %v1448 = vpack.c.b16 %v1320, %v1304
        %v1449 = vpack.c.b16 %v1321, %v1305
        %v1450 = vpack.c.b16 %v1322, %v1306
        %v1451 = vpack.c.b16 %v1323, %v1307
        %v1452 = vpack.c.b16 %v1324, %v1308
        %v1453 = vpack.c.b16 %v1325, %v1309
        %v1454 = vpack.c.b16 %v1326, %v1310
        %v1455 = vpack.c.b16 %v1327, %v1311
        %v1456 = vpack.c.b16 %v1328, %v1312
        %v1457 = vpack.c.b16 %v1329, %v1313
        %v1458 = vpack.c.b16 %v1330, %v1314
        %v1459 = vpack.c.b16 %v1331, %v1315
        %v1460 = vpack.c.b16 %v1332, %v1316
        %v1845 = vunpack.c.l.b16 %v693
        %v1846 = vunpack.c.l.b16 %v694
        %v1847 = vunpack.c.l.b16 %v695
        %v1848 = vunpack.c.l.b16 %v696
        %v1849 = vunpack.c.l.b16 %v697
        %v1850 = vunpack.c.l.b16 %v698
        %v1851 = vunpack.c.l.b16 %v699
        %v1852 = vunpack.c.l.b16 %v700
        %v1853 = vunpack.c.l.b16 %v701
        %v1854 = vunpack.c.l.b16 %v702
        %v1855 = vunpack.c.l.b16 %v703
        %v1856 = vunpack.c.l.b16 %v704
        %v1857 = vunpack.c.l.b16 %v705
        %v1858 = vunpack.c.l.b16 %v706
        %v1859 = vunpack.c.l.b16 %v707
        %v1860 = vunpack.c.l.b16 %v708
        %v1861 = vunpack.c.l.b16 %v709
        %v1862 = vunpack.c.l.b16 %v710
        %v1863 = vunpack.c.l.b16 %v711
        %v1864 = vunpack.c.l.b16 %v712
        %v1865 = vunpack.c.l.b16 %v713
        %v1866 = vunpack.c.l.b16 %v714
        %v1867 = vunpack.c.l.b16 %v715
        %v1868 = vunpack.c.l.b16 %v716
        %v1869 = vunpack.c.l.b16 %v717
        %v1870 = vunpack.c.l.b16 %v718
        %v1871 = vunpack.c.l.b16 %v719
        %v1872 = vunpack.c.l.b16 %v720
        %v1873 = vunpack.c.l.b16 %v721
        %v1874 = vunpack.c.l.b16 %v722
        %v1875 = vunpack.c.l.b16 %v723
        %v1876 = vunpack.c.l.b16 %v724
        %v1877 = vunpack.c.l.b16 %v725
        %v1878 = vunpack.c.l.b16 %v726
        %v1879 = vunpack.c.l.b16 %v727
        %v1880 = vunpack.c.l.b16 %v728
        %v1881 = vunpack.c.l.b16 %v729
        %v1882 = vunpack.c.l.b16 %v730
        %v1883 = vunpack.c.l.b16 %v731
        %v1884 = vunpack.c.l.b16 %v732
        %v1885 = vunpack.c.l.b16 %v733
        %v1886 = vunpack.c.l.b16 %v734
        %v1887 = vunpack.c.l.b16 %v735
        %v1888 = vunpack.c.l.b16 %v736
        %v1889 = vunpack.c.l.b16 %v737
        %v1890 = vunpack.c.l.b16 %v738
        %v1891 = vunpack.c.l.b16 %v739
        %v1892 = vunpack.c.l.b16 %v740
        %v1893 = vunpack.c.l.b16 %v741
        %v1894 = vunpack.c.l.b16 %v742
        %v1895 = vunpack.c.l.b16 %v743
        %v1896 = vunpack.c.l.b16 %v744
        %v1897 = vunpack.c.l.b16 %v745
        %v1898 = vunpack.c.l.b16 %v746
        %v1899 = vunpack.c.l.b16 %v747
        %v1900 = vunpack.c.l.b16 %v748
        %v1901 = vunpack.c.l.b16 %v749
        %v1902 = vunpack.c.l.b16 %v750
        %v1903 = vunpack.c.l.b16 %v751
        %v1904 = vunpack.c.l.b16 %v752
        %v1905 = vunpack.c.l.b16 %v753
        %v1906 = vunpack.c.l.b16 %v754
        %v1907 = vunpack.c.l.b16 %v755
        %v1908 = vunpack.c.l.b16 %v756
        %v1909 = vunpack.c.l.b16 %v757
        %v1910 = vunpack.c.l.b16 %v758
        %v1911 = vunpack.c.l.b16 %v759
        %v1912 = vunpack.c.l.b16 %v760
        %v1913 = vunpack.c.l.b16 %v761
        %v1914 = vunpack.c.l.b16 %v762
        %v1915 = vunpack.c.l.b16 %v763
        %v1916 = vunpack.c.l.b16 %v764
        %v1917 = vunpack.c.l.b16 %v765
        %v1918 = vunpack.c.l.b16 %v766
        %v1919 = vunpack.c.l.b16 %v767
        %v1920 = vunpack.c.l.b16 %v768
        %v1921 = vunpack.c.l.b16 %v769
        %v1922 = vunpack.c.l.b16 %v770
        %v1923 = vunpack.c.l.b16 %v771
        %v1924 = vunpack.c.l.b16 %v772
        %v1925 = vunpack.c.l.b16 %v773
        %v1926 = vunpack.c.l.b16 %v774
        %v1927 = vunpack.c.l.b16 %v775
        %v1928 = vunpack.c.l.b16 %v776
        %v1929 = vunpack.c.l.b16 %v777
        %v1930 = vunpack.c.l.b16 %v778
        %v1931 = vunpack.c.l.b16 %v779
        %v1932 = vunpack.c.l.b16 %v780
        %v1933 = vunpack.c.l.b16 %v781
        %v1934 = vunpack.c.l.b16 %v782
        %v1935 = vunpack.c.l.b16 %v783
        %v1936 = vunpack.c.l.b16 %v784
        %v1937 = vunpack.c.l.b16 %v785
        %v1938 = vunpack.c.l.b16 %v786
        %v1939 = vunpack.c.l.b16 %v787
        %v1940 = vunpack.c.l.b16 %v788
        %v1941 = vunpack.c.l.b16 %v789
        %v1942 = vunpack.c.l.b16 %v790
        %v1943 = vunpack.c.l.b16 %v791
        %v1944 = vunpack.c.l.b16 %v792
        %v1945 = vunpack.c.l.b16 %v793
        %v1946 = vunpack.c.l.b16 %v794
        %v1947 = vunpack.c.l.b16 %v795
        %v1948 = vunpack.c.l.b16 %v796
        %v1949 = vunpack.c.l.b16 %v797
        %v1950 = vunpack.c.l.b16 %v798
        %v1951 = vunpack.c.l.b16 %v799
        %v1952 = vunpack.c.l.b16 %v800
        %v1953 = vunpack.c.l.b16 %v801
        %v1954 = vunpack.c.l.b16 %v802
        %v1955 = vunpack.c.l.b16 %v803
        %v1956 = vunpack.c.l.b16 %v804
        %v1957 = vunpack.c.l.b16 %v805
        %v1958 = vunpack.c.l.b16 %v806
        %v1959 = vunpack.c.l.b16 %v807
        %v1960 = vunpack.c.l.b16 %v808
        %v1961 = vunpack.c.l.b16 %v809
        %v1962 = vunpack.c.l.b16 %v810
        %v1963 = vunpack.c.l.b16 %v811
        %v1964 = vunpack.c.l.b16 %v812
        %v1965 = vunpack.c.l.b16 %v813
        %v1966 = vunpack.c.l.b16 %v814
        %v1967 = vunpack.c.l.b16 %v815
        %v1968 = vunpack.c.l.b16 %v816
        %v1969 = vunpack.c.l.b16 %v817
        %v1970 = vunpack.c.l.b16 %v818
        %v1971 = vunpack.c.l.b16 %v819
        %v1972 = vunpack.c.l.b16 %v820
        %v1973 = vunpack.c.l.b16 %v821
        %v1974 = vunpack.c.l.b16 %v822
        %v1975 = vunpack.c.l.b16 %v823
        %v1976 = vunpack.c.l.b16 %v824
        %v1977 = vunpack.c.l.b16 %v825
        %v1978 = vunpack.c.l.b16 %v826
        %v1979 = vunpack.c.l.b16 %v827
        %v1980 = vunpack.c.l.b16 %v828
        %v1981 = vunpack.c.l.b16 %v829
        %v1982 = vunpack.c.l.b16 %v830
        %v1983 = vunpack.c.l.b16 %v831
        %v1984 = vunpack.c.l.b16 %v832
        %v1985 = vunpack.c.l.b16 %v833
        %v1986 = vunpack.c.l.b16 %v834
        %v1987 = vunpack.c.l.b16 %v835
        %v1988 = vunpack.c.l.b16 %v836
        %v1989 = vunpack.c.l.b16 %v837
        %v1990 = vunpack.c.l.b16 %v838
        %v1991 = vunpack.c.l.b16 %v839
        %v1992 = vunpack.c.l.b16 %v840
        %v1993 = vunpack.c.l.b16 %v841
        %v1994 = vunpack.c.l.b16 %v842
        %v1995 = vunpack.c.l.b16 %v843
        %v1996 = vunpack.c.l.b16 %v844
        %v1997 = vunpack.c.l.b16 %v845
        %v1998 = vunpack.c.l.b16 %v846
        %v1999 = vunpack.c.l.b16 %v847
        %v2000 = vunpack.c.l.b16 %v848
        %v2001 = vunpack.c.l.b16 %v849
        %v2002 = vunpack.c.l.b16 %v850
        %v2003 = vunpack.c.l.b16 %v851
        %v2004 = vunpack.c.l.b16 %v852
        %v2005 = vunpack.c.l.b16 %v853
        %v2006 = vunpack.c.l.b16 %v854
        %v2007 = vunpack.c.l.b16 %v855
        %v2008 = vunpack.c.l.b16 %v856
        %v2009 = vunpack.c.l.b16 %v857
        %v2010 = vunpack.c.l.b16 %v858
        %v2011 = vunpack.c.l.b16 %v859
        %v2012 = vunpack.c.l.b16 %v860
        %v2013 = vunpack.c.l.b16 %v861
        %v2014 = vunpack.c.l.b16 %v862
        %v2015 = vunpack.c.l.b16 %v863
        %v2016 = vunpack.c.l.b16 %v864
        %v2017 = vunpack.c.l.b16 %v865
        %v2018 = vunpack.c.l.b16 %v866
        %v2019 = vunpack.c.l.b16 %v867
        %v2020 = vunpack.c.l.b16 %v868
        %v2021 = vunpack.c.l.b16 %v869
        %v2022 = vunpack.c.l.b16 %v870
        %v2023 = vunpack.c.l.b16 %v871
        %v2024 = vunpack.c.l.b16 %v872
        %v2025 = vunpack.c.l.b16 %v873
        %v2026 = vunpack.c.l.b16 %v874
        %v2027 = vunpack.c.l.b16 %v875
        %v2028 = vunpack.c.l.b16 %v876
        %v2029 = vunpack.c.l.b16 %v877
        %v2030 = vunpack.c.l.b16 %v878
        %v2031 = vunpack.c.l.b16 %v879
        %v2032 = vunpack.c.l.b16 %v880
        %v2033 = vunpack.c.l.b16 %v881
        %v2034 = vunpack.c.l.b16 %v882
        %v2035 = vunpack.c.l.b16 %v883
        %v2036 = vunpack.c.l.b16 %v884
        %v2037 = vunpack.c.l.b16 %v885
        %v2038 = vunpack.c.l.b16 %v886
        %v2039 = vunpack.c.l.b16 %v887
        %v2040 = vunpack.c.l.b16 %v888
        %v2041 = vunpack.c.l.b16 %v889
        %v2042 = vunpack.c.l.b16 %v890
        %v2043 = vunpack.c.l.b16 %v891
        %v2044 = vunpack.c.l.b16 %v892
        %v2045 = vunpack.c.l.b16 %v893
        %v2046 = vunpack.c.l.b16 %v894
        %v2047 = vunpack.c.l.b16 %v895
        %v2048 = vunpack.c.l.b16 %v896
        %v2049 = vunpack.c.l.b16 %v897
        %v2050 = vunpack.c.l.b16 %v898
        %v2051 = vunpack.c.l.b16 %v899
        %v2052 = vunpack.c.l.b16 %v900
        %v2053 = vunpack.c.l.b16 %v901
        %v2054 = vunpack.c.l.b16 %v902
        %v2055 = vunpack.c.l.b16 %v903
        %v2056 = vunpack.c.l.b16 %v904
        %v2057 = vunpack.c.l.b16 %v905
        %v2058 = vunpack.c.l.b16 %v906
        %v2059 = vunpack.c.l.b16 %v907
        %v2060 = vunpack.c.l.b16 %v908
        %v2061 = vunpack.c.l.b16 %v909
        %v2062 = vunpack.c.l.b16 %v910
        %v2063 = vunpack.c.l.b16 %v911
        %v2064 = vunpack.c.l.b16 %v912
        %v2065 = vunpack.c.l.b16 %v913
        %v2066 = vunpack.c.l.b16 %v914
        %v2067 = vunpack.c.l.b16 %v915
        %v2068 = vunpack.c.l.b16 %v916
        %v2069 = vunpack.c.l.b16 %v917
        %v2070 = vunpack.c.l.b16 %v918
        %v2071 = vunpack.c.l.b16 %v919
        %v2072 = vunpack.c.l.b16 %v920
        %v2073 = vunpack.c.l.b16 %v921
        %v2074 = vunpack.c.l.b16 %v922
        %v2075 = vunpack.c.l.b16 %v923
        %v2076 = vunpack.c.l.b16 %v924
        %v2077 = vunpack.c.l.b16 %v925
        %v2078 = vunpack.c.l.b16 %v926
        %v2079 = vunpack.c.l.b16 %v927
        %v2080 = vunpack.c.l.b16 %v928
        %v2081 = vunpack.c.l.b16 %v929
        %v2082 = vunpack.c.l.b16 %v930
        %v2083 = vunpack.c.l.b16 %v931
        %v2084 = vunpack.c.l.b16 %v932
        %v2085 = vunpack.c.l.b16 %v933
        %v2086 = vunpack.c.l.b16 %v934
        %v2087 = vunpack.c.l.b16 %v935
        %v2088 = vunpack.c.l.b16 %v936
        %v2089 = vunpack.c.l.b16 %v937
        %v2090 = vunpack.c.l.b16 %v938
        %v2091 = vunpack.c.l.b16 %v939
        %v2092 = vunpack.c.l.b16 %v940
        %v2093 = vunpack.c.l.b16 %v941
        %v2094 = vunpack.c.l.b16 %v942
        %v2095 = vunpack.c.l.b16 %v943
        %v2096 = vunpack.c.l.b16 %v944
        %v2097 = vunpack.c.l.b16 %v945
        %v2098 = vunpack.c.l.b16 %v946
        %v2099 = vunpack.c.l.b16 %v947
        %v2100 = vunpack.c.l.b16 %v948
        %v2101 = vpack.c.b16 %v1846, %v1845
        %v2102 = vpack.c.b16 %v1848, %v1847
        %v2103 = vpack.c.b16 %v1850, %v1849
        %v2104 = vpack.c.b16 %v1852, %v1851
        %v2105 = vpack.c.b16 %v1854, %v1853
        %v2106 = vpack.c.b16 %v1856, %v1855
        %v2107 = vpack.c.b16 %v1858, %v1857
        %v2108 = vpack.c.b16 %v1860, %v1859
        %v2109 = vpack.c.b16 %v1862, %v1861
        %v2110 = vpack.c.b16 %v1864, %v1863
        %v2111 = vpack.c.b16 %v1866, %v1865
        %v2112 = vpack.c.b16 %v1868, %v1867
        %v2113 = vpack.c.b16 %v1870, %v1869
        %v2114 = vpack.c.b16 %v1872, %v1871
        %v2115 = vpack.c.b16 %v1874, %v1873
        %v2116 = vpack.c.b16 %v1876, %v1875
        %v2117 = vpack.c.b16 %v1878, %v1877
        %v2118 = vpack.c.b16 %v1880, %v1879
        %v2119 = vpack.c.b16 %v1882, %v1881
        %v2120 = vpack.c.b16 %v1884, %v1883
        %v2121 = vpack.c.b16 %v1886, %v1885
        %v2122 = vpack.c.b16 %v1888, %v1887
        %v2123 = vpack.c.b16 %v1890, %v1889
        %v2124 = vpack.c.b16 %v1892, %v1891
        %v2125 = vpack.c.b16 %v1894, %v1893
        %v2126 = vpack.c.b16 %v1896, %v1895
        %v2127 = vpack.c.b16 %v1898, %v1897
        %v2128 = vpack.c.b16 %v1900, %v1899
        %v2129 = vpack.c.b16 %v1902, %v1901
        %v2130 = vpack.c.b16 %v1904, %v1903
        %v2131 = vpack.c.b16 %v1906, %v1905
        %v2132 = vpack.c.b16 %v1908, %v1907
        %v2133 = vpack.c.b16 %v1910, %v1909
        %v2134 = vpack.c.b16 %v1912, %v1911
        %v2135 = vpack.c.b16 %v1914, %v1913
        %v2136 = vpack.c.b16 %v1916, %v1915
        %v2137 = vpack.c.b16 %v1918, %v1917
        %v2138 = vpack.c.b16 %v1920, %v1919
        %v2139 = vpack.c.b16 %v1922, %v1921
        %v2140 = vpack.c.b16 %v1924, %v1923
        %v2141 = vpack.c.b16 %v1926, %v1925
        %v2142 = vpack.c.b16 %v1928, %v1927
        %v2143 = vpack.c.b16 %v1930, %v1929
        %v2144 = vpack.c.b16 %v1932, %v1931
        %v2145 = vpack.c.b16 %v1934, %v1933
        %v2146 = vpack.c.b16 %v1936, %v1935
        %v2147 = vpack.c.b16 %v1938, %v1937
        %v2148 = vpack.c.b16 %v1940, %v1939
        %v2149 = vpack.c.b16 %v1942, %v1941
        %v2150 = vpack.c.b16 %v1944, %v1943
        %v2151 = vpack.c.b16 %v1946, %v1945
        %v2152 = vpack.c.b16 %v1948, %v1947
        %v2153 = vpack.c.b16 %v1950, %v1949
        %v2154 = vpack.c.b16 %v1952, %v1951
        %v2155 = vpack.c.b16 %v1954, %v1953
        %v2156 = vpack.c.b16 %v1956, %v1955
        %v2157 = vpack.c.b16 %v1958, %v1957
        %v2158 = vpack.c.b16 %v1960, %v1959
        %v2159 = vpack.c.b16 %v1962, %v1961
        %v2160 = vpack.c.b16 %v1964, %v1963
        %v2161 = vpack.c.b16 %v1966, %v1965
        %v2162 = vpack.c.b16 %v1968, %v1967
        %v2163 = vpack.c.b16 %v1970, %v1969
        %v2164 = vpack.c.b16 %v1972, %v1971
        %v2165 = vpack.c.b16 %v1974, %v1973
        %v2166 = vpack.c.b16 %v1976, %v1975
        %v2167 = vpack.c.b16 %v1978, %v1977
        %v2168 = vpack.c.b16 %v1980, %v1979
        %v2169 = vpack.c.b16 %v1982, %v1981
        %v2170 = vpack.c.b16 %v1984, %v1983
        %v2171 = vpack.c.b16 %v1986, %v1985
        %v2172 = vpack.c.b16 %v1988, %v1987
        %v2173 = vpack.c.b16 %v1990, %v1989
        %v2174 = vpack.c.b16 %v1992, %v1991
        %v2175 = vpack.c.b16 %v1994, %v1993
        %v2176 = vpack.c.b16 %v1996, %v1995
        %v2177 = vpack.c.b16 %v1998, %v1997
        %v2178 = vpack.c.b16 %v2000, %v1999
        %v2179 = vpack.c.b16 %v2002, %v2001
        %v2180 = vpack.c.b16 %v2004, %v2003
        %v2181 = vpack.c.b16 %v2006, %v2005
        %v2182 = vpack.c.b16 %v2008, %v2007
        %v2183 = vpack.c.b16 %v2010, %v2009
        %v2184 = vpack.c.b16 %v2012, %v2011
        %v2185 = vpack.c.b16 %v2014, %v2013
        %v2186 = vpack.c.b16 %v2016, %v2015
        %v2187 = vpack.c.b16 %v2018, %v2017
        %v2188 = vpack.c.b16 %v2020, %v2019
        %v2189 = vpack.c.b16 %v2022, %v2021
        %v2190 = vpack.c.b16 %v2024, %v2023
        %v2191 = vpack.c.b16 %v2026, %v2025
        %v2192 = vpack.c.b16 %v2028, %v2027
        %v2193 = vpack.c.b16 %v2030, %v2029
        %v2194 = vpack.c.b16 %v2032, %v2031
        %v2195 = vpack.c.b16 %v2034, %v2033
        %v2196 = vpack.c.b16 %v2036, %v2035
        %v2197 = vpack.c.b16 %v2038, %v2037
        %v2198 = vpack.c.b16 %v2040, %v2039
        %v2199 = vpack.c.b16 %v2042, %v2041
        %v2200 = vpack.c.b16 %v2044, %v2043
        %v2201 = vpack.c.b16 %v2046, %v2045
        %v2202 = vpack.c.b16 %v2048, %v2047
        %v2203 = vpack.c.b16 %v2050, %v2049
        %v2204 = vpack.c.b16 %v2052, %v2051
        %v2205 = vpack.c.b16 %v2054, %v2053
        %v2206 = vpack.c.b16 %v2056, %v2055
        %v2207 = vpack.c.b16 %v2058, %v2057
        %v2208 = vpack.c.b16 %v2060, %v2059
        %v2209 = vpack.c.b16 %v2062, %v2061
        %v2210 = vpack.c.b16 %v2064, %v2063
        %v2211 = vpack.c.b16 %v2066, %v2065
        %v2212 = vpack.c.b16 %v2068, %v2067
        %v2213 = vpack.c.b16 %v2070, %v2069
        %v2214 = vpack.c.b16 %v2072, %v2071
        %v2215 = vpack.c.b16 %v2074, %v2073
        %v2216 = vpack.c.b16 %v2076, %v2075
        %v2217 = vpack.c.b16 %v2078, %v2077
        %v2218 = vpack.c.b16 %v2080, %v2079
        %v2219 = vpack.c.b16 %v2082, %v2081
        %v2220 = vpack.c.b16 %v2084, %v2083
        %v2221 = vpack.c.b16 %v2086, %v2085
        %v2222 = vpack.c.b16 %v2088, %v2087
        %v2223 = vpack.c.b16 %v2090, %v2089
        %v2224 = vpack.c.b16 %v2092, %v2091
        %v2225 = vpack.c.b16 %v2094, %v2093
        %v2226 = vpack.c.b16 %v2096, %v2095
        %v2227 = vpack.c.b16 %v2098, %v2097
        %v2228 = vpack.c.b16 %v2100, %v2099
        %2357 = vmatprep.subr.bf16.mxu0 0
        %2358 = vmatpush1.bf16.msra.mxu0 %v2108
        %2359 = vmatprep.subr.bf16.mxu0 0
        %2360 = vmatpush1.bf16.msra.mxu0 %v2107
        %2361 = vmatprep.subr.bf16.mxu0 0
        %2362 = vmatpush1.bf16.msra.mxu0 %v2106
        %2363 = vmatprep.subr.bf16.mxu0 0
        %2364 = vmatpush1.bf16.msra.mxu0 %v2105
        %2365 = vmatprep.subr.bf16.mxu0 0
        %2366 = vmatpush1.bf16.msra.mxu0 %v2104
        %2367 = vmatprep.subr.bf16.mxu0 0
        %2368 = vmatpush1.bf16.msra.mxu0 %v2103
        %2369 = vmatprep.subr.bf16.mxu0 0
        %2370 = vmatpush1.bf16.msra.mxu0 %v2102
        %2371 = vmatprep.subr.bf16.mxu0 0
        %2372 = vmatpush1.bf16.msra.mxu0 %v2101
        %2373 = vmatprep.subr.bf16.mxu0 0
        %2374 = vmatpush2.bf16.msra.mxu0 %v2116
        %2375 = vmatprep.subr.bf16.mxu0 0
        %2376 = vmatpush2.bf16.msra.mxu0 %v2115
        %2377 = vmatprep.subr.bf16.mxu0 0
        %2378 = vmatpush2.bf16.msra.mxu0 %v2114
        %2379 = vmatprep.subr.bf16.mxu0 0
        %2380 = vmatpush2.bf16.msra.mxu0 %v2113
        %2381 = vmatprep.subr.bf16.mxu0 0
        %2382 = vmatpush2.bf16.msra.mxu0 %v2112
        %2383 = vmatprep.subr.bf16.mxu0 0
        %2384 = vmatpush2.bf16.msra.mxu0 %v2111
        %2385 = vmatprep.subr.bf16.mxu0 0
        %2386 = vmatpush2.bf16.msra.mxu0 %v2110
        %2387 = vmatprep.subr.bf16.mxu0 0
        %2388 = vmatpush2.bf16.msra.mxu0 %v2109
        %2389 = vmatprep.mubr.bf16.mxu0 %v1334
        %2390 = vmatmul.mubr.bf16.gmra.mxu0 %v1333
        %v2391 = vpop.f32.mrf.mxu0
        %v2392 = vadd.f32 0.0, %v2391
        %v2393 = vpop.f32.mrf.mxu0
        %v2394 = vpop.f32.mrf.mxu0
        %v2395 = vadd.f32 0.0, %v2394
        %v2396 = vpop.f32.mrf.mxu0
        %2397 = vmatprep.mubr.bf16.mxu0 %v1350
        %2398 = vmatmul.mubr.bf16.gmra.mxu0 %v1349
        %v2399 = vpop.f32.mrf.mxu0
        %v2400 = vadd.f32 0.0, %v2399
        %v2401 = vpop.f32.mrf.mxu0
        %v2402 = vpop.f32.mrf.mxu0
        %v2403 = vadd.f32 0.0, %v2402
        %v2404 = vpop.f32.mrf.mxu0
        %2405 = vmatprep.mubr.bf16.mxu0 %v1366
        %2406 = vmatmul.mubr.bf16.gmra.mxu0 %v1365
        %v2407 = vpop.f32.mrf.mxu0
        %v2408 = vadd.f32 0.0, %v2407
        %v2409 = vpop.f32.mrf.mxu0
        %v2410 = vpop.f32.mrf.mxu0
        %v2411 = vadd.f32 0.0, %v2410
        %v2412 = vpop.f32.mrf.mxu0
        %2413 = vmatprep.mubr.bf16.mxu0 %v1382
        %2414 = vmatmul.mubr.bf16.gmra.mxu0 %v1381
        %v2415 = vpop.f32.mrf.mxu0
        %v2416 = vadd.f32 0.0, %v2415
        %v2417 = vpop.f32.mrf.mxu0
        %v2418 = vpop.f32.mrf.mxu0
        %v2419 = vadd.f32 0.0, %v2418
        %v2420 = vpop.f32.mrf.mxu0
        %2421 = vmatprep.mubr.bf16.mxu0 %v1398
        %2422 = vmatmul.mubr.bf16.gmra.mxu0 %v1397
        %v2423 = vpop.f32.mrf.mxu0
        %v2424 = vadd.f32 0.0, %v2423
        %v2425 = vpop.f32.mrf.mxu0
        %v2426 = vpop.f32.mrf.mxu0
        %v2427 = vadd.f32 0.0, %v2426
        %v2428 = vpop.f32.mrf.mxu0
        %2429 = vmatprep.mubr.bf16.mxu0 %v1414
        %2430 = vmatmul.mubr.bf16.gmra.mxu0 %v1413
        %v2431 = vpop.f32.mrf.mxu0
        %v2432 = vadd.f32 0.0, %v2431
        %v2433 = vpop.f32.mrf.mxu0
        %v2434 = vpop.f32.mrf.mxu0
        %v2435 = vadd.f32 0.0, %v2434
        %v2436 = vpop.f32.mrf.mxu0
        %2437 = vmatprep.mubr.bf16.mxu0 %v1430
        %2438 = vmatmul.mubr.bf16.gmra.mxu0 %v1429
        %v2439 = vpop.f32.mrf.mxu0
        %v2440 = vadd.f32 0.0, %v2439
        %v2441 = vpop.f32.mrf.mxu0
        %v2442 = vpop.f32.mrf.mxu0
        %v2443 = vadd.f32 0.0, %v2442
        %v2444 = vpop.f32.mrf.mxu0
        %2445 = vmatprep.mubr.bf16.mxu0 %v1446
        %2446 = vmatmul.mubr.bf16.gmra.mxu0 %v1445
        %v2447 = vpop.f32.mrf.mxu0
        %v2448 = vadd.f32 0.0, %v2447
        %v2449 = vpop.f32.mrf.mxu0
        %v2450 = vpop.f32.mrf.mxu0
        %v2451 = vadd.f32 0.0, %v2450
        %v2452 = vpop.f32.mrf.mxu0
        %2453 = vdwg.mxu0
        %2454 = vmatprep.subr.bf16.mxu0 0
        %2455 = vmatpush1.bf16.msra.mxu0 %v2124
        %2456 = vmatprep.subr.bf16.mxu0 0
        %2457 = vmatpush1.bf16.msra.mxu0 %v2123
        %2458 = vmatprep.subr.bf16.mxu0 0
        %2459 = vmatpush1.bf16.msra.mxu0 %v2122
        %2460 = vmatprep.subr.bf16.mxu0 0
        %2461 = vmatpush1.bf16.msra.mxu0 %v2121
        %2462 = vmatprep.subr.bf16.mxu0 0
        %2463 = vmatpush1.bf16.msra.mxu0 %v2120
        %2464 = vmatprep.subr.bf16.mxu0 0
        %2465 = vmatpush1.bf16.msra.mxu0 %v2119
        %2466 = vmatprep.subr.bf16.mxu0 0
        %2467 = vmatpush1.bf16.msra.mxu0 %v2118
        %2468 = vmatprep.subr.bf16.mxu0 0
        %2469 = vmatpush1.bf16.msra.mxu0 %v2117
        %2470 = vmatprep.subr.bf16.mxu0 0
        %2471 = vmatpush2.bf16.msra.mxu0 %v2132
        %2472 = vmatprep.subr.bf16.mxu0 0
        %2473 = vmatpush2.bf16.msra.mxu0 %v2131
        %2474 = vmatprep.subr.bf16.mxu0 0
        %2475 = vmatpush2.bf16.msra.mxu0 %v2130
        %2476 = vmatprep.subr.bf16.mxu0 0
        %2477 = vmatpush2.bf16.msra.mxu0 %v2129
        %2478 = vmatprep.subr.bf16.mxu0 0
        %2479 = vmatpush2.bf16.msra.mxu0 %v2128
        %2480 = vmatprep.subr.bf16.mxu0 0
        %2481 = vmatpush2.bf16.msra.mxu0 %v2127
        %2482 = vmatprep.subr.bf16.mxu0 0
        %2483 = vmatpush2.bf16.msra.mxu0 %v2126
        %2484 = vmatprep.subr.bf16.mxu0 0
        %2485 = vmatpush2.bf16.msra.mxu0 %v2125
        %2486 = vmatprep.mubr.bf16.mxu0 %v1336
        %2487 = vmatmul.mubr.bf16.gmra.mxu0 %v1335
        %v2488 = vpop.f32.mrf.mxu0
        %v2489 = vadd.f32 %v2392, %v2488
        %v2490 = vpop.f32.mrf.mxu0
        %v2491 = vpop.f32.mrf.mxu0
        %v2492 = vadd.f32 %v2395, %v2491
        %v2493 = vpop.f32.mrf.mxu0
        %2494 = vmatprep.mubr.bf16.mxu0 %v1352
        %2495 = vmatmul.mubr.bf16.gmra.mxu0 %v1351
        %v2496 = vpop.f32.mrf.mxu0
        %v2497 = vadd.f32 %v2400, %v2496
        %v2498 = vpop.f32.mrf.mxu0
        %v2499 = vpop.f32.mrf.mxu0
        %v2500 = vadd.f32 %v2403, %v2499
        %v2501 = vpop.f32.mrf.mxu0
        %2502 = vmatprep.mubr.bf16.mxu0 %v1368
        %2503 = vmatmul.mubr.bf16.gmra.mxu0 %v1367
        %v2504 = vpop.f32.mrf.mxu0
        %v2505 = vadd.f32 %v2408, %v2504
        %v2506 = vpop.f32.mrf.mxu0
        %v2507 = vpop.f32.mrf.mxu0
        %v2508 = vadd.f32 %v2411, %v2507
        %v2509 = vpop.f32.mrf.mxu0
        %2510 = vmatprep.mubr.bf16.mxu0 %v1384
        %2511 = vmatmul.mubr.bf16.gmra.mxu0 %v1383
        %v2512 = vpop.f32.mrf.mxu0
        %v2513 = vadd.f32 %v2416, %v2512
        %v2514 = vpop.f32.mrf.mxu0
        %v2515 = vpop.f32.mrf.mxu0
        %v2516 = vadd.f32 %v2419, %v2515
        %v2517 = vpop.f32.mrf.mxu0
        %2518 = vmatprep.mubr.bf16.mxu0 %v1400
        %2519 = vmatmul.mubr.bf16.gmra.mxu0 %v1399
        %v2520 = vpop.f32.mrf.mxu0
        %v2521 = vadd.f32 %v2424, %v2520
        %v2522 = vpop.f32.mrf.mxu0
        %v2523 = vpop.f32.mrf.mxu0
        %v2524 = vadd.f32 %v2427, %v2523
        %v2525 = vpop.f32.mrf.mxu0
        %2526 = vmatprep.mubr.bf16.mxu0 %v1416
        %2527 = vmatmul.mubr.bf16.gmra.mxu0 %v1415
        %v2528 = vpop.f32.mrf.mxu0
        %v2529 = vadd.f32 %v2432, %v2528
        %v2530 = vpop.f32.mrf.mxu0
        %v2531 = vpop.f32.mrf.mxu0
        %v2532 = vadd.f32 %v2435, %v2531
        %v2533 = vpop.f32.mrf.mxu0
        %2534 = vmatprep.mubr.bf16.mxu0 %v1432
        %2535 = vmatmul.mubr.bf16.gmra.mxu0 %v1431
        %v2536 = vpop.f32.mrf.mxu0
        %v2537 = vadd.f32 %v2440, %v2536
        %v2538 = vpop.f32.mrf.mxu0
        %v2539 = vpop.f32.mrf.mxu0
        %v2540 = vadd.f32 %v2443, %v2539
        %v2541 = vpop.f32.mrf.mxu0
        %2542 = vmatprep.mubr.bf16.mxu0 %v1448
        %2543 = vmatmul.mubr.bf16.gmra.mxu0 %v1447
        %v2544 = vpop.f32.mrf.mxu0
        %v2545 = vadd.f32 %v2448, %v2544
        %v2546 = vpop.f32.mrf.mxu0
        %v2547 = vpop.f32.mrf.mxu0
        %v2548 = vadd.f32 %v2451, %v2547
        %v2549 = vpop.f32.mrf.mxu0
        %2550 = vdwg.mxu0
        %2551 = vmatprep.subr.bf16.mxu0 0
        %2552 = vmatpush1.bf16.msra.mxu0 %v2140
        %2553 = vmatprep.subr.bf16.mxu0 0
        %2554 = vmatpush1.bf16.msra.mxu0 %v2139
        %2555 = vmatprep.subr.bf16.mxu0 0
        %2556 = vmatpush1.bf16.msra.mxu0 %v2138
        %2557 = vmatprep.subr.bf16.mxu0 0
        %2558 = vmatpush1.bf16.msra.mxu0 %v2137
        %2559 = vmatprep.subr.bf16.mxu0 0
        %2560 = vmatpush1.bf16.msra.mxu0 %v2136
        %2561 = vmatprep.subr.bf16.mxu0 0
        %2562 = vmatpush1.bf16.msra.mxu0 %v2135
        %2563 = vmatprep.subr.bf16.mxu0 0
        %2564 = vmatpush1.bf16.msra.mxu0 %v2134
        %2565 = vmatprep.subr.bf16.mxu0 0
        %2566 = vmatpush1.bf16.msra.mxu0 %v2133
        %2567 = vmatprep.subr.bf16.mxu0 0
        %2568 = vmatpush2.bf16.msra.mxu0 %v2148
        %2569 = vmatprep.subr.bf16.mxu0 0
        %2570 = vmatpush2.bf16.msra.mxu0 %v2147
        %2571 = vmatprep.subr.bf16.mxu0 0
        %2572 = vmatpush2.bf16.msra.mxu0 %v2146
        %2573 = vmatprep.subr.bf16.mxu0 0
        %2574 = vmatpush2.bf16.msra.mxu0 %v2145
        %2575 = vmatprep.subr.bf16.mxu0 0
        %2576 = vmatpush2.bf16.msra.mxu0 %v2144
        %2577 = vmatprep.subr.bf16.mxu0 0
        %2578 = vmatpush2.bf16.msra.mxu0 %v2143
        %2579 = vmatprep.subr.bf16.mxu0 0
        %2580 = vmatpush2.bf16.msra.mxu0 %v2142
        %2581 = vmatprep.subr.bf16.mxu0 0
        %2582 = vmatpush2.bf16.msra.mxu0 %v2141
        %2583 = vmatprep.mubr.bf16.mxu0 %v1338
        %2584 = vmatmul.mubr.bf16.gmra.mxu0 %v1337
        %v2585 = vpop.f32.mrf.mxu0
        %v2586 = vadd.f32 %v2489, %v2585
        %v2587 = vpop.f32.mrf.mxu0
        %v2588 = vpop.f32.mrf.mxu0
        %v2589 = vadd.f32 %v2492, %v2588
        %v2590 = vpop.f32.mrf.mxu0
        %2591 = vmatprep.mubr.bf16.mxu0 %v1354
        %2592 = vmatmul.mubr.bf16.gmra.mxu0 %v1353
        %v2593 = vpop.f32.mrf.mxu0
        %v2594 = vadd.f32 %v2497, %v2593
        %v2595 = vpop.f32.mrf.mxu0
        %v2596 = vpop.f32.mrf.mxu0
        %v2597 = vadd.f32 %v2500, %v2596
        %v2598 = vpop.f32.mrf.mxu0
        %2599 = vmatprep.mubr.bf16.mxu0 %v1370
        %2600 = vmatmul.mubr.bf16.gmra.mxu0 %v1369
        %v2601 = vpop.f32.mrf.mxu0
        %v2602 = vadd.f32 %v2505, %v2601
        %v2603 = vpop.f32.mrf.mxu0
        %v2604 = vpop.f32.mrf.mxu0
        %v2605 = vadd.f32 %v2508, %v2604
        %v2606 = vpop.f32.mrf.mxu0
        %2607 = vmatprep.mubr.bf16.mxu0 %v1386
        %2608 = vmatmul.mubr.bf16.gmra.mxu0 %v1385
        %v2609 = vpop.f32.mrf.mxu0
        %v2610 = vadd.f32 %v2513, %v2609
        %v2611 = vpop.f32.mrf.mxu0
        %v2612 = vpop.f32.mrf.mxu0
        %v2613 = vadd.f32 %v2516, %v2612
        %v2614 = vpop.f32.mrf.mxu0
        %2615 = vmatprep.mubr.bf16.mxu0 %v1402
        %2616 = vmatmul.mubr.bf16.gmra.mxu0 %v1401
        %v2617 = vpop.f32.mrf.mxu0
        %v2618 = vadd.f32 %v2521, %v2617
        %v2619 = vpop.f32.mrf.mxu0
        %v2620 = vpop.f32.mrf.mxu0
        %v2621 = vadd.f32 %v2524, %v2620
        %v2622 = vpop.f32.mrf.mxu0
        %2623 = vmatprep.mubr.bf16.mxu0 %v1418
        %2624 = vmatmul.mubr.bf16.gmra.mxu0 %v1417
        %v2625 = vpop.f32.mrf.mxu0
        %v2626 = vadd.f32 %v2529, %v2625
        %v2627 = vpop.f32.mrf.mxu0
        %v2628 = vpop.f32.mrf.mxu0
        %v2629 = vadd.f32 %v2532, %v2628
        %v2630 = vpop.f32.mrf.mxu0
        %2631 = vmatprep.mubr.bf16.mxu0 %v1434
        %2632 = vmatmul.mubr.bf16.gmra.mxu0 %v1433
        %v2633 = vpop.f32.mrf.mxu0
        %v2634 = vadd.f32 %v2537, %v2633
        %v2635 = vpop.f32.mrf.mxu0
        %v2636 = vpop.f32.mrf.mxu0
        %v2637 = vadd.f32 %v2540, %v2636
        %v2638 = vpop.f32.mrf.mxu0
        %2639 = vmatprep.mubr.bf16.mxu0 %v1450
        %2640 = vmatmul.mubr.bf16.gmra.mxu0 %v1449
        %v2641 = vpop.f32.mrf.mxu0
        %v2642 = vadd.f32 %v2545, %v2641
        %v2643 = vpop.f32.mrf.mxu0
        %v2644 = vpop.f32.mrf.mxu0
        %v2645 = vadd.f32 %v2548, %v2644
        %v2646 = vpop.f32.mrf.mxu0
        %2647 = vdwg.mxu0
        %2648 = vmatprep.subr.bf16.mxu0 0
        %2649 = vmatpush1.bf16.msra.mxu0 %v2156
        %2650 = vmatprep.subr.bf16.mxu0 0
        %2651 = vmatpush1.bf16.msra.mxu0 %v2155
        %2652 = vmatprep.subr.bf16.mxu0 0
        %2653 = vmatpush1.bf16.msra.mxu0 %v2154
        %2654 = vmatprep.subr.bf16.mxu0 0
        %2655 = vmatpush1.bf16.msra.mxu0 %v2153
        %2656 = vmatprep.subr.bf16.mxu0 0
        %2657 = vmatpush1.bf16.msra.mxu0 %v2152
        %2658 = vmatprep.subr.bf16.mxu0 0
        %2659 = vmatpush1.bf16.msra.mxu0 %v2151
        %2660 = vmatprep.subr.bf16.mxu0 0
        %2661 = vmatpush1.bf16.msra.mxu0 %v2150
        %2662 = vmatprep.subr.bf16.mxu0 0
        %2663 = vmatpush1.bf16.msra.mxu0 %v2149
        %2664 = vmatprep.subr.bf16.mxu0 0
        %2665 = vmatpush2.bf16.msra.mxu0 %v2164
        %2666 = vmatprep.subr.bf16.mxu0 0
        %2667 = vmatpush2.bf16.msra.mxu0 %v2163
        %2668 = vmatprep.subr.bf16.mxu0 0
        %2669 = vmatpush2.bf16.msra.mxu0 %v2162
        %2670 = vmatprep.subr.bf16.mxu0 0
        %2671 = vmatpush2.bf16.msra.mxu0 %v2161
        %2672 = vmatprep.subr.bf16.mxu0 0
        %2673 = vmatpush2.bf16.msra.mxu0 %v2160
        %2674 = vmatprep.subr.bf16.mxu0 0
        %2675 = vmatpush2.bf16.msra.mxu0 %v2159
        %2676 = vmatprep.subr.bf16.mxu0 0
        %2677 = vmatpush2.bf16.msra.mxu0 %v2158
        %2678 = vmatprep.subr.bf16.mxu0 0
        %2679 = vmatpush2.bf16.msra.mxu0 %v2157
        %2680 = vmatprep.mubr.bf16.mxu0 %v1340
        %2681 = vmatmul.mubr.bf16.gmra.mxu0 %v1339
        %v2682 = vpop.f32.mrf.mxu0
        %v2683 = vadd.f32 %v2586, %v2682
        %v2684 = vpop.f32.mrf.mxu0
        %v2685 = vpop.f32.mrf.mxu0
        %v2686 = vadd.f32 %v2589, %v2685
        %v2687 = vpop.f32.mrf.mxu0
        %2688 = vmatprep.mubr.bf16.mxu0 %v1356
        %2689 = vmatmul.mubr.bf16.gmra.mxu0 %v1355
        %v2690 = vpop.f32.mrf.mxu0
        %v2691 = vadd.f32 %v2594, %v2690
        %v2692 = vpop.f32.mrf.mxu0
        %v2693 = vpop.f32.mrf.mxu0
        %v2694 = vadd.f32 %v2597, %v2693
        %v2695 = vpop.f32.mrf.mxu0
        %2696 = vmatprep.mubr.bf16.mxu0 %v1372
        %2697 = vmatmul.mubr.bf16.gmra.mxu0 %v1371
        %v2698 = vpop.f32.mrf.mxu0
        %v2699 = vadd.f32 %v2602, %v2698
        %v2700 = vpop.f32.mrf.mxu0
        %v2701 = vpop.f32.mrf.mxu0
        %v2702 = vadd.f32 %v2605, %v2701
        %v2703 = vpop.f32.mrf.mxu0
        %2704 = vmatprep.mubr.bf16.mxu0 %v1388
        %2705 = vmatmul.mubr.bf16.gmra.mxu0 %v1387
        %v2706 = vpop.f32.mrf.mxu0
        %v2707 = vadd.f32 %v2610, %v2706
        %v2708 = vpop.f32.mrf.mxu0
        %v2709 = vpop.f32.mrf.mxu0
        %v2710 = vadd.f32 %v2613, %v2709
        %v2711 = vpop.f32.mrf.mxu0
        %2712 = vmatprep.mubr.bf16.mxu0 %v1404
        %2713 = vmatmul.mubr.bf16.gmra.mxu0 %v1403
        %v2714 = vpop.f32.mrf.mxu0
        %v2715 = vadd.f32 %v2618, %v2714
        %v2716 = vpop.f32.mrf.mxu0
        %v2717 = vpop.f32.mrf.mxu0
        %v2718 = vadd.f32 %v2621, %v2717
        %v2719 = vpop.f32.mrf.mxu0
        %2720 = vmatprep.mubr.bf16.mxu0 %v1420
        %2721 = vmatmul.mubr.bf16.gmra.mxu0 %v1419
        %v2722 = vpop.f32.mrf.mxu0
        %v2723 = vadd.f32 %v2626, %v2722
        %v2724 = vpop.f32.mrf.mxu0
        %v2725 = vpop.f32.mrf.mxu0
        %v2726 = vadd.f32 %v2629, %v2725
        %v2727 = vpop.f32.mrf.mxu0
        %2728 = vmatprep.mubr.bf16.mxu0 %v1436
        %2729 = vmatmul.mubr.bf16.gmra.mxu0 %v1435
        %v2730 = vpop.f32.mrf.mxu0
        %v2731 = vadd.f32 %v2634, %v2730
        %v2732 = vpop.f32.mrf.mxu0
        %v2733 = vpop.f32.mrf.mxu0
        %v2734 = vadd.f32 %v2637, %v2733
        %v2735 = vpop.f32.mrf.mxu0
        %2736 = vmatprep.mubr.bf16.mxu0 %v1452
        %2737 = vmatmul.mubr.bf16.gmra.mxu0 %v1451
        %v2738 = vpop.f32.mrf.mxu0
        %v2739 = vadd.f32 %v2642, %v2738
        %v2740 = vpop.f32.mrf.mxu0
        %v2741 = vpop.f32.mrf.mxu0
        %v2742 = vadd.f32 %v2645, %v2741
        %v2743 = vpop.f32.mrf.mxu0
        %2744 = vdwg.mxu0
        %2745 = vmatprep.subr.bf16.mxu0 0
        %2746 = vmatpush1.bf16.msra.mxu0 %v2172
        %2747 = vmatprep.subr.bf16.mxu0 0
        %2748 = vmatpush1.bf16.msra.mxu0 %v2171
        %2749 = vmatprep.subr.bf16.mxu0 0
        %2750 = vmatpush1.bf16.msra.mxu0 %v2170
        %2751 = vmatprep.subr.bf16.mxu0 0
        %2752 = vmatpush1.bf16.msra.mxu0 %v2169
        %2753 = vmatprep.subr.bf16.mxu0 0
        %2754 = vmatpush1.bf16.msra.mxu0 %v2168
        %2755 = vmatprep.subr.bf16.mxu0 0
        %2756 = vmatpush1.bf16.msra.mxu0 %v2167
        %2757 = vmatprep.subr.bf16.mxu0 0
        %2758 = vmatpush1.bf16.msra.mxu0 %v2166
        %2759 = vmatprep.subr.bf16.mxu0 0
        %2760 = vmatpush1.bf16.msra.mxu0 %v2165
        %2761 = vmatprep.subr.bf16.mxu0 0
        %2762 = vmatpush2.bf16.msra.mxu0 %v2180
        %2763 = vmatprep.subr.bf16.mxu0 0
        %2764 = vmatpush2.bf16.msra.mxu0 %v2179
        %2765 = vmatprep.subr.bf16.mxu0 0
        %2766 = vmatpush2.bf16.msra.mxu0 %v2178
        %2767 = vmatprep.subr.bf16.mxu0 0
        %2768 = vmatpush2.bf16.msra.mxu0 %v2177
        %2769 = vmatprep.subr.bf16.mxu0 0
        %2770 = vmatpush2.bf16.msra.mxu0 %v2176
        %2771 = vmatprep.subr.bf16.mxu0 0
        %2772 = vmatpush2.bf16.msra.mxu0 %v2175
        %2773 = vmatprep.subr.bf16.mxu0 0
        %2774 = vmatpush2.bf16.msra.mxu0 %v2174
        %2775 = vmatprep.subr.bf16.mxu0 0
        %2776 = vmatpush2.bf16.msra.mxu0 %v2173
        %2777 = vmatprep.mubr.bf16.mxu0 %v1342
        %2778 = vmatmul.mubr.bf16.gmra.mxu0 %v1341
        %v2779 = vpop.f32.mrf.mxu0
        %v2780 = vadd.f32 %v2683, %v2779
        %v2781 = vpop.f32.mrf.mxu0
        %v2782 = vpop.f32.mrf.mxu0
        %v2783 = vadd.f32 %v2686, %v2782
        %v2784 = vpop.f32.mrf.mxu0
        %2785 = vmatprep.mubr.bf16.mxu0 %v1358
        %2786 = vmatmul.mubr.bf16.gmra.mxu0 %v1357
        %v2787 = vpop.f32.mrf.mxu0
        %v2788 = vadd.f32 %v2691, %v2787
        %v2789 = vpop.f32.mrf.mxu0
        %v2790 = vpop.f32.mrf.mxu0
        %v2791 = vadd.f32 %v2694, %v2790
        %v2792 = vpop.f32.mrf.mxu0
        %2793 = vmatprep.mubr.bf16.mxu0 %v1374
        %2794 = vmatmul.mubr.bf16.gmra.mxu0 %v1373
        %v2795 = vpop.f32.mrf.mxu0
        %v2796 = vadd.f32 %v2699, %v2795
        %v2797 = vpop.f32.mrf.mxu0
        %v2798 = vpop.f32.mrf.mxu0
        %v2799 = vadd.f32 %v2702, %v2798
        %v2800 = vpop.f32.mrf.mxu0
        %2801 = vmatprep.mubr.bf16.mxu0 %v1390
        %2802 = vmatmul.mubr.bf16.gmra.mxu0 %v1389
        %v2803 = vpop.f32.mrf.mxu0
        %v2804 = vadd.f32 %v2707, %v2803
        %v2805 = vpop.f32.mrf.mxu0
        %v2806 = vpop.f32.mrf.mxu0
        %v2807 = vadd.f32 %v2710, %v2806
        %v2808 = vpop.f32.mrf.mxu0
        %2809 = vmatprep.mubr.bf16.mxu0 %v1406
        %2810 = vmatmul.mubr.bf16.gmra.mxu0 %v1405
        %v2811 = vpop.f32.mrf.mxu0
        %v2812 = vadd.f32 %v2715, %v2811
        %v2813 = vpop.f32.mrf.mxu0
        %v2814 = vpop.f32.mrf.mxu0
        %v2815 = vadd.f32 %v2718, %v2814
        %v2816 = vpop.f32.mrf.mxu0
        %2817 = vmatprep.mubr.bf16.mxu0 %v1422
        %2818 = vmatmul.mubr.bf16.gmra.mxu0 %v1421
        %v2819 = vpop.f32.mrf.mxu0
        %v2820 = vadd.f32 %v2723, %v2819
        %v2821 = vpop.f32.mrf.mxu0
        %v2822 = vpop.f32.mrf.mxu0
        %v2823 = vadd.f32 %v2726, %v2822
        %v2824 = vpop.f32.mrf.mxu0
        %2825 = vmatprep.mubr.bf16.mxu0 %v1438
        %2826 = vmatmul.mubr.bf16.gmra.mxu0 %v1437
        %v2827 = vpop.f32.mrf.mxu0
        %v2828 = vadd.f32 %v2731, %v2827
        %v2829 = vpop.f32.mrf.mxu0
        %v2830 = vpop.f32.mrf.mxu0
        %v2831 = vadd.f32 %v2734, %v2830
        %v2832 = vpop.f32.mrf.mxu0
        %2833 = vmatprep.mubr.bf16.mxu0 %v1454
        %2834 = vmatmul.mubr.bf16.gmra.mxu0 %v1453
        %v2835 = vpop.f32.mrf.mxu0
        %v2836 = vadd.f32 %v2739, %v2835
        %v2837 = vpop.f32.mrf.mxu0
        %v2838 = vpop.f32.mrf.mxu0
        %v2839 = vadd.f32 %v2742, %v2838
        %v2840 = vpop.f32.mrf.mxu0
        %2841 = vdwg.mxu0
        %2842 = vmatprep.subr.bf16.mxu0 0
        %2843 = vmatpush1.bf16.msra.mxu0 %v2188
        %2844 = vmatprep.subr.bf16.mxu0 0
        %2845 = vmatpush1.bf16.msra.mxu0 %v2187
        %2846 = vmatprep.subr.bf16.mxu0 0
        %2847 = vmatpush1.bf16.msra.mxu0 %v2186
        %2848 = vmatprep.subr.bf16.mxu0 0
        %2849 = vmatpush1.bf16.msra.mxu0 %v2185
        %2850 = vmatprep.subr.bf16.mxu0 0
        %2851 = vmatpush1.bf16.msra.mxu0 %v2184
        %2852 = vmatprep.subr.bf16.mxu0 0
        %2853 = vmatpush1.bf16.msra.mxu0 %v2183
        %2854 = vmatprep.subr.bf16.mxu0 0
        %2855 = vmatpush1.bf16.msra.mxu0 %v2182
        %2856 = vmatprep.subr.bf16.mxu0 0
        %2857 = vmatpush1.bf16.msra.mxu0 %v2181
        %2858 = vmatprep.subr.bf16.mxu0 0
        %2859 = vmatpush2.bf16.msra.mxu0 %v2196
        %2860 = vmatprep.subr.bf16.mxu0 0
        %2861 = vmatpush2.bf16.msra.mxu0 %v2195
        %2862 = vmatprep.subr.bf16.mxu0 0
        %2863 = vmatpush2.bf16.msra.mxu0 %v2194
        %2864 = vmatprep.subr.bf16.mxu0 0
        %2865 = vmatpush2.bf16.msra.mxu0 %v2193
        %2866 = vmatprep.subr.bf16.mxu0 0
        %2867 = vmatpush2.bf16.msra.mxu0 %v2192
        %2868 = vmatprep.subr.bf16.mxu0 0
        %2869 = vmatpush2.bf16.msra.mxu0 %v2191
        %2870 = vmatprep.subr.bf16.mxu0 0
        %2871 = vmatpush2.bf16.msra.mxu0 %v2190
        %2872 = vmatprep.subr.bf16.mxu0 0
        %2873 = vmatpush2.bf16.msra.mxu0 %v2189
        %2874 = vmatprep.mubr.bf16.mxu0 %v1344
        %2875 = vmatmul.mubr.bf16.gmra.mxu0 %v1343
        %v2876 = vpop.f32.mrf.mxu0
        %v2877 = vadd.f32 %v2780, %v2876
        %v2878 = vpop.f32.mrf.mxu0
        %v2879 = vpop.f32.mrf.mxu0
        %v2880 = vadd.f32 %v2783, %v2879
        %v2881 = vpop.f32.mrf.mxu0
        %2882 = vmatprep.mubr.bf16.mxu0 %v1360
        %2883 = vmatmul.mubr.bf16.gmra.mxu0 %v1359
        %v2884 = vpop.f32.mrf.mxu0
        %v2885 = vadd.f32 %v2788, %v2884
        %v2886 = vpop.f32.mrf.mxu0
        %v2887 = vpop.f32.mrf.mxu0
        %v2888 = vadd.f32 %v2791, %v2887
        %v2889 = vpop.f32.mrf.mxu0
        %2890 = vmatprep.mubr.bf16.mxu0 %v1376
        %2891 = vmatmul.mubr.bf16.gmra.mxu0 %v1375
        %v2892 = vpop.f32.mrf.mxu0
        %v2893 = vadd.f32 %v2796, %v2892
        %v2894 = vpop.f32.mrf.mxu0
        %v2895 = vpop.f32.mrf.mxu0
        %v2896 = vadd.f32 %v2799, %v2895
        %v2897 = vpop.f32.mrf.mxu0
        %2898 = vmatprep.mubr.bf16.mxu0 %v1392
        %2899 = vmatmul.mubr.bf16.gmra.mxu0 %v1391
        %v2900 = vpop.f32.mrf.mxu0
        %v2901 = vadd.f32 %v2804, %v2900
        %v2902 = vpop.f32.mrf.mxu0
        %v2903 = vpop.f32.mrf.mxu0
        %v2904 = vadd.f32 %v2807, %v2903
        %v2905 = vpop.f32.mrf.mxu0
        %2906 = vmatprep.mubr.bf16.mxu0 %v1408
        %2907 = vmatmul.mubr.bf16.gmra.mxu0 %v1407
        %v2908 = vpop.f32.mrf.mxu0
        %v2909 = vadd.f32 %v2812, %v2908
        %v2910 = vpop.f32.mrf.mxu0
        %v2911 = vpop.f32.mrf.mxu0
        %v2912 = vadd.f32 %v2815, %v2911
        %v2913 = vpop.f32.mrf.mxu0
        %2914 = vmatprep.mubr.bf16.mxu0 %v1424
        %2915 = vmatmul.mubr.bf16.gmra.mxu0 %v1423
        %v2916 = vpop.f32.mrf.mxu0
        %v2917 = vadd.f32 %v2820, %v2916
        %v2918 = vpop.f32.mrf.mxu0
        %v2919 = vpop.f32.mrf.mxu0
        %v2920 = vadd.f32 %v2823, %v2919
        %v2921 = vpop.f32.mrf.mxu0
        %2922 = vmatprep.mubr.bf16.mxu0 %v1440
        %2923 = vmatmul.mubr.bf16.gmra.mxu0 %v1439
        %v2924 = vpop.f32.mrf.mxu0
        %v2925 = vadd.f32 %v2828, %v2924
        %v2926 = vpop.f32.mrf.mxu0
        %v2927 = vpop.f32.mrf.mxu0
        %v2928 = vadd.f32 %v2831, %v2927
        %v2929 = vpop.f32.mrf.mxu0
        %2930 = vmatprep.mubr.bf16.mxu0 %v1456
        %2931 = vmatmul.mubr.bf16.gmra.mxu0 %v1455
        %v2932 = vpop.f32.mrf.mxu0
        %v2933 = vadd.f32 %v2836, %v2932
        %v2934 = vpop.f32.mrf.mxu0
        %v2935 = vpop.f32.mrf.mxu0
        %v2936 = vadd.f32 %v2839, %v2935
        %v2937 = vpop.f32.mrf.mxu0
        %2938 = vdwg.mxu0
        %2939 = vmatprep.subr.bf16.mxu0 0
        %2940 = vmatpush1.bf16.msra.mxu0 %v2204
        %2941 = vmatprep.subr.bf16.mxu0 0
        %2942 = vmatpush1.bf16.msra.mxu0 %v2203
        %2943 = vmatprep.subr.bf16.mxu0 0
        %2944 = vmatpush1.bf16.msra.mxu0 %v2202
        %2945 = vmatprep.subr.bf16.mxu0 0
        %2946 = vmatpush1.bf16.msra.mxu0 %v2201
        %2947 = vmatprep.subr.bf16.mxu0 0
        %2948 = vmatpush1.bf16.msra.mxu0 %v2200
        %2949 = vmatprep.subr.bf16.mxu0 0
        %2950 = vmatpush1.bf16.msra.mxu0 %v2199
        %2951 = vmatprep.subr.bf16.mxu0 0
        %2952 = vmatpush1.bf16.msra.mxu0 %v2198
        %2953 = vmatprep.subr.bf16.mxu0 0
        %2954 = vmatpush1.bf16.msra.mxu0 %v2197
        %2955 = vmatprep.subr.bf16.mxu0 0
        %2956 = vmatpush2.bf16.msra.mxu0 %v2212
        %2957 = vmatprep.subr.bf16.mxu0 0
        %2958 = vmatpush2.bf16.msra.mxu0 %v2211
        %2959 = vmatprep.subr.bf16.mxu0 0
        %2960 = vmatpush2.bf16.msra.mxu0 %v2210
        %2961 = vmatprep.subr.bf16.mxu0 0
        %2962 = vmatpush2.bf16.msra.mxu0 %v2209
        %2963 = vmatprep.subr.bf16.mxu0 0
        %2964 = vmatpush2.bf16.msra.mxu0 %v2208
        %2965 = vmatprep.subr.bf16.mxu0 0
        %2966 = vmatpush2.bf16.msra.mxu0 %v2207
        %2967 = vmatprep.subr.bf16.mxu0 0
        %2968 = vmatpush2.bf16.msra.mxu0 %v2206
        %2969 = vmatprep.subr.bf16.mxu0 0
        %2970 = vmatpush2.bf16.msra.mxu0 %v2205
        %2971 = vmatprep.mubr.bf16.mxu0 %v1346
        %2972 = vmatmul.mubr.bf16.gmra.mxu0 %v1345
        %v2973 = vpop.f32.mrf.mxu0
        %v2974 = vadd.f32 %v2877, %v2973
        %v2975 = vpop.f32.mrf.mxu0
        %v2976 = vpop.f32.mrf.mxu0
        %v2977 = vadd.f32 %v2880, %v2976
        %v2978 = vpop.f32.mrf.mxu0
        %2979 = vmatprep.mubr.bf16.mxu0 %v1362
        %2980 = vmatmul.mubr.bf16.gmra.mxu0 %v1361
        %v2981 = vpop.f32.mrf.mxu0
        %v2982 = vadd.f32 %v2885, %v2981
        %v2983 = vpop.f32.mrf.mxu0
        %v2984 = vpop.f32.mrf.mxu0
        %v2985 = vadd.f32 %v2888, %v2984
        %v2986 = vpop.f32.mrf.mxu0
        %2987 = vmatprep.mubr.bf16.mxu0 %v1378
        %2988 = vmatmul.mubr.bf16.gmra.mxu0 %v1377
        %v2989 = vpop.f32.mrf.mxu0
        %v2990 = vadd.f32 %v2893, %v2989
        %v2991 = vpop.f32.mrf.mxu0
        %v2992 = vpop.f32.mrf.mxu0
        %v2993 = vadd.f32 %v2896, %v2992
        %v2994 = vpop.f32.mrf.mxu0
        %2995 = vmatprep.mubr.bf16.mxu0 %v1394
        %2996 = vmatmul.mubr.bf16.gmra.mxu0 %v1393
        %v2997 = vpop.f32.mrf.mxu0
        %v2998 = vadd.f32 %v2901, %v2997
        %v2999 = vpop.f32.mrf.mxu0
        %v3000 = vpop.f32.mrf.mxu0
        %v3001 = vadd.f32 %v2904, %v3000
        %v3002 = vpop.f32.mrf.mxu0
        %3003 = vmatprep.mubr.bf16.mxu0 %v1410
        %3004 = vmatmul.mubr.bf16.gmra.mxu0 %v1409
        %v3005 = vpop.f32.mrf.mxu0
        %v3006 = vadd.f32 %v2909, %v3005
        %v3007 = vpop.f32.mrf.mxu0
        %v3008 = vpop.f32.mrf.mxu0
        %v3009 = vadd.f32 %v2912, %v3008
        %v3010 = vpop.f32.mrf.mxu0
        %3011 = vmatprep.mubr.bf16.mxu0 %v1426
        %3012 = vmatmul.mubr.bf16.gmra.mxu0 %v1425
        %v3013 = vpop.f32.mrf.mxu0
        %v3014 = vadd.f32 %v2917, %v3013
        %v3015 = vpop.f32.mrf.mxu0
        %v3016 = vpop.f32.mrf.mxu0
        %v3017 = vadd.f32 %v2920, %v3016
        %v3018 = vpop.f32.mrf.mxu0
        %3019 = vmatprep.mubr.bf16.mxu0 %v1442
        %3020 = vmatmul.mubr.bf16.gmra.mxu0 %v1441
        %v3021 = vpop.f32.mrf.mxu0
        %v3022 = vadd.f32 %v2925, %v3021
        %v3023 = vpop.f32.mrf.mxu0
        %v3024 = vpop.f32.mrf.mxu0
        %v3025 = vadd.f32 %v2928, %v3024
        %v3026 = vpop.f32.mrf.mxu0
        %3027 = vmatprep.mubr.bf16.mxu0 %v1458
        %3028 = vmatmul.mubr.bf16.gmra.mxu0 %v1457
        %v3029 = vpop.f32.mrf.mxu0
        %v3030 = vadd.f32 %v2933, %v3029
        %v3031 = vpop.f32.mrf.mxu0
        %v3032 = vpop.f32.mrf.mxu0
        %v3033 = vadd.f32 %v2936, %v3032
        %v3034 = vpop.f32.mrf.mxu0
        %3035 = vdwg.mxu0
        %3036 = vmatprep.subr.bf16.mxu0 0
        %3037 = vmatpush1.bf16.msra.mxu0 %v2220
        %3038 = vmatprep.subr.bf16.mxu0 0
        %3039 = vmatpush1.bf16.msra.mxu0 %v2219
        %3040 = vmatprep.subr.bf16.mxu0 0
        %3041 = vmatpush1.bf16.msra.mxu0 %v2218
        %3042 = vmatprep.subr.bf16.mxu0 0
        %3043 = vmatpush1.bf16.msra.mxu0 %v2217
        %3044 = vmatprep.subr.bf16.mxu0 0
        %3045 = vmatpush1.bf16.msra.mxu0 %v2216
        %3046 = vmatprep.subr.bf16.mxu0 0
        %3047 = vmatpush1.bf16.msra.mxu0 %v2215
        %3048 = vmatprep.subr.bf16.mxu0 0
        %3049 = vmatpush1.bf16.msra.mxu0 %v2214
        %3050 = vmatprep.subr.bf16.mxu0 0
        %3051 = vmatpush1.bf16.msra.mxu0 %v2213
        %3052 = vmatprep.subr.bf16.mxu0 0
        %3053 = vmatpush2.bf16.msra.mxu0 %v2228
        %3054 = vmatprep.subr.bf16.mxu0 0
        %3055 = vmatpush2.bf16.msra.mxu0 %v2227
        %3056 = vmatprep.subr.bf16.mxu0 0
        %3057 = vmatpush2.bf16.msra.mxu0 %v2226
        %3058 = vmatprep.subr.bf16.mxu0 0
        %3059 = vmatpush2.bf16.msra.mxu0 %v2225
        %3060 = vmatprep.subr.bf16.mxu0 0
        %3061 = vmatpush2.bf16.msra.mxu0 %v2224
        %3062 = vmatprep.subr.bf16.mxu0 0
        %3063 = vmatpush2.bf16.msra.mxu0 %v2223
        %3064 = vmatprep.subr.bf16.mxu0 0
        %3065 = vmatpush2.bf16.msra.mxu0 %v2222
        %3066 = vmatprep.subr.bf16.mxu0 0
        %3067 = vmatpush2.bf16.msra.mxu0 %v2221
        %3068 = vmatprep.mubr.bf16.mxu0 %v1348
        %3069 = vmatmul.mubr.bf16.gmra.mxu0 %v1347
        %v3070 = vpop.f32.mrf.mxu0
        %v3071 = vadd.f32 %v2974, %v3070
        %v3072 = vpop.f32.mrf.mxu0
        %v3073 = vpop.f32.mrf.mxu0
        %v3074 = vadd.f32 %v2977, %v3073
        %v3075 = vpop.f32.mrf.mxu0
        %3076 = vmatprep.mubr.bf16.mxu0 %v1364
        %3077 = vmatmul.mubr.bf16.gmra.mxu0 %v1363
        %v3078 = vpop.f32.mrf.mxu0
        %v3079 = vadd.f32 %v2982, %v3078
        %v3080 = vpop.f32.mrf.mxu0
        %v3081 = vpop.f32.mrf.mxu0
        %v3082 = vadd.f32 %v2985, %v3081
        %v3083 = vpop.f32.mrf.mxu0
        %3084 = vmatprep.mubr.bf16.mxu0 %v1380
        %3085 = vmatmul.mubr.bf16.gmra.mxu0 %v1379
        %v3086 = vpop.f32.mrf.mxu0
        %v3087 = vadd.f32 %v2990, %v3086
        %v3088 = vpop.f32.mrf.mxu0
        %v3089 = vpop.f32.mrf.mxu0
        %v3090 = vadd.f32 %v2993, %v3089
        %v3091 = vpop.f32.mrf.mxu0
        %3092 = vmatprep.mubr.bf16.mxu0 %v1396
        %3093 = vmatmul.mubr.bf16.gmra.mxu0 %v1395
        %v3094 = vpop.f32.mrf.mxu0
        %v3095 = vadd.f32 %v2998, %v3094
        %v3096 = vpop.f32.mrf.mxu0
        %v3097 = vpop.f32.mrf.mxu0
        %v3098 = vadd.f32 %v3001, %v3097
        %v3099 = vpop.f32.mrf.mxu0
        %3100 = vmatprep.mubr.bf16.mxu0 %v1412
        %3101 = vmatmul.mubr.bf16.gmra.mxu0 %v1411
        %v3102 = vpop.f32.mrf.mxu0
        %v3103 = vadd.f32 %v3006, %v3102
        %v3104 = vpop.f32.mrf.mxu0
        %v3105 = vpop.f32.mrf.mxu0
        %v3106 = vadd.f32 %v3009, %v3105
        %v3107 = vpop.f32.mrf.mxu0
        %3108 = vmatprep.mubr.bf16.mxu0 %v1428
        %3109 = vmatmul.mubr.bf16.gmra.mxu0 %v1427
        %v3110 = vpop.f32.mrf.mxu0
        %v3111 = vadd.f32 %v3014, %v3110
        %v3112 = vpop.f32.mrf.mxu0
        %v3113 = vpop.f32.mrf.mxu0
        %v3114 = vadd.f32 %v3017, %v3113
        %v3115 = vpop.f32.mrf.mxu0
        %3116 = vmatprep.mubr.bf16.mxu0 %v1444
        %3117 = vmatmul.mubr.bf16.gmra.mxu0 %v1443
        %v3118 = vpop.f32.mrf.mxu0
        %v3119 = vadd.f32 %v3022, %v3118
        %v3120 = vpop.f32.mrf.mxu0
        %v3121 = vpop.f32.mrf.mxu0
        %v3122 = vadd.f32 %v3025, %v3121
        %v3123 = vpop.f32.mrf.mxu0
        %3124 = vmatprep.mubr.bf16.mxu0 %v1460
        %3125 = vmatmul.mubr.bf16.gmra.mxu0 %v1459
        %v3126 = vpop.f32.mrf.mxu0
        %v3127 = vadd.f32 %v3030, %v3126
        %v3128 = vpop.f32.mrf.mxu0
        %v3129 = vpop.f32.mrf.mxu0
        %v3130 = vadd.f32 %v3033, %v3129
        %v3131 = vpop.f32.mrf.mxu0
        %3132 = vdwg.mxu0
        %v3133 = vadd.f32 %v549, %v3071
        %v3134 = vadd.f32 %v550, %v3074
        %v3135 = vadd.f32 %v551, %v3079
        %v3136 = vadd.f32 %v552, %v3082
        %v3137 = vadd.f32 %v553, %v3087
        %v3138 = vadd.f32 %v554, %v3090
        %v3139 = vadd.f32 %v555, %v3095
        %v3140 = vadd.f32 %v556, %v3098
        %v3141 = vadd.f32 %v557, %v3103
        %v3142 = vadd.f32 %v558, %v3106
        %v3143 = vadd.f32 %v559, %v3111
        %v3144 = vadd.f32 %v560, %v3114
        %v3145 = vadd.f32 %v561, %v3119
        %v3146 = vadd.f32 %v562, %v3122
        %v3147 = vadd.f32 %v563, %v3127
        %v3148 = vadd.f32 %v564, %v3130
        %vm3149 = vcmask 523264
        %3150 = vst.msk [vmem:[#allocation2] sm:$0xff] %vm3149, %v3133
        %3151 = vst.msk [vmem:[#allocation2 + $0x8] sm:$0xff] %vm3149, %v3134
        %3152 = vst.msk [vmem:[#allocation2 + $0x10] sm:$0xff] %vm3149, %v3135
        %3153 = vst.msk [vmem:[#allocation2 + $0x18] sm:$0xff] %vm3149, %v3136
        %3154 = vst.msk [vmem:[#allocation2 + $0x20] sm:$0xff] %vm3149, %v3137
        %3155 = vst.msk [vmem:[#allocation2 + $0x28] sm:$0xff] %vm3149, %v3138
        %3156 = vst.msk [vmem:[#allocation2 + $0x30] sm:$0xff] %vm3149, %v3139
        %3157 = vst.msk [vmem:[#allocation2 + $0x38] sm:$0xff] %vm3149, %v3140
        %3158 = vst.msk [vmem:[#allocation2 + $0x40] sm:$0xff] %vm3149, %v3141
        %3159 = vst.msk [vmem:[#allocation2 + $0x48] sm:$0xff] %vm3149, %v3142
        %3160 = vst.msk [vmem:[#allocation2 + $0x50] sm:$0xff] %vm3149, %v3143
        %3161 = vst.msk [vmem:[#allocation2 + $0x58] sm:$0xff] %vm3149, %v3144
        %3162 = vst.msk [vmem:[#allocation2 + $0x60] sm:$0xff] %vm3149, %v3145
        %3163 = vst.msk [vmem:[#allocation2 + $0x68] sm:$0xff] %vm3149, %v3146
        %3164 = vst.msk [vmem:[#allocation2 + $0x70] sm:$0xff] %vm3149, %v3147
        %3165 = vst.msk [vmem:[#allocation2 + $0x78] sm:$0xff] %vm3149, %v3148
        %p3166 = scmp.eq.s32.totalorder %s21, 3
        // Predicated region
        $region60: #{tpu_custom_call.1} parent=50 // pred_check
          %p3167 = pneg %p3166
        $region61: #{tpu_custom_call.1} parent=50 // pred_check_branch
          %3169 = sbr.rel (%p3167) target = $region63
        $region62: #{tpu_custom_call.1} parent=50 // pred_region
          %v3170 = vld [vmem:[#allocation2] sm:$0xff]
          %v3171 = vld [vmem:[#allocation2 + $0x8] sm:$0xff]
          %v3172 = vld [vmem:[#allocation2 + $0x10] sm:$0xff]
          %v3173 = vld [vmem:[#allocation2 + $0x18] sm:$0xff]
          %v3174 = vld [vmem:[#allocation2 + $0x20] sm:$0xff]
          %v3175 = vld [vmem:[#allocation2 + $0x28] sm:$0xff]
          %v3176 = vld [vmem:[#allocation2 + $0x30] sm:$0xff]
          %v3177 = vld [vmem:[#allocation2 + $0x38] sm:$0xff]
          %v3178 = vld [vmem:[#allocation2 + $0x40] sm:$0xff]
          %v3179 = vld [vmem:[#allocation2 + $0x48] sm:$0xff]
          %v3180 = vld [vmem:[#allocation2 + $0x50] sm:$0xff]
          %v3181 = vld [vmem:[#allocation2 + $0x58] sm:$0xff]
          %v3182 = vld [vmem:[#allocation2 + $0x60] sm:$0xff]
          %v3183 = vld [vmem:[#allocation2 + $0x68] sm:$0xff]
          %v3184 = vld [vmem:[#allocation2 + $0x70] sm:$0xff]
          %v3185 = vld [vmem:[#allocation2 + $0x78] sm:$0xff]
          %v3186 = vld [vmem:[%s517] sm:$0x1]
          %v3188 = vlaneseq
          %v3189 = vshrl.u32 %v3188, 7
          %v3190 = vsub.s32 0, %v3189
          %v3191 = vrot.slane %v3186, %v3190
          %v3193 = vadd.f32 %v3170, %v3191
          %v3194 = vadd.f32 %v3171, %v3191
          %v3195 = vadd.f32 %v3172, %v3191
          %v3196 = vadd.f32 %v3173, %v3191
          %v3197 = vadd.f32 %v3174, %v3191
          %v3198 = vadd.f32 %v3175, %v3191
          %v3199 = vadd.f32 %v3176, %v3191
          %v3200 = vadd.f32 %v3177, %v3191
          %v3201 = vadd.f32 %v3178, %v3191
          %v3202 = vadd.f32 %v3179, %v3191
          %v3203 = vadd.f32 %v3180, %v3191
          %v3204 = vadd.f32 %v3181, %v3191
          %v3205 = vadd.f32 %v3182, %v3191
          %v3206 = vadd.f32 %v3183, %v3191
          %v3207 = vadd.f32 %v3184, %v3191
          %v3208 = vadd.f32 %v3185, %v3191
          %v3209 = vpack.c.bf16 %v3194, %v3193
          %v3210 = vpack.c.bf16 %v3196, %v3195
          %v3211 = vpack.c.bf16 %v3198, %v3197
          %v3212 = vpack.c.bf16 %v3200, %v3199
          %v3213 = vpack.c.bf16 %v3202, %v3201
          %v3214 = vpack.c.bf16 %v3204, %v3203
          %v3215 = vpack.c.bf16 %v3206, %v3205
          %v3216 = vpack.c.bf16 %v3208, %v3207
          %v3225 = vunpack.c.l.b16 %v3209
          %v3226 = vunpack.c.h.b16 %v3209
          %v3227 = vunpack.c.l.b16 %v3210
          %v3228 = vunpack.c.h.b16 %v3210
          %v3229 = vunpack.c.l.b16 %v3211
          %v3230 = vunpack.c.h.b16 %v3211
          %v3231 = vunpack.c.l.b16 %v3212
          %v3232 = vunpack.c.h.b16 %v3212
          %v3233 = vunpack.c.l.b16 %v3213
          %v3234 = vunpack.c.h.b16 %v3213
          %v3235 = vunpack.c.l.b16 %v3214
          %v3236 = vunpack.c.h.b16 %v3214
          %v3237 = vunpack.c.l.b16 %v3215
          %v3238 = vunpack.c.h.b16 %v3215
          %v3239 = vunpack.c.l.b16 %v3216
          %v3240 = vunpack.c.h.b16 %v3216
          %v3241 = vpack.c.b16 %v3225, %v3225
          %v3242 = vpack.c.b16 %v3226, %v3226
          %v3243 = vpack.c.b16 %v3227, %v3227
          %v3244 = vpack.c.b16 %v3228, %v3228
          %v3245 = vpack.c.b16 %v3229, %v3229
          %v3246 = vpack.c.b16 %v3230, %v3230
          %v3247 = vpack.c.b16 %v3231, %v3231
          %v3248 = vpack.c.b16 %v3232, %v3232
          %v3249 = vpack.c.b16 %v3233, %v3233
          %v3250 = vpack.c.b16 %v3234, %v3234
          %v3251 = vpack.c.b16 %v3235, %v3235
          %v3252 = vpack.c.b16 %v3236, %v3236
          %v3253 = vpack.c.b16 %v3237, %v3237
          %v3254 = vpack.c.b16 %v3238, %v3238
          %v3255 = vpack.c.b16 %v3239, %v3239
          %v3256 = vpack.c.b16 %v3240, %v3240
          %vm3273 = vcmask 519168
          %3274 = vst.msk [vmem:[%s525] sm:$0xf] %vm3273, %v3241
          %3275 = vst.msk [vmem:[%s525 + $0x4] sm:$0xf] %vm3273, %v3242
          %3276 = vst.msk [vmem:[%s525 + $0x8] sm:$0xf] %vm3273, %v3243
          %3277 = vst.msk [vmem:[%s525 + $0xc] sm:$0xf] %vm3273, %v3244
          %3278 = vst.msk [vmem:[%s525 + $0x10] sm:$0xf] %vm3273, %v3245
          %3279 = vst.msk [vmem:[%s525 + $0x14] sm:$0xf] %vm3273, %v3246
          %3280 = vst.msk [vmem:[%s525 + $0x18] sm:$0xf] %vm3273, %v3247
          %3281 = vst.msk [vmem:[%s525 + $0x1c] sm:$0xf] %vm3273, %v3248
          %3282 = vst.msk [vmem:[%s525 + $0x20] sm:$0xf] %vm3273, %v3249
          %3283 = vst.msk [vmem:[%s525 + $0x24] sm:$0xf] %vm3273, %v3250
          %3284 = vst.msk [vmem:[%s525 + $0x28] sm:$0xf] %vm3273, %v3251
          %3285 = vst.msk [vmem:[%s525 + $0x2c] sm:$0xf] %vm3273, %v3252
          %3286 = vst.msk [vmem:[%s525 + $0x30] sm:$0xf] %vm3273, %v3253
          %3287 = vst.msk [vmem:[%s525 + $0x34] sm:$0xf] %vm3273, %v3254
          %3288 = vst.msk [vmem:[%s525 + $0x38] sm:$0xf] %vm3273, %v3255
          %3289 = vst.msk [vmem:[%s525 + $0x3c] sm:$0xf] %vm3273, %v3256
        $region63: #{tpu_custom_call.1} parent=50 // pred_fallthru
          _
        %s3290 = smul.u32 16, %s19
        %p3291 = scmp.lt.s32.totalorder %s3290, 15
        %s3292 = scalar_select %p3291, %s3290, 15
        %p3293 = scmp.lt.s32.totalorder %s20, 0
        %s3294 = scalar_select %p3293, %s20, 0
        %s3295 = sadd.s32 %s3294, %s3292
        %s3296 = smul.addr %s3295, 4
        %s3297 = scalar_lea.vmem %s3, %s3296
        // Predicated region
        $region64: #{tpu_custom_call.1} parent=50 // pred_check
          %p3298 = pneg %p135
        $region65: #{tpu_custom_call.1} parent=50 // pred_check_branch
          %3300 = sbr.rel (%p3298) target = $region67
        $region66: #{tpu_custom_call.1} parent=50 // pred_region
          %s3301 = smul.u32 16, %s19
        $region67: #{tpu_custom_call.1} parent=50 // pred_fallthru
          _
        // Predicated region
        $region68: #{tpu_custom_call.1} parent=50 // pred_check
          %p3302 = pneg %p135
        $region69: #{tpu_custom_call.1} parent=50 // pred_check_branch
          %3304 = sbr.rel (%p3302) target = $region71
        $region70: #{tpu_custom_call.1} parent=50 // pred_region
          %s3305 = smul.u32 16, %s19
          %p3306 = scmp.lt.s32.totalorder %s3305, 15
          %s3307 = scalar_select %p3306, %s3305, 15
          %p3308 = scmp.lt.s32.totalorder %s20, 0
          %s3309 = scalar_select %p3308, %s20, 0
          %s3310 = sadd.s32 %s3309, %s3307
          %s3311 = smul.addr %s3310, 4
          %s3312 = scalar_lea.vmem %s3, %s3311
        $region71: #{tpu_custom_call.1} parent=50 // pred_fallthru
          _
      $region51: #{tpu_custom_call.1} parent=5 // pred_fallthru
        _
      %p3313 = scmp.le.s32.totalorder 2, %s9
      // Predicated region
      $region72: #{tpu_custom_call.1} parent=5 // pred_check
        %p3314 = pneg %p3313
      $region73: #{tpu_custom_call.1} parent=5 // pred_check_branch
        %3316 = sbr.rel (%p3314) target = $region75
      $region74: #{tpu_custom_call.1} parent=5 // pred_region
        %s3317 = ssub.s32 %s9, 2
      $region75: #{tpu_custom_call.1} parent=5 // pred_fallthru
        _
    $region6: #{tpu_custom_call.1} parent=1 // loop_footer
      %s13 = sadd.s32 1, %s9
    $region7: #{tpu_custom_call.1} parent=1 // loop_footer_branch
      %8 = sbr.rel target = $region3
    $region8: #{tpu_custom_call.1} parent=1 // loop_exit
      _

</llo_original>
